<compile_context>
chip_gen: v7x
topology: tpu7x:2x2x1
jax: 0.10.0
libtpu: 0.0.40
codegen_flags: <defaults>
</compile_context>

<pallas_src>
import jax
import jax.numpy as jnp
from jax import lax
from jax.experimental import pallas as pl
from jax.experimental.pallas import tpu as pltpu


def signal_processor_kernel(x_ref, w_ih_ref, w_hh_ref, b_ref,
                            ln_w_row_ref, ln_b_row_ref, fc_w_t_ref, fc_b_ref,
                            out_ref, xp_scr, hn_scr):
    # x_ref:        (T, B, C)  f32
    # w_ih_ref:     (C, 4H)    f32, fused gate order (i, f, g, o), pre-transposed
    # w_hh_ref:     (H, 4H)    bf16, fused, pre-transposed
    # b_ref:        (1, 4H)    f32, b_ih + b_hh
    # ln_w_row/ln_b_row: (1, H)  row B-1 of the (32, 32) LayerNorm affine params
    # fc_w_t_ref:   (H, n_class), fc_b_ref: (1, n_class)
    # out_ref:      (T, n_class)
    # xp_scr:       (T, B, 4H) f32 scratch: precomputed input projection
    # hn_scr:       (T, 1, H)  f32 scratch: LayerNorm'ed row B-1 per timestep
    T, B, C = x_ref.shape
    H = w_hh_ref.shape[0]
    H4 = 4 * H

    # Per-lane activation constants (built once):
    #   sigmoid(x) = 0.5*tanh(0.5*x) + 0.5 on the i/f/o lanes, plain tanh on g lanes.
    lane = lax.broadcasted_iota(jnp.int32, (1, H4), 1)
    is_g = jnp.logical_and(lane >= 2 * H, lane < 3 * H)
    gate_scale = jnp.where(is_g, 1.0, 0.5)            # pre-scale == post-scale
    gate_off = jnp.where(is_g, 0.0, 0.5)

    # Input projection for every timestep: 4 VPU broadcast-FMAs (keeps the MXU free
    # for step 0), written once to VMEM scratch instead of living in the vreg file.
    x_flat = x_ref[...].reshape(T * B, C)                                   # (T*B, C)
    w_ih = w_ih_ref[...]                                                    # (C, 4H)
    xp = x_flat[:, 0:1] * w_ih[0:1, :] + b_ref[...]                         # (T*B, 4H)
    for cc in range(1, C):
        xp = xp + x_flat[:, cc:cc + 1] * w_ih[cc:cc + 1, :]
    xp_scr[...] = xp.reshape(T, B, H4)

    w_hh = w_hh_ref[...]                                                    # (H, 4H) bf16
    ln_w_row = ln_w_row_ref[...]                                            # (1, H)
    ln_b_row = ln_b_row_ref[...]                                            # (1, H)
    inv_bh = 1.0 / float(B * H)

    # ---- Serial recurrence, fully unrolled (T small and static). ----
    h = None
    c = None
    for t in range(T):
        if t == 0:
            gates = xp_scr[0]                                               # h0 = 0
        else:
            gates = jnp.dot(h.astype(jnp.bfloat16), w_hh,
                            preferred_element_type=jnp.float32) + xp_scr[t]  # (B, 4H)
        # One full-tile tanh over the lane-dense (B, 4H) pre-activations.
        act = jnp.tanh(gates * gate_scale) * gate_scale + gate_off          # (B, 4H)
        i_g = act[:, 0 * H:1 * H]
        f_g = act[:, 1 * H:2 * H]
        g_g = act[:, 2 * H:3 * H]
        o_g = act[:, 3 * H:4 * H]
        c = i_g * g_g if t == 0 else f_g * c + i_g * g_g
        h = o_g * jnp.tanh(c)                                               # (B, H)

        # LayerNorm stats over the full (B, H) slice, normalization applied only to
        # row B-1 (the only row fc consumes).  Off the serial h->h dependency chain.
        s1 = jnp.sum(h, axis=1, keepdims=True)                              # (B, 1)
        s1 = jnp.sum(s1, axis=0, keepdims=True)                             # (1, 1)
        s2 = jnp.sum(h * h, axis=1, keepdims=True)
        s2 = jnp.sum(s2, axis=0, keepdims=True)
        mu = s1 * inv_bh
        var = s2 * inv_bh - mu * mu
        inv_std = lax.rsqrt(var + 1e-5)                                     # (1, 1)
        hn_scr[t] = (h[B - 1:B, :] - mu) * inv_std * ln_w_row + ln_b_row    # (1, H)

    # ---- Epilogue: one fc matmul over all timesteps + exact softmax(dim=1). ----
    hn = hn_scr[...].reshape(T, H)                                          # (T, H)
    logits = jnp.dot(hn, fc_w_t_ref[...],
                     preferred_element_type=jnp.float32) + fc_b_ref[...]    # (T, n_class)
    m = jnp.max(logits, axis=1, keepdims=True)
    e = jnp.exp(logits - m)
    out_ref[...] = e / jnp.sum(e, axis=1, keepdims=True)


def signal_processor(x, params):
    T, B, C = x.shape
    H = params["w_hh"].shape[1]
    n_class = params["fc_w"].shape[0]

    # Glue: fuse / pre-transpose / pre-cast weights so the kernel only does
    # lane-dense bf16 MXU work and VPU broadcasts.
    w_ih_all = params["w_ih"].T                                    # (C, 4H)  gates i,f,g,o
    w_hh_all = params["w_hh"].T.astype(jnp.bfloat16)               # (H, 4H)  bf16 for MXU
    b_all = (params["b_ih"] + params["b_hh"]).reshape(1, 4 * H)    # (1, 4H)
    ln_w_row = params["ln_w"][B - 1:B, :]                          # (1, H)  only row fc uses
    ln_b_row = params["ln_b"][B - 1:B, :]                          # (1, H)
    fc_w_t = params["fc_w"].T                                      # (H, n_class)
    fc_b = params["fc_b"].reshape(1, n_class)                      # (1, n_class)

    vmem = pl.BlockSpec(memory_space=pltpu.MemorySpace.VMEM)
    # TODO(synk): for many independent sequences, add a leading "parallel" grid axis
    # to amortize launch cost and use both v7x TensorCores; a single call stays gridless.
    return pl.pallas_call(
        signal_processor_kernel,
        out_shape=jax.ShapeDtypeStruct((T, n_class), jnp.float32),
        in_specs=[vmem] * 8,
        out_specs=vmem,
        scratch_shapes=[
            pltpu.VMEM((T, B, 4 * H), jnp.float32),   # xp_scr: input projection (128 KiB)
            pltpu.VMEM((T, 1, H), jnp.float32),       # hn_scr: LN'ed row B-1 per step
        ],
    )(x, w_ih_all, w_hh_all, b_all, ln_w_row, ln_b_row, fc_w_t, fc_b)


if __name__ == "__main__":
    # nn.LayerNorm((32, 32)) on the (T, B, H) LSTM output forces B = 32 and H = 32.
    T, B, C, H, n_class = 8, 32, 4, 32, 2

    key = jax.random.PRNGKey(0)
    ks = jax.random.split(key, 7)
    k = 1.0 / jnp.sqrt(jnp.float32(H))        # PyTorch default LSTM/Linear init scale

    params = {
        "w_ih": jax.random.uniform(ks[0], (4 * H, C), jnp.float32, -k, k),
        "w_hh": jax.random.uniform(ks[1], (4 * H, H), jnp.float32, -k, k),
        "b_ih": jax.random.uniform(ks[2], (4 * H,), jnp.float32, -k, k),
        "b_hh": jax.random.uniform(ks[3], (4 * H,), jnp.float32, -k, k),
        "ln_w": jnp.ones((B, H), jnp.float32),          # LayerNorm affine init
        "ln_b": jnp.zeros((B, H), jnp.float32),
        "fc_w": 0.1 * jax.random.normal(ks[4], (n_class, H), jnp.float32),  # normal_(0,0.1)
        "fc_b": jax.random.uniform(ks[5], (n_class,), jnp.float32, -k, k),
    }
    x = jax.random.normal(ks[6], (T, B, C), jnp.float32)

    out = signal_processor(x, params)
    out = jax.block_until_ready(out)
    assert out.shape == (T, n_class)
    assert bool(jnp.all(jnp.isfinite(out)))
    # exact softmax: each row is a probability distribution
    assert bool(jnp.allclose(jnp.sum(out, axis=1), 1.0, atol=1e-3))
    print("KERNEL_OK")
</pallas_src>

<mosaic_0001>
module attributes {stable_mosaic.version = 11 : i64} {
  func.func @signal_processor_kernel(%arg0: memref<8x32x4xf32, #tpu.memory_space<vmem>>, %arg1: memref<4x128xf32, #tpu.memory_space<vmem>>, %arg2: memref<32x128xbf16, #tpu.memory_space<vmem>>, %arg3: memref<1x128xf32, #tpu.memory_space<vmem>>, %arg4: memref<1x32xf32, #tpu.memory_space<vmem>>, %arg5: memref<1x32xf32, #tpu.memory_space<vmem>>, %arg6: memref<32x2xf32, #tpu.memory_space<vmem>>, %arg7: memref<1x2xf32, #tpu.memory_space<vmem>>, %arg8: memref<8x2xf32, #tpu.memory_space<vmem>>, %arg9: memref<8x32x128xf32, #tpu.memory_space<vmem>>, %arg10: memref<8x1x32xf32, #tpu.memory_space<vmem>>) attributes {dimension_semantics = [], scalar_prefetch = 0 : i64, scratch_operands = 2 : i64, tpu.core_type = #tpu.core_type<tc>} {
    %0 = tpu.iota {dimensions = array<i32: 1>} : vector<1x128xi32>
    %c64_i32 = arith.constant 64 : i32
    %1 = vector.broadcast %c64_i32 : i32 to vector<1x128xi32>
    %2 = arith.cmpi sge, %0, %1 : vector<1x128xi32>
    %c96_i32 = arith.constant 96 : i32
    %3 = vector.broadcast %c96_i32 : i32 to vector<1x128xi32>
    %4 = arith.cmpi slt, %0, %3 : vector<1x128xi32>
    %5 = arith.andi %2, %4 : vector<1x128xi1>
    %cst = arith.constant 1.000000e+00 : f32
    %cst_0 = arith.constant 5.000000e-01 : f32
    %6 = vector.broadcast %cst : f32 to vector<1x128xf32>
    %7 = vector.broadcast %cst_0 : f32 to vector<1x128xf32>
    %8 = arith.select %5, %6, %7 : vector<1x128xi1>, vector<1x128xf32>
    %cst_1 = arith.constant 0.000000e+00 : f32
    %cst_2 = arith.constant 5.000000e-01 : f32
    %9 = vector.broadcast %cst_1 : f32 to vector<1x128xf32>
    %10 = vector.broadcast %cst_2 : f32 to vector<1x128xf32>
    %11 = arith.select %5, %9, %10 : vector<1x128xi1>, vector<1x128xf32>
    %c0 = arith.constant 0 : index
    %c0_3 = arith.constant 0 : index
    %c0_4 = arith.constant 0 : index
    %12 = vector.load %arg0[%c0, %c0_3, %c0_4] : memref<8x32x4xf32, #tpu.memory_space<vmem>>, vector<8x32x4xf32>
    %13 = vector.shape_cast %12 : vector<8x32x4xf32> to vector<256x4xf32>
    %c0_5 = arith.constant 0 : index
    %c0_6 = arith.constant 0 : index
    %14 = vector.load %arg1[%c0_5, %c0_6] : memref<4x128xf32, #tpu.memory_space<vmem>>, vector<4x128xf32>
    %15 = vector.extract_strided_slice %13 {offsets = [0, 0], sizes = [256, 1], strides = [1, 1]} : vector<256x4xf32> to vector<256x1xf32>
    %16 = vector.extract_strided_slice %14 {offsets = [0, 0], sizes = [1, 128], strides = [1, 1]} : vector<4x128xf32> to vector<1x128xf32>
    %17 = vector.broadcast %15 : vector<256x1xf32> to vector<256x128xf32>
    %18 = vector.broadcast %16 : vector<1x128xf32> to vector<256x128xf32>
    %19 = arith.mulf %17, %18 : vector<256x128xf32>
    %c0_7 = arith.constant 0 : index
    %c0_8 = arith.constant 0 : index
    %20 = vector.load %arg3[%c0_7, %c0_8] : memref<1x128xf32, #tpu.memory_space<vmem>>, vector<1x128xf32>
    %21 = vector.broadcast %20 : vector<1x128xf32> to vector<256x128xf32>
    %22 = arith.addf %19, %21 : vector<256x128xf32>
    %23 = vector.extract_strided_slice %13 {offsets = [0, 1], sizes = [256, 1], strides = [1, 1]} : vector<256x4xf32> to vector<256x1xf32>
    %24 = vector.extract_strided_slice %14 {offsets = [1, 0], sizes = [1, 128], strides = [1, 1]} : vector<4x128xf32> to vector<1x128xf32>
    %25 = vector.broadcast %23 : vector<256x1xf32> to vector<256x128xf32>
    %26 = vector.broadcast %24 : vector<1x128xf32> to vector<256x128xf32>
    %27 = arith.mulf %25, %26 : vector<256x128xf32>
    %28 = arith.addf %22, %27 : vector<256x128xf32>
    %29 = vector.extract_strided_slice %13 {offsets = [0, 2], sizes = [256, 1], strides = [1, 1]} : vector<256x4xf32> to vector<256x1xf32>
    %30 = vector.extract_strided_slice %14 {offsets = [2, 0], sizes = [1, 128], strides = [1, 1]} : vector<4x128xf32> to vector<1x128xf32>
    %31 = vector.broadcast %29 : vector<256x1xf32> to vector<256x128xf32>
    %32 = vector.broadcast %30 : vector<1x128xf32> to vector<256x128xf32>
    %33 = arith.mulf %31, %32 : vector<256x128xf32>
    %34 = arith.addf %28, %33 : vector<256x128xf32>
    %35 = vector.extract_strided_slice %13 {offsets = [0, 3], sizes = [256, 1], strides = [1, 1]} : vector<256x4xf32> to vector<256x1xf32>
    %36 = vector.extract_strided_slice %14 {offsets = [3, 0], sizes = [1, 128], strides = [1, 1]} : vector<4x128xf32> to vector<1x128xf32>
    %37 = vector.broadcast %35 : vector<256x1xf32> to vector<256x128xf32>
    %38 = vector.broadcast %36 : vector<1x128xf32> to vector<256x128xf32>
    %39 = arith.mulf %37, %38 : vector<256x128xf32>
    %40 = arith.addf %34, %39 : vector<256x128xf32>
    %41 = vector.shape_cast %40 : vector<256x128xf32> to vector<8x32x128xf32>
    %c0_9 = arith.constant 0 : index
    %c0_10 = arith.constant 0 : index
    %c0_11 = arith.constant 0 : index
    %42 = vector.load %arg9[%c0_9, %c0_10, %c0_11] : memref<8x32x128xf32, #tpu.memory_space<vmem>>, vector<8x32x128xf32>
    tpu.vector_store %arg9[%c0_9, %c0_10, %c0_11], %41 {strides = array<i32>} : memref<8x32x128xf32, #tpu.memory_space<vmem>>, vector<8x32x128xf32>,
    %c0_12 = arith.constant 0 : index
    %c0_13 = arith.constant 0 : index
    %43 = vector.load %arg2[%c0_12, %c0_13] : memref<32x128xbf16, #tpu.memory_space<vmem>>, vector<32x128xbf16>
    %c0_14 = arith.constant 0 : index
    %c0_15 = arith.constant 0 : index
    %44 = vector.load %arg4[%c0_14, %c0_15] : memref<1x32xf32, #tpu.memory_space<vmem>>, vector<1x32xf32>
    %c0_16 = arith.constant 0 : index
    %c0_17 = arith.constant 0 : index
    %45 = vector.load %arg5[%c0_16, %c0_17] : memref<1x32xf32, #tpu.memory_space<vmem>>, vector<1x32xf32>
    %c0_18 = arith.constant 0 : index
    %c0_19 = arith.constant 0 : index
    %c0_20 = arith.constant 0 : index
    %46 = vector.load %arg9[%c0_18, %c0_19, %c0_20] : memref<8x32x128xf32, #tpu.memory_space<vmem>>, vector<1x32x128xf32>
    %47 = vector.shape_cast %46 : vector<1x32x128xf32> to vector<32x128xf32>
    %48 = vector.broadcast %8 : vector<1x128xf32> to vector<32x128xf32>
    %49 = arith.mulf %47, %48 : vector<32x128xf32>
    %50 = math.tanh %49 : vector<32x128xf32>
    %51 = vector.broadcast %8 : vector<1x128xf32> to vector<32x128xf32>
    %52 = arith.mulf %50, %51 : vector<32x128xf32>
    %53 = vector.broadcast %11 : vector<1x128xf32> to vector<32x128xf32>
    %54 = arith.addf %52, %53 : vector<32x128xf32>
    %55 = vector.extract_strided_slice %54 {offsets = [0, 0], sizes = [32, 32], strides = [1, 1]} : vector<32x128xf32> to vector<32x32xf32>
    %56 = vector.extract_strided_slice %54 {offsets = [0, 64], sizes = [32, 32], strides = [1, 1]} : vector<32x128xf32> to vector<32x32xf32>
    %57 = vector.extract_strided_slice %54 {offsets = [0, 96], sizes = [32, 32], strides = [1, 1]} : vector<32x128xf32> to vector<32x32xf32>
    %58 = arith.mulf %55, %56 : vector<32x32xf32>
    %59 = math.tanh %58 : vector<32x32xf32>
    %60 = arith.mulf %57, %59 : vector<32x32xf32>
    %cst_21 = arith.constant dense<0.000000e+00> : vector<32xf32>
    %61 = vector.multi_reduction <add>, %60, %cst_21 [1] : vector<32x32xf32> to vector<32xf32>
    %62 = vector.shape_cast %61 : vector<32xf32> to vector<32x1xf32>
    %cst_22 = arith.constant dense<0.000000e+00> : vector<1xf32>
    %63 = vector.multi_reduction <add>, %62, %cst_22 [0] : vector<32x1xf32> to vector<1xf32>
    %64 = vector.shape_cast %63 : vector<1xf32> to vector<1x1xf32>
    %65 = arith.mulf %60, %60 : vector<32x32xf32>
    %cst_23 = arith.constant dense<0.000000e+00> : vector<32xf32>
    %66 = vector.multi_reduction <add>, %65, %cst_23 [1] : vector<32x32xf32> to vector<32xf32>
    %67 = vector.shape_cast %66 : vector<32xf32> to vector<32x1xf32>
    %cst_24 = arith.constant dense<0.000000e+00> : vector<1xf32>
    %68 = vector.multi_reduction <add>, %67, %cst_24 [0] : vector<32x1xf32> to vector<1xf32>
    %69 = vector.shape_cast %68 : vector<1xf32> to vector<1x1xf32>
    %cst_25 = arith.constant 9.765625E-4 : f32
    %70 = vector.broadcast %cst_25 : f32 to vector<1x1xf32>
    %71 = arith.mulf %64, %70 : vector<1x1xf32>
    %cst_26 = arith.constant 9.765625E-4 : f32
    %72 = vector.broadcast %cst_26 : f32 to vector<1x1xf32>
    %73 = arith.mulf %69, %72 : vector<1x1xf32>
    %74 = arith.mulf %71, %71 : vector<1x1xf32>
    %75 = arith.subf %73, %74 : vector<1x1xf32>
    %cst_27 = arith.constant 9.99999974E-6 : f32
    %76 = vector.broadcast %cst_27 : f32 to vector<1x1xf32>
    %77 = arith.addf %75, %76 : vector<1x1xf32>
    %78 = math.rsqrt %77 : vector<1x1xf32>
    %79 = vector.extract_strided_slice %60 {offsets = [31, 0], sizes = [1, 32], strides = [1, 1]} : vector<32x32xf32> to vector<1x32xf32>
    %80 = vector.broadcast %71 : vector<1x1xf32> to vector<1x32xf32>
    %81 = arith.subf %79, %80 : vector<1x32xf32>
    %82 = vector.broadcast %78 : vector<1x1xf32> to vector<1x32xf32>
    %83 = arith.mulf %81, %82 : vector<1x32xf32>
    %84 = arith.mulf %83, %44 : vector<1x32xf32>
    %85 = arith.addf %84, %45 : vector<1x32xf32>
    %c0_28 = arith.constant 0 : index
    %c0_29 = arith.constant 0 : index
    %c0_30 = arith.constant 0 : index
    %86 = vector.load %arg10[%c0_28, %c0_29, %c0_30] : memref<8x1x32xf32, #tpu.memory_space<vmem>>, vector<1x1x32xf32>
    %87 = vector.shape_cast %86 : vector<1x1x32xf32> to vector<1x32xf32>
    %88 = vector.shape_cast %85 : vector<1x32xf32> to vector<1x1x32xf32>
    tpu.vector_store %arg10[%c0_28, %c0_29, %c0_30], %88 {strides = array<i32>} : memref<8x1x32xf32, #tpu.memory_space<vmem>>, vector<1x1x32xf32>,
    %89 = arith.truncf %60 : vector<32x32xf32> to vector<32x32xbf16>
    %cst_31 = arith.constant dense<0.000000e+00> : vector<32x128xf32>
    %90 = tpu.matmul %89, %43, %cst_31 {dimension_numbers = #tpu.dot_dimension_numbers<[1], [0], [0], [1], [0, 0, 1, 1], [], []>} : vector<32x32xbf16>, vector<32x128xbf16>, vector<32x128xf32> -> vector<32x128xf32>
    %c1 = arith.constant 1 : index
    %c0_32 = arith.constant 0 : index
    %c0_33 = arith.constant 0 : index
    %91 = vector.load %arg9[%c1, %c0_32, %c0_33] : memref<8x32x128xf32, #tpu.memory_space<vmem>>, vector<1x32x128xf32>
    %92 = vector.shape_cast %91 : vector<1x32x128xf32> to vector<32x128xf32>
    %93 = arith.addf %90, %92 : vector<32x128xf32>
    %94 = vector.broadcast %8 : vector<1x128xf32> to vector<32x128xf32>
    %95 = arith.mulf %93, %94 : vector<32x128xf32>
    %96 = math.tanh %95 : vector<32x128xf32>
    %97 = vector.broadcast %8 : vector<1x128xf32> to vector<32x128xf32>
    %98 = arith.mulf %96, %97 : vector<32x128xf32>
    %99 = vector.broadcast %11 : vector<1x128xf32> to vector<32x128xf32>
    %100 = arith.addf %98, %99 : vector<32x128xf32>
    %101 = vector.extract_strided_slice %100 {offsets = [0, 0], sizes = [32, 32], strides = [1, 1]} : vector<32x128xf32> to vector<32x32xf32>
    %102 = vector.extract_strided_slice %100 {offsets = [0, 32], sizes = [32, 32], strides = [1, 1]} : vector<32x128xf32> to vector<32x32xf32>
    %103 = vector.extract_strided_slice %100 {offsets = [0, 64], sizes = [32, 32], strides = [1, 1]} : vector<32x128xf32> to vector<32x32xf32>
    %104 = vector.extract_strided_slice %100 {offsets = [0, 96], sizes = [32, 32], strides = [1, 1]} : vector<32x128xf32> to vector<32x32xf32>
    %105 = arith.mulf %102, %58 : vector<32x32xf32>
    %106 = arith.mulf %101, %103 : vector<32x32xf32>
    %107 = arith.addf %105, %106 : vector<32x32xf32>
    %108 = math.tanh %107 : vector<32x32xf32>
    %109 = arith.mulf %104, %108 : vector<32x32xf32>
    %cst_34 = arith.constant dense<0.000000e+00> : vector<32xf32>
    %110 = vector.multi_reduction <add>, %109, %cst_34 [1] : vector<32x32xf32> to vector<32xf32>
    %111 = vector.shape_cast %110 : vector<32xf32> to vector<32x1xf32>
    %cst_35 = arith.constant dense<0.000000e+00> : vector<1xf32>
    %112 = vector.multi_reduction <add>, %111, %cst_35 [0] : vector<32x1xf32> to vector<1xf32>
    %113 = vector.shape_cast %112 : vector<1xf32> to vector<1x1xf32>
    %114 = arith.mulf %109, %109 : vector<32x32xf32>
    %cst_36 = arith.constant dense<0.000000e+00> : vector<32xf32>
    %115 = vector.multi_reduction <add>, %114, %cst_36 [1] : vector<32x32xf32> to vector<32xf32>
    %116 = vector.shape_cast %115 : vector<32xf32> to vector<32x1xf32>
    %cst_37 = arith.constant dense<0.000000e+00> : vector<1xf32>
    %117 = vector.multi_reduction <add>, %116, %cst_37 [0] : vector<32x1xf32> to vector<1xf32>
    %118 = vector.shape_cast %117 : vector<1xf32> to vector<1x1xf32>
    %cst_38 = arith.constant 9.765625E-4 : f32
    %119 = vector.broadcast %cst_38 : f32 to vector<1x1xf32>
    %120 = arith.mulf %113, %119 : vector<1x1xf32>
    %cst_39 = arith.constant 9.765625E-4 : f32
    %121 = vector.broadcast %cst_39 : f32 to vector<1x1xf32>
    %122 = arith.mulf %118, %121 : vector<1x1xf32>
    %123 = arith.mulf %120, %120 : vector<1x1xf32>
    %124 = arith.subf %122, %123 : vector<1x1xf32>
    %cst_40 = arith.constant 9.99999974E-6 : f32
    %125 = vector.broadcast %cst_40 : f32 to vector<1x1xf32>
    %126 = arith.addf %124, %125 : vector<1x1xf32>
    %127 = math.rsqrt %126 : vector<1x1xf32>
    %128 = vector.extract_strided_slice %109 {offsets = [31, 0], sizes = [1, 32], strides = [1, 1]} : vector<32x32xf32> to vector<1x32xf32>
    %129 = vector.broadcast %120 : vector<1x1xf32> to vector<1x32xf32>
    %130 = arith.subf %128, %129 : vector<1x32xf32>
    %131 = vector.broadcast %127 : vector<1x1xf32> to vector<1x32xf32>
    %132 = arith.mulf %130, %131 : vector<1x32xf32>
    %133 = arith.mulf %132, %44 : vector<1x32xf32>
    %134 = arith.addf %133, %45 : vector<1x32xf32>
    %c1_41 = arith.constant 1 : index
    %c0_42 = arith.constant 0 : index
    %c0_43 = arith.constant 0 : index
    %135 = vector.load %arg10[%c1_41, %c0_42, %c0_43] : memref<8x1x32xf32, #tpu.memory_space<vmem>>, vector<1x1x32xf32>
    %136 = vector.shape_cast %135 : vector<1x1x32xf32> to vector<1x32xf32>
    %137 = vector.shape_cast %134 : vector<1x32xf32> to vector<1x1x32xf32>
    tpu.vector_store %arg10[%c1_41, %c0_42, %c0_43], %137 {strides = array<i32>} : memref<8x1x32xf32, #tpu.memory_space<vmem>>, vector<1x1x32xf32>,
    %138 = arith.truncf %109 : vector<32x32xf32> to vector<32x32xbf16>
    %cst_44 = arith.constant dense<0.000000e+00> : vector<32x128xf32>
    %139 = tpu.matmul %138, %43, %cst_44 {dimension_numbers = #tpu.dot_dimension_numbers<[1], [0], [0], [1], [0, 0, 1, 1], [], []>} : vector<32x32xbf16>, vector<32x128xbf16>, vector<32x128xf32> -> vector<32x128xf32>
    %c2 = arith.constant 2 : index
    %c0_45 = arith.constant 0 : index
    %c0_46 = arith.constant 0 : index
    %140 = vector.load %arg9[%c2, %c0_45, %c0_46] : memref<8x32x128xf32, #tpu.memory_space<vmem>>, vector<1x32x128xf32>
    %141 = vector.shape_cast %140 : vector<1x32x128xf32> to vector<32x128xf32>
    %142 = arith.addf %139, %141 : vector<32x128xf32>
    %143 = vector.broadcast %8 : vector<1x128xf32> to vector<32x128xf32>
    %144 = arith.mulf %142, %143 : vector<32x128xf32>
    %145 = math.tanh %144 : vector<32x128xf32>
    %146 = vector.broadcast %8 : vector<1x128xf32> to vector<32x128xf32>
    %147 = arith.mulf %145, %146 : vector<32x128xf32>
    %148 = vector.broadcast %11 : vector<1x128xf32> to vector<32x128xf32>
    %149 = arith.addf %147, %148 : vector<32x128xf32>
    %150 = vector.extract_strided_slice %149 {offsets = [0, 0], sizes = [32, 32], strides = [1, 1]} : vector<32x128xf32> to vector<32x32xf32>
    %151 = vector.extract_strided_slice %149 {offsets = [0, 32], sizes = [32, 32], strides = [1, 1]} : vector<32x128xf32> to vector<32x32xf32>
    %152 = vector.extract_strided_slice %149 {offsets = [0, 64], sizes = [32, 32], strides = [1, 1]} : vector<32x128xf32> to vector<32x32xf32>
    %153 = vector.extract_strided_slice %149 {offsets = [0, 96], sizes = [32, 32], strides = [1, 1]} : vector<32x128xf32> to vector<32x32xf32>
    %154 = arith.mulf %151, %107 : vector<32x32xf32>
    %155 = arith.mulf %150, %152 : vector<32x32xf32>
    %156 = arith.addf %154, %155 : vector<32x32xf32>
    %157 = math.tanh %156 : vector<32x32xf32>
    %158 = arith.mulf %153, %157 : vector<32x32xf32>
    %cst_47 = arith.constant dense<0.000000e+00> : vector<32xf32>
    %159 = vector.multi_reduction <add>, %158, %cst_47 [1] : vector<32x32xf32> to vector<32xf32>
    %160 = vector.shape_cast %159 : vector<32xf32> to vector<32x1xf32>
    %cst_48 = arith.constant dense<0.000000e+00> : vector<1xf32>
    %161 = vector.multi_reduction <add>, %160, %cst_48 [0] : vector<32x1xf32> to vector<1xf32>
    %162 = vector.shape_cast %161 : vector<1xf32> to vector<1x1xf32>
    %163 = arith.mulf %158, %158 : vector<32x32xf32>
    %cst_49 = arith.constant dense<0.000000e+00> : vector<32xf32>
    %164 = vector.multi_reduction <add>, %163, %cst_49 [1] : vector<32x32xf32> to vector<32xf32>
    %165 = vector.shape_cast %164 : vector<32xf32> to vector<32x1xf32>
    %cst_50 = arith.constant dense<0.000000e+00> : vector<1xf32>
    %166 = vector.multi_reduction <add>, %165, %cst_50 [0] : vector<32x1xf32> to vector<1xf32>
    %167 = vector.shape_cast %166 : vector<1xf32> to vector<1x1xf32>
    %cst_51 = arith.constant 9.765625E-4 : f32
    %168 = vector.broadcast %cst_51 : f32 to vector<1x1xf32>
    %169 = arith.mulf %162, %168 : vector<1x1xf32>
    %cst_52 = arith.constant 9.765625E-4 : f32
    %170 = vector.broadcast %cst_52 : f32 to vector<1x1xf32>
    %171 = arith.mulf %167, %170 : vector<1x1xf32>
    %172 = arith.mulf %169, %169 : vector<1x1xf32>
    %173 = arith.subf %171, %172 : vector<1x1xf32>
    %cst_53 = arith.constant 9.99999974E-6 : f32
    %174 = vector.broadcast %cst_53 : f32 to vector<1x1xf32>
    %175 = arith.addf %173, %174 : vector<1x1xf32>
    %176 = math.rsqrt %175 : vector<1x1xf32>
    %177 = vector.extract_strided_slice %158 {offsets = [31, 0], sizes = [1, 32], strides = [1, 1]} : vector<32x32xf32> to vector<1x32xf32>
    %178 = vector.broadcast %169 : vector<1x1xf32> to vector<1x32xf32>
    %179 = arith.subf %177, %178 : vector<1x32xf32>
    %180 = vector.broadcast %176 : vector<1x1xf32> to vector<1x32xf32>
    %181 = arith.mulf %179, %180 : vector<1x32xf32>
    %182 = arith.mulf %181, %44 : vector<1x32xf32>
    %183 = arith.addf %182, %45 : vector<1x32xf32>
    %c2_54 = arith.constant 2 : index
    %c0_55 = arith.constant 0 : index
    %c0_56 = arith.constant 0 : index
    %184 = vector.load %arg10[%c2_54, %c0_55, %c0_56] : memref<8x1x32xf32, #tpu.memory_space<vmem>>, vector<1x1x32xf32>
    %185 = vector.shape_cast %184 : vector<1x1x32xf32> to vector<1x32xf32>
    %186 = vector.shape_cast %183 : vector<1x32xf32> to vector<1x1x32xf32>
    tpu.vector_store %arg10[%c2_54, %c0_55, %c0_56], %186 {strides = array<i32>} : memref<8x1x32xf32, #tpu.memory_space<vmem>>, vector<1x1x32xf32>,
    %187 = arith.truncf %158 : vector<32x32xf32> to vector<32x32xbf16>
    %cst_57 = arith.constant dense<0.000000e+00> : vector<32x128xf32>
    %188 = tpu.matmul %187, %43, %cst_57 {dimension_numbers = #tpu.dot_dimension_numbers<[1], [0], [0], [1], [0, 0, 1, 1], [], []>} : vector<32x32xbf16>, vector<32x128xbf16>, vector<32x128xf32> -> vector<32x128xf32>
    %c3 = arith.constant 3 : index
    %c0_58 = arith.constant 0 : index
    %c0_59 = arith.constant 0 : index
    %189 = vector.load %arg9[%c3, %c0_58, %c0_59] : memref<8x32x128xf32, #tpu.memory_space<vmem>>, vector<1x32x128xf32>
    %190 = vector.shape_cast %189 : vector<1x32x128xf32> to vector<32x128xf32>
    %191 = arith.addf %188, %190 : vector<32x128xf32>
    %192 = vector.broadcast %8 : vector<1x128xf32> to vector<32x128xf32>
    %193 = arith.mulf %191, %192 : vector<32x128xf32>
    %194 = math.tanh %193 : vector<32x128xf32>
    %195 = vector.broadcast %8 : vector<1x128xf32> to vector<32x128xf32>
    %196 = arith.mulf %194, %195 : vector<32x128xf32>
    %197 = vector.broadcast %11 : vector<1x128xf32> to vector<32x128xf32>
    %198 = arith.addf %196, %197 : vector<32x128xf32>
    %199 = vector.extract_strided_slice %198 {offsets = [0, 0], sizes = [32, 32], strides = [1, 1]} : vector<32x128xf32> to vector<32x32xf32>
    %200 = vector.extract_strided_slice %198 {offsets = [0, 32], sizes = [32, 32], strides = [1, 1]} : vector<32x128xf32> to vector<32x32xf32>
    %201 = vector.extract_strided_slice %198 {offsets = [0, 64], sizes = [32, 32], strides = [1, 1]} : vector<32x128xf32> to vector<32x32xf32>
    %202 = vector.extract_strided_slice %198 {offsets = [0, 96], sizes = [32, 32], strides = [1, 1]} : vector<32x128xf32> to vector<32x32xf32>
    %203 = arith.mulf %200, %156 : vector<32x32xf32>
    %204 = arith.mulf %199, %201 : vector<32x32xf32>
    %205 = arith.addf %203, %204 : vector<32x32xf32>
    %206 = math.tanh %205 : vector<32x32xf32>
    %207 = arith.mulf %202, %206 : vector<32x32xf32>
    %cst_60 = arith.constant dense<0.000000e+00> : vector<32xf32>
    %208 = vector.multi_reduction <add>, %207, %cst_60 [1] : vector<32x32xf32> to vector<32xf32>
    %209 = vector.shape_cast %208 : vector<32xf32> to vector<32x1xf32>
    %cst_61 = arith.constant dense<0.000000e+00> : vector<1xf32>
    %210 = vector.multi_reduction <add>, %209, %cst_61 [0] : vector<32x1xf32> to vector<1xf32>
    %211 = vector.shape_cast %210 : vector<1xf32> to vector<1x1xf32>
    %212 = arith.mulf %207, %207 : vector<32x32xf32>
    %cst_62 = arith.constant dense<0.000000e+00> : vector<32xf32>
    %213 = vector.multi_reduction <add>, %212, %cst_62 [1] : vector<32x32xf32> to vector<32xf32>
    %214 = vector.shape_cast %213 : vector<32xf32> to vector<32x1xf32>
    %cst_63 = arith.constant dense<0.000000e+00> : vector<1xf32>
    %215 = vector.multi_reduction <add>, %214, %cst_63 [0] : vector<32x1xf32> to vector<1xf32>
    %216 = vector.shape_cast %215 : vector<1xf32> to vector<1x1xf32>
    %cst_64 = arith.constant 9.765625E-4 : f32
    %217 = vector.broadcast %cst_64 : f32 to vector<1x1xf32>
    %218 = arith.mulf %211, %217 : vector<1x1xf32>
    %cst_65 = arith.constant 9.765625E-4 : f32
    %219 = vector.broadcast %cst_65 : f32 to vector<1x1xf32>
    %220 = arith.mulf %216, %219 : vector<1x1xf32>
    %221 = arith.mulf %218, %218 : vector<1x1xf32>
    %222 = arith.subf %220, %221 : vector<1x1xf32>
    %cst_66 = arith.constant 9.99999974E-6 : f32
    %223 = vector.broadcast %cst_66 : f32 to vector<1x1xf32>
    %224 = arith.addf %222, %223 : vector<1x1xf32>
    %225 = math.rsqrt %224 : vector<1x1xf32>
    %226 = vector.extract_strided_slice %207 {offsets = [31, 0], sizes = [1, 32], strides = [1, 1]} : vector<32x32xf32> to vector<1x32xf32>
    %227 = vector.broadcast %218 : vector<1x1xf32> to vector<1x32xf32>
    %228 = arith.subf %226, %227 : vector<1x32xf32>
    %229 = vector.broadcast %225 : vector<1x1xf32> to vector<1x32xf32>
    %230 = arith.mulf %228, %229 : vector<1x32xf32>
    %231 = arith.mulf %230, %44 : vector<1x32xf32>
    %232 = arith.addf %231, %45 : vector<1x32xf32>
    %c3_67 = arith.constant 3 : index
    %c0_68 = arith.constant 0 : index
    %c0_69 = arith.constant 0 : index
    %233 = vector.load %arg10[%c3_67, %c0_68, %c0_69] : memref<8x1x32xf32, #tpu.memory_space<vmem>>, vector<1x1x32xf32>
    %234 = vector.shape_cast %233 : vector<1x1x32xf32> to vector<1x32xf32>
    %235 = vector.shape_cast %232 : vector<1x32xf32> to vector<1x1x32xf32>
    tpu.vector_store %arg10[%c3_67, %c0_68, %c0_69], %235 {strides = array<i32>} : memref<8x1x32xf32, #tpu.memory_space<vmem>>, vector<1x1x32xf32>,
    %236 = arith.truncf %207 : vector<32x32xf32> to vector<32x32xbf16>
    %cst_70 = arith.constant dense<0.000000e+00> : vector<32x128xf32>
    %237 = tpu.matmul %236, %43, %cst_70 {dimension_numbers = #tpu.dot_dimension_numbers<[1], [0], [0], [1], [0, 0, 1, 1], [], []>} : vector<32x32xbf16>, vector<32x128xbf16>, vector<32x128xf32> -> vector<32x128xf32>
    %c4 = arith.constant 4 : index
    %c0_71 = arith.constant 0 : index
    %c0_72 = arith.constant 0 : index
    %238 = vector.load %arg9[%c4, %c0_71, %c0_72] : memref<8x32x128xf32, #tpu.memory_space<vmem>>, vector<1x32x128xf32>
    %239 = vector.shape_cast %238 : vector<1x32x128xf32> to vector<32x128xf32>
    %240 = arith.addf %237, %239 : vector<32x128xf32>
    %241 = vector.broadcast %8 : vector<1x128xf32> to vector<32x128xf32>
    %242 = arith.mulf %240, %241 : vector<32x128xf32>
    %243 = math.tanh %242 : vector<32x128xf32>
    %244 = vector.broadcast %8 : vector<1x128xf32> to vector<32x128xf32>
    %245 = arith.mulf %243, %244 : vector<32x128xf32>
    %246 = vector.broadcast %11 : vector<1x128xf32> to vector<32x128xf32>
    %247 = arith.addf %245, %246 : vector<32x128xf32>
    %248 = vector.extract_strided_slice %247 {offsets = [0, 0], sizes = [32, 32], strides = [1, 1]} : vector<32x128xf32> to vector<32x32xf32>
    %249 = vector.extract_strided_slice %247 {offsets = [0, 32], sizes = [32, 32], strides = [1, 1]} : vector<32x128xf32> to vector<32x32xf32>
    %250 = vector.extract_strided_slice %247 {offsets = [0, 64], sizes = [32, 32], strides = [1, 1]} : vector<32x128xf32> to vector<32x32xf32>
    %251 = vector.extract_strided_slice %247 {offsets = [0, 96], sizes = [32, 32], strides = [1, 1]} : vector<32x128xf32> to vector<32x32xf32>
    %252 = arith.mulf %249, %205 : vector<32x32xf32>
    %253 = arith.mulf %248, %250 : vector<32x32xf32>
    %254 = arith.addf %252, %253 : vector<32x32xf32>
    %255 = math.tanh %254 : vector<32x32xf32>
    %256 = arith.mulf %251, %255 : vector<32x32xf32>
    %cst_73 = arith.constant dense<0.000000e+00> : vector<32xf32>
    %257 = vector.multi_reduction <add>, %256, %cst_73 [1] : vector<32x32xf32> to vector<32xf32>
    %258 = vector.shape_cast %257 : vector<32xf32> to vector<32x1xf32>
    %cst_74 = arith.constant dense<0.000000e+00> : vector<1xf32>
    %259 = vector.multi_reduction <add>, %258, %cst_74 [0] : vector<32x1xf32> to vector<1xf32>
    %260 = vector.shape_cast %259 : vector<1xf32> to vector<1x1xf32>
    %261 = arith.mulf %256, %256 : vector<32x32xf32>
    %cst_75 = arith.constant dense<0.000000e+00> : vector<32xf32>
    %262 = vector.multi_reduction <add>, %261, %cst_75 [1] : vector<32x32xf32> to vector<32xf32>
    %263 = vector.shape_cast %262 : vector<32xf32> to vector<32x1xf32>
    %cst_76 = arith.constant dense<0.000000e+00> : vector<1xf32>
    %264 = vector.multi_reduction <add>, %263, %cst_76 [0] : vector<32x1xf32> to vector<1xf32>
    %265 = vector.shape_cast %264 : vector<1xf32> to vector<1x1xf32>
    %cst_77 = arith.constant 9.765625E-4 : f32
    %266 = vector.broadcast %cst_77 : f32 to vector<1x1xf32>
    %267 = arith.mulf %260, %266 : vector<1x1xf32>
    %cst_78 = arith.constant 9.765625E-4 : f32
    %268 = vector.broadcast %cst_78 : f32 to vector<1x1xf32>
    %269 = arith.mulf %265, %268 : vector<1x1xf32>
    %270 = arith.mulf %267, %267 : vector<1x1xf32>
    %271 = arith.subf %269, %270 : vector<1x1xf32>
    %cst_79 = arith.constant 9.99999974E-6 : f32
    %272 = vector.broadcast %cst_79 : f32 to vector<1x1xf32>
    %273 = arith.addf %271, %272 : vector<1x1xf32>
    %274 = math.rsqrt %273 : vector<1x1xf32>
    %275 = vector.extract_strided_slice %256 {offsets = [31, 0], sizes = [1, 32], strides = [1, 1]} : vector<32x32xf32> to vector<1x32xf32>
    %276 = vector.broadcast %267 : vector<1x1xf32> to vector<1x32xf32>
    %277 = arith.subf %275, %276 : vector<1x32xf32>
    %278 = vector.broadcast %274 : vector<1x1xf32> to vector<1x32xf32>
    %279 = arith.mulf %277, %278 : vector<1x32xf32>
    %280 = arith.mulf %279, %44 : vector<1x32xf32>
    %281 = arith.addf %280, %45 : vector<1x32xf32>
    %c4_80 = arith.constant 4 : index
    %c0_81 = arith.constant 0 : index
    %c0_82 = arith.constant 0 : index
    %282 = vector.load %arg10[%c4_80, %c0_81, %c0_82] : memref<8x1x32xf32, #tpu.memory_space<vmem>>, vector<1x1x32xf32>
    %283 = vector.shape_cast %282 : vector<1x1x32xf32> to vector<1x32xf32>
    %284 = vector.shape_cast %281 : vector<1x32xf32> to vector<1x1x32xf32>
    tpu.vector_store %arg10[%c4_80, %c0_81, %c0_82], %284 {strides = array<i32>} : memref<8x1x32xf32, #tpu.memory_space<vmem>>, vector<1x1x32xf32>,
    %285 = arith.truncf %256 : vector<32x32xf32> to vector<32x32xbf16>
    %cst_83 = arith.constant dense<0.000000e+00> : vector<32x128xf32>
    %286 = tpu.matmul %285, %43, %cst_83 {dimension_numbers = #tpu.dot_dimension_numbers<[1], [0], [0], [1], [0, 0, 1, 1], [], []>} : vector<32x32xbf16>, vector<32x128xbf16>, vector<32x128xf32> -> vector<32x128xf32>
    %c5 = arith.constant 5 : index
    %c0_84 = arith.constant 0 : index
    %c0_85 = arith.constant 0 : index
    %287 = vector.load %arg9[%c5, %c0_84, %c0_85] : memref<8x32x128xf32, #tpu.memory_space<vmem>>, vector<1x32x128xf32>
    %288 = vector.shape_cast %287 : vector<1x32x128xf32> to vector<32x128xf32>
    %289 = arith.addf %286, %288 : vector<32x128xf32>
    %290 = vector.broadcast %8 : vector<1x128xf32> to vector<32x128xf32>
    %291 = arith.mulf %289, %290 : vector<32x128xf32>
    %292 = math.tanh %291 : vector<32x128xf32>
    %293 = vector.broadcast %8 : vector<1x128xf32> to vector<32x128xf32>
    %294 = arith.mulf %292, %293 : vector<32x128xf32>
    %295 = vector.broadcast %11 : vector<1x128xf32> to vector<32x128xf32>
    %296 = arith.addf %294, %295 : vector<32x128xf32>
    %297 = vector.extract_strided_slice %296 {offsets = [0, 0], sizes = [32, 32], strides = [1, 1]} : vector<32x128xf32> to vector<32x32xf32>
    %298 = vector.extract_strided_slice %296 {offsets = [0, 32], sizes = [32, 32], strides = [1, 1]} : vector<32x128xf32> to vector<32x32xf32>
    %299 = vector.extract_strided_slice %296 {offsets = [0, 64], sizes = [32, 32], strides = [1, 1]} : vector<32x128xf32> to vector<32x32xf32>
    %300 = vector.extract_strided_slice %296 {offsets = [0, 96], sizes = [32, 32], strides = [1, 1]} : vector<32x128xf32> to vector<32x32xf32>
    %301 = arith.mulf %298, %254 : vector<32x32xf32>
    %302 = arith.mulf %297, %299 : vector<32x32xf32>
    %303 = arith.addf %301, %302 : vector<32x32xf32>
    %304 = math.tanh %303 : vector<32x32xf32>
    %305 = arith.mulf %300, %304 : vector<32x32xf32>
    %cst_86 = arith.constant dense<0.000000e+00> : vector<32xf32>
    %306 = vector.multi_reduction <add>, %305, %cst_86 [1] : vector<32x32xf32> to vector<32xf32>
    %307 = vector.shape_cast %306 : vector<32xf32> to vector<32x1xf32>
    %cst_87 = arith.constant dense<0.000000e+00> : vector<1xf32>
    %308 = vector.multi_reduction <add>, %307, %cst_87 [0] : vector<32x1xf32> to vector<1xf32>
    %309 = vector.shape_cast %308 : vector<1xf32> to vector<1x1xf32>
    %310 = arith.mulf %305, %305 : vector<32x32xf32>
    %cst_88 = arith.constant dense<0.000000e+00> : vector<32xf32>
    %311 = vector.multi_reduction <add>, %310, %cst_88 [1] : vector<32x32xf32> to vector<32xf32>
    %312 = vector.shape_cast %311 : vector<32xf32> to vector<32x1xf32>
    %cst_89 = arith.constant dense<0.000000e+00> : vector<1xf32>
    %313 = vector.multi_reduction <add>, %312, %cst_89 [0] : vector<32x1xf32> to vector<1xf32>
    %314 = vector.shape_cast %313 : vector<1xf32> to vector<1x1xf32>
    %cst_90 = arith.constant 9.765625E-4 : f32
    %315 = vector.broadcast %cst_90 : f32 to vector<1x1xf32>
    %316 = arith.mulf %309, %315 : vector<1x1xf32>
    %cst_91 = arith.constant 9.765625E-4 : f32
    %317 = vector.broadcast %cst_91 : f32 to vector<1x1xf32>
    %318 = arith.mulf %314, %317 : vector<1x1xf32>
    %319 = arith.mulf %316, %316 : vector<1x1xf32>
    %320 = arith.subf %318, %319 : vector<1x1xf32>
    %cst_92 = arith.constant 9.99999974E-6 : f32
    %321 = vector.broadcast %cst_92 : f32 to vector<1x1xf32>
    %322 = arith.addf %320, %321 : vector<1x1xf32>
    %323 = math.rsqrt %322 : vector<1x1xf32>
    %324 = vector.extract_strided_slice %305 {offsets = [31, 0], sizes = [1, 32], strides = [1, 1]} : vector<32x32xf32> to vector<1x32xf32>
    %325 = vector.broadcast %316 : vector<1x1xf32> to vector<1x32xf32>
    %326 = arith.subf %324, %325 : vector<1x32xf32>
    %327 = vector.broadcast %323 : vector<1x1xf32> to vector<1x32xf32>
    %328 = arith.mulf %326, %327 : vector<1x32xf32>
    %329 = arith.mulf %328, %44 : vector<1x32xf32>
    %330 = arith.addf %329, %45 : vector<1x32xf32>
    %c5_93 = arith.constant 5 : index
    %c0_94 = arith.constant 0 : index
    %c0_95 = arith.constant 0 : index
    %331 = vector.load %arg10[%c5_93, %c0_94, %c0_95] : memref<8x1x32xf32, #tpu.memory_space<vmem>>, vector<1x1x32xf32>
    %332 = vector.shape_cast %331 : vector<1x1x32xf32> to vector<1x32xf32>
    %333 = vector.shape_cast %330 : vector<1x32xf32> to vector<1x1x32xf32>
    tpu.vector_store %arg10[%c5_93, %c0_94, %c0_95], %333 {strides = array<i32>} : memref<8x1x32xf32, #tpu.memory_space<vmem>>, vector<1x1x32xf32>,
    %334 = arith.truncf %305 : vector<32x32xf32> to vector<32x32xbf16>
    %cst_96 = arith.constant dense<0.000000e+00> : vector<32x128xf32>
    %335 = tpu.matmul %334, %43, %cst_96 {dimension_numbers = #tpu.dot_dimension_numbers<[1], [0], [0], [1], [0, 0, 1, 1], [], []>} : vector<32x32xbf16>, vector<32x128xbf16>, vector<32x128xf32> -> vector<32x128xf32>
    %c6 = arith.constant 6 : index
    %c0_97 = arith.constant 0 : index
    %c0_98 = arith.constant 0 : index
    %336 = vector.load %arg9[%c6, %c0_97, %c0_98] : memref<8x32x128xf32, #tpu.memory_space<vmem>>, vector<1x32x128xf32>
    %337 = vector.shape_cast %336 : vector<1x32x128xf32> to vector<32x128xf32>
    %338 = arith.addf %335, %337 : vector<32x128xf32>
    %339 = vector.broadcast %8 : vector<1x128xf32> to vector<32x128xf32>
    %340 = arith.mulf %338, %339 : vector<32x128xf32>
    %341 = math.tanh %340 : vector<32x128xf32>
    %342 = vector.broadcast %8 : vector<1x128xf32> to vector<32x128xf32>
    %343 = arith.mulf %341, %342 : vector<32x128xf32>
    %344 = vector.broadcast %11 : vector<1x128xf32> to vector<32x128xf32>
    %345 = arith.addf %343, %344 : vector<32x128xf32>
    %346 = vector.extract_strided_slice %345 {offsets = [0, 0], sizes = [32, 32], strides = [1, 1]} : vector<32x128xf32> to vector<32x32xf32>
    %347 = vector.extract_strided_slice %345 {offsets = [0, 32], sizes = [32, 32], strides = [1, 1]} : vector<32x128xf32> to vector<32x32xf32>
    %348 = vector.extract_strided_slice %345 {offsets = [0, 64], sizes = [32, 32], strides = [1, 1]} : vector<32x128xf32> to vector<32x32xf32>
    %349 = vector.extract_strided_slice %345 {offsets = [0, 96], sizes = [32, 32], strides = [1, 1]} : vector<32x128xf32> to vector<32x32xf32>
    %350 = arith.mulf %347, %303 : vector<32x32xf32>
    %351 = arith.mulf %346, %348 : vector<32x32xf32>
    %352 = arith.addf %350, %351 : vector<32x32xf32>
    %353 = math.tanh %352 : vector<32x32xf32>
    %354 = arith.mulf %349, %353 : vector<32x32xf32>
    %cst_99 = arith.constant dense<0.000000e+00> : vector<32xf32>
    %355 = vector.multi_reduction <add>, %354, %cst_99 [1] : vector<32x32xf32> to vector<32xf32>
    %356 = vector.shape_cast %355 : vector<32xf32> to vector<32x1xf32>
    %cst_100 = arith.constant dense<0.000000e+00> : vector<1xf32>
    %357 = vector.multi_reduction <add>, %356, %cst_100 [0] : vector<32x1xf32> to vector<1xf32>
    %358 = vector.shape_cast %357 : vector<1xf32> to vector<1x1xf32>
    %359 = arith.mulf %354, %354 : vector<32x32xf32>
    %cst_101 = arith.constant dense<0.000000e+00> : vector<32xf32>
    %360 = vector.multi_reduction <add>, %359, %cst_101 [1] : vector<32x32xf32> to vector<32xf32>
    %361 = vector.shape_cast %360 : vector<32xf32> to vector<32x1xf32>
    %cst_102 = arith.constant dense<0.000000e+00> : vector<1xf32>
    %362 = vector.multi_reduction <add>, %361, %cst_102 [0] : vector<32x1xf32> to vector<1xf32>
    %363 = vector.shape_cast %362 : vector<1xf32> to vector<1x1xf32>
    %cst_103 = arith.constant 9.765625E-4 : f32
    %364 = vector.broadcast %cst_103 : f32 to vector<1x1xf32>
    %365 = arith.mulf %358, %364 : vector<1x1xf32>
    %cst_104 = arith.constant 9.765625E-4 : f32
    %366 = vector.broadcast %cst_104 : f32 to vector<1x1xf32>
    %367 = arith.mulf %363, %366 : vector<1x1xf32>
    %368 = arith.mulf %365, %365 : vector<1x1xf32>
    %369 = arith.subf %367, %368 : vector<1x1xf32>
    %cst_105 = arith.constant 9.99999974E-6 : f32
    %370 = vector.broadcast %cst_105 : f32 to vector<1x1xf32>
    %371 = arith.addf %369, %370 : vector<1x1xf32>
    %372 = math.rsqrt %371 : vector<1x1xf32>
    %373 = vector.extract_strided_slice %354 {offsets = [31, 0], sizes = [1, 32], strides = [1, 1]} : vector<32x32xf32> to vector<1x32xf32>
    %374 = vector.broadcast %365 : vector<1x1xf32> to vector<1x32xf32>
    %375 = arith.subf %373, %374 : vector<1x32xf32>
    %376 = vector.broadcast %372 : vector<1x1xf32> to vector<1x32xf32>
    %377 = arith.mulf %375, %376 : vector<1x32xf32>
    %378 = arith.mulf %377, %44 : vector<1x32xf32>
    %379 = arith.addf %378, %45 : vector<1x32xf32>
    %c6_106 = arith.constant 6 : index
    %c0_107 = arith.constant 0 : index
    %c0_108 = arith.constant 0 : index
    %380 = vector.load %arg10[%c6_106, %c0_107, %c0_108] : memref<8x1x32xf32, #tpu.memory_space<vmem>>, vector<1x1x32xf32>
    %381 = vector.shape_cast %380 : vector<1x1x32xf32> to vector<1x32xf32>
    %382 = vector.shape_cast %379 : vector<1x32xf32> to vector<1x1x32xf32>
    tpu.vector_store %arg10[%c6_106, %c0_107, %c0_108], %382 {strides = array<i32>} : memref<8x1x32xf32, #tpu.memory_space<vmem>>, vector<1x1x32xf32>,
    %383 = arith.truncf %354 : vector<32x32xf32> to vector<32x32xbf16>
    %cst_109 = arith.constant dense<0.000000e+00> : vector<32x128xf32>
    %384 = tpu.matmul %383, %43, %cst_109 {dimension_numbers = #tpu.dot_dimension_numbers<[1], [0], [0], [1], [0, 0, 1, 1], [], []>} : vector<32x32xbf16>, vector<32x128xbf16>, vector<32x128xf32> -> vector<32x128xf32>
    %c7 = arith.constant 7 : index
    %c0_110 = arith.constant 0 : index
    %c0_111 = arith.constant 0 : index
    %385 = vector.load %arg9[%c7, %c0_110, %c0_111] : memref<8x32x128xf32, #tpu.memory_space<vmem>>, vector<1x32x128xf32>
    %386 = vector.shape_cast %385 : vector<1x32x128xf32> to vector<32x128xf32>
    %387 = arith.addf %384, %386 : vector<32x128xf32>
    %388 = vector.broadcast %8 : vector<1x128xf32> to vector<32x128xf32>
    %389 = arith.mulf %387, %388 : vector<32x128xf32>
    %390 = math.tanh %389 : vector<32x128xf32>
    %391 = vector.broadcast %8 : vector<1x128xf32> to vector<32x128xf32>
    %392 = arith.mulf %390, %391 : vector<32x128xf32>
    %393 = vector.broadcast %11 : vector<1x128xf32> to vector<32x128xf32>
    %394 = arith.addf %392, %393 : vector<32x128xf32>
    %395 = vector.extract_strided_slice %394 {offsets = [0, 0], sizes = [32, 32], strides = [1, 1]} : vector<32x128xf32> to vector<32x32xf32>
    %396 = vector.extract_strided_slice %394 {offsets = [0, 32], sizes = [32, 32], strides = [1, 1]} : vector<32x128xf32> to vector<32x32xf32>
    %397 = vector.extract_strided_slice %394 {offsets = [0, 64], sizes = [32, 32], strides = [1, 1]} : vector<32x128xf32> to vector<32x32xf32>
    %398 = vector.extract_strided_slice %394 {offsets = [0, 96], sizes = [32, 32], strides = [1, 1]} : vector<32x128xf32> to vector<32x32xf32>
    %399 = arith.mulf %396, %352 : vector<32x32xf32>
    %400 = arith.mulf %395, %397 : vector<32x32xf32>
    %401 = arith.addf %399, %400 : vector<32x32xf32>
    %402 = math.tanh %401 : vector<32x32xf32>
    %403 = arith.mulf %398, %402 : vector<32x32xf32>
    %cst_112 = arith.constant dense<0.000000e+00> : vector<32xf32>
    %404 = vector.multi_reduction <add>, %403, %cst_112 [1] : vector<32x32xf32> to vector<32xf32>
    %405 = vector.shape_cast %404 : vector<32xf32> to vector<32x1xf32>
    %cst_113 = arith.constant dense<0.000000e+00> : vector<1xf32>
    %406 = vector.multi_reduction <add>, %405, %cst_113 [0] : vector<32x1xf32> to vector<1xf32>
    %407 = vector.shape_cast %406 : vector<1xf32> to vector<1x1xf32>
    %408 = arith.mulf %403, %403 : vector<32x32xf32>
    %cst_114 = arith.constant dense<0.000000e+00> : vector<32xf32>
    %409 = vector.multi_reduction <add>, %408, %cst_114 [1] : vector<32x32xf32> to vector<32xf32>
    %410 = vector.shape_cast %409 : vector<32xf32> to vector<32x1xf32>
    %cst_115 = arith.constant dense<0.000000e+00> : vector<1xf32>
    %411 = vector.multi_reduction <add>, %410, %cst_115 [0] : vector<32x1xf32> to vector<1xf32>
    %412 = vector.shape_cast %411 : vector<1xf32> to vector<1x1xf32>
    %cst_116 = arith.constant 9.765625E-4 : f32
    %413 = vector.broadcast %cst_116 : f32 to vector<1x1xf32>
    %414 = arith.mulf %407, %413 : vector<1x1xf32>
    %cst_117 = arith.constant 9.765625E-4 : f32
    %415 = vector.broadcast %cst_117 : f32 to vector<1x1xf32>
    %416 = arith.mulf %412, %415 : vector<1x1xf32>
    %417 = arith.mulf %414, %414 : vector<1x1xf32>
    %418 = arith.subf %416, %417 : vector<1x1xf32>
    %cst_118 = arith.constant 9.99999974E-6 : f32
    %419 = vector.broadcast %cst_118 : f32 to vector<1x1xf32>
    %420 = arith.addf %418, %419 : vector<1x1xf32>
    %421 = math.rsqrt %420 : vector<1x1xf32>
    %422 = vector.extract_strided_slice %403 {offsets = [31, 0], sizes = [1, 32], strides = [1, 1]} : vector<32x32xf32> to vector<1x32xf32>
    %423 = vector.broadcast %414 : vector<1x1xf32> to vector<1x32xf32>
    %424 = arith.subf %422, %423 : vector<1x32xf32>
    %425 = vector.broadcast %421 : vector<1x1xf32> to vector<1x32xf32>
    %426 = arith.mulf %424, %425 : vector<1x32xf32>
    %427 = arith.mulf %426, %44 : vector<1x32xf32>
    %428 = arith.addf %427, %45 : vector<1x32xf32>
    %c7_119 = arith.constant 7 : index
    %c0_120 = arith.constant 0 : index
    %c0_121 = arith.constant 0 : index
    %429 = vector.load %arg10[%c7_119, %c0_120, %c0_121] : memref<8x1x32xf32, #tpu.memory_space<vmem>>, vector<1x1x32xf32>
    %430 = vector.shape_cast %429 : vector<1x1x32xf32> to vector<1x32xf32>
    %431 = vector.shape_cast %428 : vector<1x32xf32> to vector<1x1x32xf32>
    tpu.vector_store %arg10[%c7_119, %c0_120, %c0_121], %431 {strides = array<i32>} : memref<8x1x32xf32, #tpu.memory_space<vmem>>, vector<1x1x32xf32>,
    %c0_122 = arith.constant 0 : index
    %c0_123 = arith.constant 0 : index
    %c0_124 = arith.constant 0 : index
    %432 = vector.load %arg10[%c0_122, %c0_123, %c0_124] : memref<8x1x32xf32, #tpu.memory_space<vmem>>, vector<8x1x32xf32>
    %433 = vector.shape_cast %432 : vector<8x1x32xf32> to vector<8x32xf32>
    %c0_125 = arith.constant 0 : index
    %c0_126 = arith.constant 0 : index
    %434 = vector.load %arg6[%c0_125, %c0_126] : memref<32x2xf32, #tpu.memory_space<vmem>>, vector<32x2xf32>
    %cst_127 = arith.constant dense<0.000000e+00> : vector<8x2xf32>
    %435 = tpu.matmul %433, %434, %cst_127 {dimension_numbers = #tpu.dot_dimension_numbers<[1], [0], [0], [1], [0, 0, 1, 1], [], []>} : vector<8x32xf32>, vector<32x2xf32>, vector<8x2xf32> -> vector<8x2xf32>
    %c0_128 = arith.constant 0 : index
    %c0_129 = arith.constant 0 : index
    %436 = vector.load %arg7[%c0_128, %c0_129] : memref<1x2xf32, #tpu.memory_space<vmem>>, vector<1x2xf32>
    %437 = vector.broadcast %436 : vector<1x2xf32> to vector<8x2xf32>
    %438 = arith.addf %435, %437 : vector<8x2xf32>
    %cst_130 = arith.constant dense<0xFF800000> : vector<8xf32>
    %439 = vector.multi_reduction <maximumf>, %438, %cst_130 [1] : vector<8x2xf32> to vector<8xf32>
    %440 = vector.shape_cast %439 : vector<8xf32> to vector<8x1xf32>
    %441 = vector.broadcast %440 : vector<8x1xf32> to vector<8x2xf32>
    %442 = arith.subf %438, %441 : vector<8x2xf32>
    %443 = math.exp %442 : vector<8x2xf32>
    %cst_131 = arith.constant dense<0.000000e+00> : vector<8xf32>
    %444 = vector.multi_reduction <add>, %443, %cst_131 [1] : vector<8x2xf32> to vector<8xf32>
    %445 = vector.shape_cast %444 : vector<8xf32> to vector<8x1xf32>
    %446 = vector.broadcast %445 : vector<8x1xf32> to vector<8x2xf32>
    %447 = arith.divf %443, %446 : vector<8x2xf32>
    %c0_132 = arith.constant 0 : index
    %c0_133 = arith.constant 0 : index
    %448 = vector.load %arg8[%c0_132, %c0_133] : memref<8x2xf32, #tpu.memory_space<vmem>>, vector<8x2xf32>
    tpu.vector_store %arg8[%c0_132, %c0_133], %447 {strides = array<i32>} : memref<8x2xf32, #tpu.memory_space<vmem>>, vector<8x2xf32>,
    return
  }
}

</mosaic_0001>

<llo_original>
// kernel: tpu_custom_call.1
$region0: #{tpu_custom_call.1}
  #allocation0 [shape = 'u32[]', space=smem, size = 0x4, offset = 0x4, fixed_abs, tag = 'smem constant byte address 0x4 - core index']
  #allocation1 [shape = 'u32[144,128]{1,0:T(1,128)}', space=vmem, size = 0x12000, scoped, tag = 'internal scratch']
  #allocation2 [shape = 'f32[8,32,128]{2,1,0:T(8,128)}', space=vmem, size = 0x20000, scoped, tag = 'scratch operand']
  #allocation3 [shape = 'f32[8,1,32]{2,1,0:T(1,128)}', space=vmem, size = 0x1000, scoped, tag = 'scratch operand']
  %s0 = inlined_call_operand.vmem [shape: f32[8,32,4], index: 0, kind: input, shape index: {}]
  %s1 = inlined_call_operand.vmem [shape: f32[4,128], index: 1, kind: input, shape index: {}]
  %s2 = inlined_call_operand.vmem [shape: bf16[32,128], index: 2, kind: input, shape index: {}]
  %s3 = inlined_call_operand.vmem [shape: f32[1,128], index: 3, kind: input, shape index: {}]
  %s4 = inlined_call_operand.vmem [shape: f32[1,32], index: 4, kind: input, shape index: {}]
  %s5 = inlined_call_operand.vmem [shape: f32[1,32], index: 5, kind: input, shape index: {}]
  %s6 = inlined_call_operand.vmem [shape: f32[32,2], index: 6, kind: input, shape index: {}]
  %s7 = inlined_call_operand.vmem [shape: f32[1,2], index: 7, kind: input, shape index: {}]
  %s8 = inlined_call_operand.vmem [shape: f32[8,2], index: 8, kind: output, shape index: {}]
  %s9 = sld [smem:[#allocation0]]
  $region42: #{tpu_custom_call.1} parent=0
    _
  %s11 = ssub.s32 1, %s9
  %s12 = scalar_select 0, %s11, %s9
  // Predicated region
  $region2: #{tpu_custom_call.1} parent=0 // pred_check
    _
  $region3: #{tpu_custom_call.1} parent=0 // pred_check_branch
    %14 = sbr.rel (0) target = $region5
  $region4: #{tpu_custom_call.1} parent=0 // pred_region
    _
  $region5: #{tpu_custom_call.1} parent=0 // pred_fallthru
    _
  // Predicated region
  $region6: #{tpu_custom_call.1} parent=0 // pred_check
    _
  $region7: #{tpu_custom_call.1} parent=0 // pred_check_branch
    %16 = sbr.rel (0) target = $region9
  $region8: #{tpu_custom_call.1} parent=0 // pred_region
    _
  $region9: #{tpu_custom_call.1} parent=0 // pred_fallthru
    _
  // Predicated region
  $region10: #{tpu_custom_call.1} parent=0 // pred_check
    _
  $region11: #{tpu_custom_call.1} parent=0 // pred_check_branch
    %18 = sbr.rel (0) target = $region13
  $region12: #{tpu_custom_call.1} parent=0 // pred_region
    _
  $region13: #{tpu_custom_call.1} parent=0 // pred_fallthru
    _
  // Predicated region
  $region14: #{tpu_custom_call.1} parent=0 // pred_check
    _
  $region15: #{tpu_custom_call.1} parent=0 // pred_check_branch
    %20 = sbr.rel (0) target = $region17
  $region16: #{tpu_custom_call.1} parent=0 // pred_region
    _
  $region17: #{tpu_custom_call.1} parent=0 // pred_fallthru
    _
  // Predicated region
  $region18: #{tpu_custom_call.1} parent=0 // pred_check
    _
  $region19: #{tpu_custom_call.1} parent=0 // pred_check_branch
    %22 = sbr.rel (0) target = $region21
  $region20: #{tpu_custom_call.1} parent=0 // pred_region
    _
  $region21: #{tpu_custom_call.1} parent=0 // pred_fallthru
    _
  // Predicated region
  $region22: #{tpu_custom_call.1} parent=0 // pred_check
    _
  $region23: #{tpu_custom_call.1} parent=0 // pred_check_branch
    %24 = sbr.rel (0) target = $region25
  $region24: #{tpu_custom_call.1} parent=0 // pred_region
    _
  $region25: #{tpu_custom_call.1} parent=0 // pred_fallthru
    _
  // Predicated region
  $region26: #{tpu_custom_call.1} parent=0 // pred_check
    _
  $region27: #{tpu_custom_call.1} parent=0 // pred_check_branch
    %26 = sbr.rel (0) target = $region29
  $region28: #{tpu_custom_call.1} parent=0 // pred_region
    _
  $region29: #{tpu_custom_call.1} parent=0 // pred_fallthru
    _
  // Predicated region
  $region30: #{tpu_custom_call.1} parent=0 // pred_check
    _
  $region31: #{tpu_custom_call.1} parent=0 // pred_check_branch
    %28 = sbr.rel (0) target = $region33
  $region32: #{tpu_custom_call.1} parent=0 // pred_region
    _
  $region33: #{tpu_custom_call.1} parent=0 // pred_fallthru
    _
  %v30 = vlaneseq
  %v31 = vand.u32 %v30, 127
  %vm32 = vcmp.ge.s32.totalorder %v31, 64
  %vm33 = vcmp.lt.s32.totalorder %v31, 96
  %vm34 = vmand %vm32, %vm33
  %v35 = vsel %vm34, 1.0, 0.5
  %v36 = vsel %vm34, 0.0, 0.5
  %v37 = vld [vmem:[%s0] sm:$0xff]
  %v38 = vld [vmem:[%s0 + $0x8] sm:$0xff]
  %v39 = vld [vmem:[%s0 + $0x10] sm:$0xff]
  %v40 = vld [vmem:[%s0 + $0x18] sm:$0xff]
  %v41 = vld [vmem:[%s0 + $0x20] sm:$0xff]
  %v42 = vld [vmem:[%s0 + $0x28] sm:$0xff]
  %v43 = vld [vmem:[%s0 + $0x30] sm:$0xff]
  %v44 = vld [vmem:[%s0 + $0x38] sm:$0xff]
  %v45 = vld [vmem:[%s0 + $0x40] sm:$0xff]
  %v46 = vld [vmem:[%s0 + $0x48] sm:$0xff]
  %v47 = vld [vmem:[%s0 + $0x50] sm:$0xff]
  %v48 = vld [vmem:[%s0 + $0x58] sm:$0xff]
  %v49 = vld [vmem:[%s0 + $0x60] sm:$0xff]
  %v50 = vld [vmem:[%s0 + $0x68] sm:$0xff]
  %v51 = vld [vmem:[%s0 + $0x70] sm:$0xff]
  %v52 = vld [vmem:[%s0 + $0x78] sm:$0xff]
  %v53 = vld [vmem:[%s0 + $0x80] sm:$0xff]
  %v54 = vld [vmem:[%s0 + $0x88] sm:$0xff]
  %v55 = vld [vmem:[%s0 + $0x90] sm:$0xff]
  %v56 = vld [vmem:[%s0 + $0x98] sm:$0xff]
  %v57 = vld [vmem:[%s0 + $0xa0] sm:$0xff]
  %v58 = vld [vmem:[%s0 + $0xa8] sm:$0xff]
  %v59 = vld [vmem:[%s0 + $0xb0] sm:$0xff]
  %v60 = vld [vmem:[%s0 + $0xb8] sm:$0xff]
  %v61 = vld [vmem:[%s0 + $0xc0] sm:$0xff]
  %v62 = vld [vmem:[%s0 + $0xc8] sm:$0xff]
  %v63 = vld [vmem:[%s0 + $0xd0] sm:$0xff]
  %v64 = vld [vmem:[%s0 + $0xd8] sm:$0xff]
  %v65 = vld [vmem:[%s0 + $0xe0] sm:$0xff]
  %v66 = vld [vmem:[%s0 + $0xe8] sm:$0xff]
  %v67 = vld [vmem:[%s0 + $0xf0] sm:$0xff]
  %v68 = vld [vmem:[%s0 + $0xf8] sm:$0xff]
  %v69 = vld [vmem:[%s1] sm:$0xf]
  %71 = vset.pattern.permute.xlu0 0
  %72 = vperm.xlu0 %71, %v37
  %v73 = vpop.permute.xlu0 %72
  %76 = vset.pattern.permute.xlu0 0
  %77 = vperm.xlu0 %76, %v38
  %v78 = vpop.permute.xlu0 %77
  %81 = vset.pattern.permute.xlu0 0
  %82 = vperm.xlu0 %81, %v39
  %v83 = vpop.permute.xlu0 %82
  %86 = vset.pattern.permute.xlu0 0
  %87 = vperm.xlu0 %86, %v40
  %v88 = vpop.permute.xlu0 %87
  %91 = vset.pattern.permute.xlu0 0
  %92 = vperm.xlu0 %91, %v41
  %v93 = vpop.permute.xlu0 %92
  %96 = vset.pattern.permute.xlu0 0
  %97 = vperm.xlu0 %96, %v42
  %v98 = vpop.permute.xlu0 %97
  %101 = vset.pattern.permute.xlu0 0
  %102 = vperm.xlu0 %101, %v43
  %v103 = vpop.permute.xlu0 %102
  %106 = vset.pattern.permute.xlu0 0
  %107 = vperm.xlu0 %106, %v44
  %v108 = vpop.permute.xlu0 %107
  %111 = vset.pattern.permute.xlu0 0
  %112 = vperm.xlu0 %111, %v45
  %v113 = vpop.permute.xlu0 %112
  %116 = vset.pattern.permute.xlu0 0
  %117 = vperm.xlu0 %116, %v46
  %v118 = vpop.permute.xlu0 %117
  %121 = vset.pattern.permute.xlu0 0
  %122 = vperm.xlu0 %121, %v47
  %v123 = vpop.permute.xlu0 %122
  %126 = vset.pattern.permute.xlu0 0
  %127 = vperm.xlu0 %126, %v48
  %v128 = vpop.permute.xlu0 %127
  %131 = vset.pattern.permute.xlu0 0
  %132 = vperm.xlu0 %131, %v49
  %v133 = vpop.permute.xlu0 %132
  %136 = vset.pattern.permute.xlu0 0
  %137 = vperm.xlu0 %136, %v50
  %v138 = vpop.permute.xlu0 %137
  %141 = vset.pattern.permute.xlu0 0
  %142 = vperm.xlu0 %141, %v51
  %v143 = vpop.permute.xlu0 %142
  %146 = vset.pattern.permute.xlu0 0
  %147 = vperm.xlu0 %146, %v52
  %v148 = vpop.permute.xlu0 %147
  %151 = vset.pattern.permute.xlu0 0
  %152 = vperm.xlu0 %151, %v53
  %v153 = vpop.permute.xlu0 %152
  %156 = vset.pattern.permute.xlu0 0
  %157 = vperm.xlu0 %156, %v54
  %v158 = vpop.permute.xlu0 %157
  %161 = vset.pattern.permute.xlu0 0
  %162 = vperm.xlu0 %161, %v55
  %v163 = vpop.permute.xlu0 %162
  %166 = vset.pattern.permute.xlu0 0
  %167 = vperm.xlu0 %166, %v56
  %v168 = vpop.permute.xlu0 %167
  %171 = vset.pattern.permute.xlu0 0
  %172 = vperm.xlu0 %171, %v57
  %v173 = vpop.permute.xlu0 %172
  %176 = vset.pattern.permute.xlu0 0
  %177 = vperm.xlu0 %176, %v58
  %v178 = vpop.permute.xlu0 %177
  %181 = vset.pattern.permute.xlu0 0
  %182 = vperm.xlu0 %181, %v59
  %v183 = vpop.permute.xlu0 %182
  %186 = vset.pattern.permute.xlu0 0
  %187 = vperm.xlu0 %186, %v60
  %v188 = vpop.permute.xlu0 %187
  %191 = vset.pattern.permute.xlu0 0
  %192 = vperm.xlu0 %191, %v61
  %v193 = vpop.permute.xlu0 %192
  %196 = vset.pattern.permute.xlu0 0
  %197 = vperm.xlu0 %196, %v62
  %v198 = vpop.permute.xlu0 %197
  %201 = vset.pattern.permute.xlu0 0
  %202 = vperm.xlu0 %201, %v63
  %v203 = vpop.permute.xlu0 %202
  %206 = vset.pattern.permute.xlu0 0
  %207 = vperm.xlu0 %206, %v64
  %v208 = vpop.permute.xlu0 %207
  %211 = vset.pattern.permute.xlu0 0
  %212 = vperm.xlu0 %211, %v65
  %v213 = vpop.permute.xlu0 %212
  %216 = vset.pattern.permute.xlu0 0
  %217 = vperm.xlu0 %216, %v66
  %v218 = vpop.permute.xlu0 %217
  %221 = vset.pattern.permute.xlu0 0
  %222 = vperm.xlu0 %221, %v67
  %v223 = vpop.permute.xlu0 %222
  %226 = vset.pattern.permute.xlu0 0
  %227 = vperm.xlu0 %226, %v68
  %v228 = vpop.permute.xlu0 %227
  %v230 = vlaneseq
  %v231 = vshrl.u32 %v230, 7
  %v232 = vsub.s32 0, %v231
  %v233 = vrot.slane %v69, %v232
  %v234 = vmul.f32 %v73, %v233
  %v235 = vmul.f32 %v78, %v233
  %v236 = vmul.f32 %v83, %v233
  %v237 = vmul.f32 %v88, %v233
  %v238 = vmul.f32 %v93, %v233
  %v239 = vmul.f32 %v98, %v233
  %v240 = vmul.f32 %v103, %v233
  %v241 = vmul.f32 %v108, %v233
  %v242 = vmul.f32 %v113, %v233
  %v243 = vmul.f32 %v118, %v233
  %v244 = vmul.f32 %v123, %v233
  %v245 = vmul.f32 %v128, %v233
  %v246 = vmul.f32 %v133, %v233
  %v247 = vmul.f32 %v138, %v233
  %v248 = vmul.f32 %v143, %v233
  %v249 = vmul.f32 %v148, %v233
  %v250 = vmul.f32 %v153, %v233
  %v251 = vmul.f32 %v158, %v233
  %v252 = vmul.f32 %v163, %v233
  %v253 = vmul.f32 %v168, %v233
  %v254 = vmul.f32 %v173, %v233
  %v255 = vmul.f32 %v178, %v233
  %v256 = vmul.f32 %v183, %v233
  %v257 = vmul.f32 %v188, %v233
  %v258 = vmul.f32 %v193, %v233
  %v259 = vmul.f32 %v198, %v233
  %v260 = vmul.f32 %v203, %v233
  %v261 = vmul.f32 %v208, %v233
  %v262 = vmul.f32 %v213, %v233
  %v263 = vmul.f32 %v218, %v233
  %v264 = vmul.f32 %v223, %v233
  %v265 = vmul.f32 %v228, %v233
  %v266 = vld [vmem:[%s3] sm:$0x1]
  %v268 = vlaneseq
  %v269 = vshrl.u32 %v268, 7
  %v270 = vsub.s32 0, %v269
  %v271 = vrot.slane %v266, %v270
  %v273 = vadd.f32 %v234, %v271
  %v274 = vadd.f32 %v235, %v271
  %v275 = vadd.f32 %v236, %v271
  %v276 = vadd.f32 %v237, %v271
  %v277 = vadd.f32 %v238, %v271
  %v278 = vadd.f32 %v239, %v271
  %v279 = vadd.f32 %v240, %v271
  %v280 = vadd.f32 %v241, %v271
  %v281 = vadd.f32 %v242, %v271
  %v282 = vadd.f32 %v243, %v271
  %v283 = vadd.f32 %v244, %v271
  %v284 = vadd.f32 %v245, %v271
  %v285 = vadd.f32 %v246, %v271
  %v286 = vadd.f32 %v247, %v271
  %v287 = vadd.f32 %v248, %v271
  %v288 = vadd.f32 %v249, %v271
  %v289 = vadd.f32 %v250, %v271
  %v290 = vadd.f32 %v251, %v271
  %v291 = vadd.f32 %v252, %v271
  %v292 = vadd.f32 %v253, %v271
  %v293 = vadd.f32 %v254, %v271
  %v294 = vadd.f32 %v255, %v271
  %v295 = vadd.f32 %v256, %v271
  %v296 = vadd.f32 %v257, %v271
  %v297 = vadd.f32 %v258, %v271
  %v298 = vadd.f32 %v259, %v271
  %v299 = vadd.f32 %v260, %v271
  %v300 = vadd.f32 %v261, %v271
  %v301 = vadd.f32 %v262, %v271
  %v302 = vadd.f32 %v263, %v271
  %v303 = vadd.f32 %v264, %v271
  %v304 = vadd.f32 %v265, %v271
  %305 = vset.pattern.permute.xlu0 1
  %306 = vperm.xlu0 %305, %v37
  %v307 = vpop.permute.xlu0 %306
  %309 = vset.pattern.permute.xlu0 1
  %310 = vperm.xlu0 %309, %v38
  %v311 = vpop.permute.xlu0 %310
  %313 = vset.pattern.permute.xlu0 1
  %314 = vperm.xlu0 %313, %v39
  %v315 = vpop.permute.xlu0 %314
  %317 = vset.pattern.permute.xlu0 1
  %318 = vperm.xlu0 %317, %v40
  %v319 = vpop.permute.xlu0 %318
  %321 = vset.pattern.permute.xlu0 1
  %322 = vperm.xlu0 %321, %v41
  %v323 = vpop.permute.xlu0 %322
  %325 = vset.pattern.permute.xlu0 1
  %326 = vperm.xlu0 %325, %v42
  %v327 = vpop.permute.xlu0 %326
  %329 = vset.pattern.permute.xlu0 1
  %330 = vperm.xlu0 %329, %v43
  %v331 = vpop.permute.xlu0 %330
  %333 = vset.pattern.permute.xlu0 1
  %334 = vperm.xlu0 %333, %v44
  %v335 = vpop.permute.xlu0 %334
  %337 = vset.pattern.permute.xlu0 1
  %338 = vperm.xlu0 %337, %v45
  %v339 = vpop.permute.xlu0 %338
  %341 = vset.pattern.permute.xlu0 1
  %342 = vperm.xlu0 %341, %v46
  %v343 = vpop.permute.xlu0 %342
  %345 = vset.pattern.permute.xlu0 1
  %346 = vperm.xlu0 %345, %v47
  %v347 = vpop.permute.xlu0 %346
  %349 = vset.pattern.permute.xlu0 1
  %350 = vperm.xlu0 %349, %v48
  %v351 = vpop.permute.xlu0 %350
  %353 = vset.pattern.permute.xlu0 1
  %354 = vperm.xlu0 %353, %v49
  %v355 = vpop.permute.xlu0 %354
  %357 = vset.pattern.permute.xlu0 1
  %358 = vperm.xlu0 %357, %v50
  %v359 = vpop.permute.xlu0 %358
  %361 = vset.pattern.permute.xlu0 1
  %362 = vperm.xlu0 %361, %v51
  %v363 = vpop.permute.xlu0 %362
  %365 = vset.pattern.permute.xlu0 1
  %366 = vperm.xlu0 %365, %v52
  %v367 = vpop.permute.xlu0 %366
  %369 = vset.pattern.permute.xlu0 1
  %370 = vperm.xlu0 %369, %v53
  %v371 = vpop.permute.xlu0 %370
  %373 = vset.pattern.permute.xlu0 1
  %374 = vperm.xlu0 %373, %v54
  %v375 = vpop.permute.xlu0 %374
  %377 = vset.pattern.permute.xlu0 1
  %378 = vperm.xlu0 %377, %v55
  %v379 = vpop.permute.xlu0 %378
  %381 = vset.pattern.permute.xlu0 1
  %382 = vperm.xlu0 %381, %v56
  %v383 = vpop.permute.xlu0 %382
  %385 = vset.pattern.permute.xlu0 1
  %386 = vperm.xlu0 %385, %v57
  %v387 = vpop.permute.xlu0 %386
  %389 = vset.pattern.permute.xlu0 1
  %390 = vperm.xlu0 %389, %v58
  %v391 = vpop.permute.xlu0 %390
  %393 = vset.pattern.permute.xlu0 1
  %394 = vperm.xlu0 %393, %v59
  %v395 = vpop.permute.xlu0 %394
  %397 = vset.pattern.permute.xlu0 1
  %398 = vperm.xlu0 %397, %v60
  %v399 = vpop.permute.xlu0 %398
  %401 = vset.pattern.permute.xlu0 1
  %402 = vperm.xlu0 %401, %v61
  %v403 = vpop.permute.xlu0 %402
  %405 = vset.pattern.permute.xlu0 1
  %406 = vperm.xlu0 %405, %v62
  %v407 = vpop.permute.xlu0 %406
  %409 = vset.pattern.permute.xlu0 1
  %410 = vperm.xlu0 %409, %v63
  %v411 = vpop.permute.xlu0 %410
  %413 = vset.pattern.permute.xlu0 1
  %414 = vperm.xlu0 %413, %v64
  %v415 = vpop.permute.xlu0 %414
  %417 = vset.pattern.permute.xlu0 1
  %418 = vperm.xlu0 %417, %v65
  %v419 = vpop.permute.xlu0 %418
  %421 = vset.pattern.permute.xlu0 1
  %422 = vperm.xlu0 %421, %v66
  %v423 = vpop.permute.xlu0 %422
  %425 = vset.pattern.permute.xlu0 1
  %426 = vperm.xlu0 %425, %v67
  %v427 = vpop.permute.xlu0 %426
  %429 = vset.pattern.permute.xlu0 1
  %430 = vperm.xlu0 %429, %v68
  %v431 = vpop.permute.xlu0 %430
  %v433 = vlaneseq
  %v434 = vshrl.u32 %v433, 7
  %v435 = vsub.s32 1, %v434
  %v436 = vrot.slane %v69, %v435
  %v437 = vmul.f32 %v307, %v436
  %v438 = vmul.f32 %v311, %v436
  %v439 = vmul.f32 %v315, %v436
  %v440 = vmul.f32 %v319, %v436
  %v441 = vmul.f32 %v323, %v436
  %v442 = vmul.f32 %v327, %v436
  %v443 = vmul.f32 %v331, %v436
  %v444 = vmul.f32 %v335, %v436
  %v445 = vmul.f32 %v339, %v436
  %v446 = vmul.f32 %v343, %v436
  %v447 = vmul.f32 %v347, %v436
  %v448 = vmul.f32 %v351, %v436
  %v449 = vmul.f32 %v355, %v436
  %v450 = vmul.f32 %v359, %v436
  %v451 = vmul.f32 %v363, %v436
  %v452 = vmul.f32 %v367, %v436
  %v453 = vmul.f32 %v371, %v436
  %v454 = vmul.f32 %v375, %v436
  %v455 = vmul.f32 %v379, %v436
  %v456 = vmul.f32 %v383, %v436
  %v457 = vmul.f32 %v387, %v436
  %v458 = vmul.f32 %v391, %v436
  %v459 = vmul.f32 %v395, %v436
  %v460 = vmul.f32 %v399, %v436
  %v461 = vmul.f32 %v403, %v436
  %v462 = vmul.f32 %v407, %v436
  %v463 = vmul.f32 %v411, %v436
  %v464 = vmul.f32 %v415, %v436
  %v465 = vmul.f32 %v419, %v436
  %v466 = vmul.f32 %v423, %v436
  %v467 = vmul.f32 %v427, %v436
  %v468 = vmul.f32 %v431, %v436
  %v469 = vadd.f32 %v273, %v437
  %v470 = vadd.f32 %v274, %v438
  %v471 = vadd.f32 %v275, %v439
  %v472 = vadd.f32 %v276, %v440
  %v473 = vadd.f32 %v277, %v441
  %v474 = vadd.f32 %v278, %v442
  %v475 = vadd.f32 %v279, %v443
  %v476 = vadd.f32 %v280, %v444
  %v477 = vadd.f32 %v281, %v445
  %v478 = vadd.f32 %v282, %v446
  %v479 = vadd.f32 %v283, %v447
  %v480 = vadd.f32 %v284, %v448
  %v481 = vadd.f32 %v285, %v449
  %v482 = vadd.f32 %v286, %v450
  %v483 = vadd.f32 %v287, %v451
  %v484 = vadd.f32 %v288, %v452
  %v485 = vadd.f32 %v289, %v453
  %v486 = vadd.f32 %v290, %v454
  %v487 = vadd.f32 %v291, %v455
  %v488 = vadd.f32 %v292, %v456
  %v489 = vadd.f32 %v293, %v457
  %v490 = vadd.f32 %v294, %v458
  %v491 = vadd.f32 %v295, %v459
  %v492 = vadd.f32 %v296, %v460
  %v493 = vadd.f32 %v297, %v461
  %v494 = vadd.f32 %v298, %v462
  %v495 = vadd.f32 %v299, %v463
  %v496 = vadd.f32 %v300, %v464
  %v497 = vadd.f32 %v301, %v465
  %v498 = vadd.f32 %v302, %v466
  %v499 = vadd.f32 %v303, %v467
  %v500 = vadd.f32 %v304, %v468
  %501 = vset.pattern.permute.xlu0 2
  %502 = vperm.xlu0 %501, %v37
  %v503 = vpop.permute.xlu0 %502
  %505 = vset.pattern.permute.xlu0 2
  %506 = vperm.xlu0 %505, %v38
  %v507 = vpop.permute.xlu0 %506
  %509 = vset.pattern.permute.xlu0 2
  %510 = vperm.xlu0 %509, %v39
  %v511 = vpop.permute.xlu0 %510
  %513 = vset.pattern.permute.xlu0 2
  %514 = vperm.xlu0 %513, %v40
  %v515 = vpop.permute.xlu0 %514
  %517 = vset.pattern.permute.xlu0 2
  %518 = vperm.xlu0 %517, %v41
  %v519 = vpop.permute.xlu0 %518
  %521 = vset.pattern.permute.xlu0 2
  %522 = vperm.xlu0 %521, %v42
  %v523 = vpop.permute.xlu0 %522
  %525 = vset.pattern.permute.xlu0 2
  %526 = vperm.xlu0 %525, %v43
  %v527 = vpop.permute.xlu0 %526
  %529 = vset.pattern.permute.xlu0 2
  %530 = vperm.xlu0 %529, %v44
  %v531 = vpop.permute.xlu0 %530
  %533 = vset.pattern.permute.xlu0 2
  %534 = vperm.xlu0 %533, %v45
  %v535 = vpop.permute.xlu0 %534
  %537 = vset.pattern.permute.xlu0 2
  %538 = vperm.xlu0 %537, %v46
  %v539 = vpop.permute.xlu0 %538
  %541 = vset.pattern.permute.xlu0 2
  %542 = vperm.xlu0 %541, %v47
  %v543 = vpop.permute.xlu0 %542
  %545 = vset.pattern.permute.xlu0 2
  %546 = vperm.xlu0 %545, %v48
  %v547 = vpop.permute.xlu0 %546
  %549 = vset.pattern.permute.xlu0 2
  %550 = vperm.xlu0 %549, %v49
  %v551 = vpop.permute.xlu0 %550
  %553 = vset.pattern.permute.xlu0 2
  %554 = vperm.xlu0 %553, %v50
  %v555 = vpop.permute.xlu0 %554
  %557 = vset.pattern.permute.xlu0 2
  %558 = vperm.xlu0 %557, %v51
  %v559 = vpop.permute.xlu0 %558
  %561 = vset.pattern.permute.xlu0 2
  %562 = vperm.xlu0 %561, %v52
  %v563 = vpop.permute.xlu0 %562
  %565 = vset.pattern.permute.xlu0 2
  %566 = vperm.xlu0 %565, %v53
  %v567 = vpop.permute.xlu0 %566
  %569 = vset.pattern.permute.xlu0 2
  %570 = vperm.xlu0 %569, %v54
  %v571 = vpop.permute.xlu0 %570
  %573 = vset.pattern.permute.xlu0 2
  %574 = vperm.xlu0 %573, %v55
  %v575 = vpop.permute.xlu0 %574
  %577 = vset.pattern.permute.xlu0 2
  %578 = vperm.xlu0 %577, %v56
  %v579 = vpop.permute.xlu0 %578
  %581 = vset.pattern.permute.xlu0 2
  %582 = vperm.xlu0 %581, %v57
  %v583 = vpop.permute.xlu0 %582
  %585 = vset.pattern.permute.xlu0 2
  %586 = vperm.xlu0 %585, %v58
  %v587 = vpop.permute.xlu0 %586
  %589 = vset.pattern.permute.xlu0 2
  %590 = vperm.xlu0 %589, %v59
  %v591 = vpop.permute.xlu0 %590
  %593 = vset.pattern.permute.xlu0 2
  %594 = vperm.xlu0 %593, %v60
  %v595 = vpop.permute.xlu0 %594
  %597 = vset.pattern.permute.xlu0 2
  %598 = vperm.xlu0 %597, %v61
  %v599 = vpop.permute.xlu0 %598
  %601 = vset.pattern.permute.xlu0 2
  %602 = vperm.xlu0 %601, %v62
  %v603 = vpop.permute.xlu0 %602
  %605 = vset.pattern.permute.xlu0 2
  %606 = vperm.xlu0 %605, %v63
  %v607 = vpop.permute.xlu0 %606
  %609 = vset.pattern.permute.xlu0 2
  %610 = vperm.xlu0 %609, %v64
  %v611 = vpop.permute.xlu0 %610
  %613 = vset.pattern.permute.xlu0 2
  %614 = vperm.xlu0 %613, %v65
  %v615 = vpop.permute.xlu0 %614
  %617 = vset.pattern.permute.xlu0 2
  %618 = vperm.xlu0 %617, %v66
  %v619 = vpop.permute.xlu0 %618
  %621 = vset.pattern.permute.xlu0 2
  %622 = vperm.xlu0 %621, %v67
  %v623 = vpop.permute.xlu0 %622
  %625 = vset.pattern.permute.xlu0 2
  %626 = vperm.xlu0 %625, %v68
  %v627 = vpop.permute.xlu0 %626
  %v629 = vlaneseq
  %v630 = vshrl.u32 %v629, 7
  %v631 = vsub.s32 2, %v630
  %v632 = vrot.slane %v69, %v631
  %v633 = vmul.f32 %v503, %v632
  %v634 = vmul.f32 %v507, %v632
  %v635 = vmul.f32 %v511, %v632
  %v636 = vmul.f32 %v515, %v632
  %v637 = vmul.f32 %v519, %v632
  %v638 = vmul.f32 %v523, %v632
  %v639 = vmul.f32 %v527, %v632
  %v640 = vmul.f32 %v531, %v632
  %v641 = vmul.f32 %v535, %v632
  %v642 = vmul.f32 %v539, %v632
  %v643 = vmul.f32 %v543, %v632
  %v644 = vmul.f32 %v547, %v632
  %v645 = vmul.f32 %v551, %v632
  %v646 = vmul.f32 %v555, %v632
  %v647 = vmul.f32 %v559, %v632
  %v648 = vmul.f32 %v563, %v632
  %v649 = vmul.f32 %v567, %v632
  %v650 = vmul.f32 %v571, %v632
  %v651 = vmul.f32 %v575, %v632
  %v652 = vmul.f32 %v579, %v632
  %v653 = vmul.f32 %v583, %v632
  %v654 = vmul.f32 %v587, %v632
  %v655 = vmul.f32 %v591, %v632
  %v656 = vmul.f32 %v595, %v632
  %v657 = vmul.f32 %v599, %v632
  %v658 = vmul.f32 %v603, %v632
  %v659 = vmul.f32 %v607, %v632
  %v660 = vmul.f32 %v611, %v632
  %v661 = vmul.f32 %v615, %v632
  %v662 = vmul.f32 %v619, %v632
  %v663 = vmul.f32 %v623, %v632
  %v664 = vmul.f32 %v627, %v632
  %v665 = vadd.f32 %v469, %v633
  %v666 = vadd.f32 %v470, %v634
  %v667 = vadd.f32 %v471, %v635
  %v668 = vadd.f32 %v472, %v636
  %v669 = vadd.f32 %v473, %v637
  %v670 = vadd.f32 %v474, %v638
  %v671 = vadd.f32 %v475, %v639
  %v672 = vadd.f32 %v476, %v640
  %v673 = vadd.f32 %v477, %v641
  %v674 = vadd.f32 %v478, %v642
  %v675 = vadd.f32 %v479, %v643
  %v676 = vadd.f32 %v480, %v644
  %v677 = vadd.f32 %v481, %v645
  %v678 = vadd.f32 %v482, %v646
  %v679 = vadd.f32 %v483, %v647
  %v680 = vadd.f32 %v484, %v648
  %v681 = vadd.f32 %v485, %v649
  %v682 = vadd.f32 %v486, %v650
  %v683 = vadd.f32 %v487, %v651
  %v684 = vadd.f32 %v488, %v652
  %v685 = vadd.f32 %v489, %v653
  %v686 = vadd.f32 %v490, %v654
  %v687 = vadd.f32 %v491, %v655
  %v688 = vadd.f32 %v492, %v656
  %v689 = vadd.f32 %v493, %v657
  %v690 = vadd.f32 %v494, %v658
  %v691 = vadd.f32 %v495, %v659
  %v692 = vadd.f32 %v496, %v660
  %v693 = vadd.f32 %v497, %v661
  %v694 = vadd.f32 %v498, %v662
  %v695 = vadd.f32 %v499, %v663
  %v696 = vadd.f32 %v500, %v664
  %697 = vset.pattern.permute.xlu0 3
  %698 = vperm.xlu0 %697, %v37
  %v699 = vpop.permute.xlu0 %698
  %701 = vset.pattern.permute.xlu0 3
  %702 = vperm.xlu0 %701, %v38
  %v703 = vpop.permute.xlu0 %702
  %705 = vset.pattern.permute.xlu0 3
  %706 = vperm.xlu0 %705, %v39
  %v707 = vpop.permute.xlu0 %706
  %709 = vset.pattern.permute.xlu0 3
  %710 = vperm.xlu0 %709, %v40
  %v711 = vpop.permute.xlu0 %710
  %713 = vset.pattern.permute.xlu0 3
  %714 = vperm.xlu0 %713, %v41
  %v715 = vpop.permute.xlu0 %714
  %717 = vset.pattern.permute.xlu0 3
  %718 = vperm.xlu0 %717, %v42
  %v719 = vpop.permute.xlu0 %718
  %721 = vset.pattern.permute.xlu0 3
  %722 = vperm.xlu0 %721, %v43
  %v723 = vpop.permute.xlu0 %722
  %725 = vset.pattern.permute.xlu0 3
  %726 = vperm.xlu0 %725, %v44
  %v727 = vpop.permute.xlu0 %726
  %729 = vset.pattern.permute.xlu0 3
  %730 = vperm.xlu0 %729, %v45
  %v731 = vpop.permute.xlu0 %730
  %733 = vset.pattern.permute.xlu0 3
  %734 = vperm.xlu0 %733, %v46
  %v735 = vpop.permute.xlu0 %734
  %737 = vset.pattern.permute.xlu0 3
  %738 = vperm.xlu0 %737, %v47
  %v739 = vpop.permute.xlu0 %738
  %741 = vset.pattern.permute.xlu0 3
  %742 = vperm.xlu0 %741, %v48
  %v743 = vpop.permute.xlu0 %742
  %745 = vset.pattern.permute.xlu0 3
  %746 = vperm.xlu0 %745, %v49
  %v747 = vpop.permute.xlu0 %746
  %749 = vset.pattern.permute.xlu0 3
  %750 = vperm.xlu0 %749, %v50
  %v751 = vpop.permute.xlu0 %750
  %753 = vset.pattern.permute.xlu0 3
  %754 = vperm.xlu0 %753, %v51
  %v755 = vpop.permute.xlu0 %754
  %757 = vset.pattern.permute.xlu0 3
  %758 = vperm.xlu0 %757, %v52
  %v759 = vpop.permute.xlu0 %758
  %761 = vset.pattern.permute.xlu0 3
  %762 = vperm.xlu0 %761, %v53
  %v763 = vpop.permute.xlu0 %762
  %765 = vset.pattern.permute.xlu0 3
  %766 = vperm.xlu0 %765, %v54
  %v767 = vpop.permute.xlu0 %766
  %769 = vset.pattern.permute.xlu0 3
  %770 = vperm.xlu0 %769, %v55
  %v771 = vpop.permute.xlu0 %770
  %773 = vset.pattern.permute.xlu0 3
  %774 = vperm.xlu0 %773, %v56
  %v775 = vpop.permute.xlu0 %774
  %777 = vset.pattern.permute.xlu0 3
  %778 = vperm.xlu0 %777, %v57
  %v779 = vpop.permute.xlu0 %778
  %781 = vset.pattern.permute.xlu0 3
  %782 = vperm.xlu0 %781, %v58
  %v783 = vpop.permute.xlu0 %782
  %785 = vset.pattern.permute.xlu0 3
  %786 = vperm.xlu0 %785, %v59
  %v787 = vpop.permute.xlu0 %786
  %789 = vset.pattern.permute.xlu0 3
  %790 = vperm.xlu0 %789, %v60
  %v791 = vpop.permute.xlu0 %790
  %793 = vset.pattern.permute.xlu0 3
  %794 = vperm.xlu0 %793, %v61
  %v795 = vpop.permute.xlu0 %794
  %797 = vset.pattern.permute.xlu0 3
  %798 = vperm.xlu0 %797, %v62
  %v799 = vpop.permute.xlu0 %798
  %801 = vset.pattern.permute.xlu0 3
  %802 = vperm.xlu0 %801, %v63
  %v803 = vpop.permute.xlu0 %802
  %805 = vset.pattern.permute.xlu0 3
  %806 = vperm.xlu0 %805, %v64
  %v807 = vpop.permute.xlu0 %806
  %809 = vset.pattern.permute.xlu0 3
  %810 = vperm.xlu0 %809, %v65
  %v811 = vpop.permute.xlu0 %810
  %813 = vset.pattern.permute.xlu0 3
  %814 = vperm.xlu0 %813, %v66
  %v815 = vpop.permute.xlu0 %814
  %817 = vset.pattern.permute.xlu0 3
  %818 = vperm.xlu0 %817, %v67
  %v819 = vpop.permute.xlu0 %818
  %821 = vset.pattern.permute.xlu0 3
  %822 = vperm.xlu0 %821, %v68
  %v823 = vpop.permute.xlu0 %822
  %v825 = vlaneseq
  %v826 = vshrl.u32 %v825, 7
  %v827 = vsub.s32 3, %v826
  %v828 = vrot.slane %v69, %v827
  %v829 = vmul.f32 %v699, %v828
  %v830 = vmul.f32 %v703, %v828
  %v831 = vmul.f32 %v707, %v828
  %v832 = vmul.f32 %v711, %v828
  %v833 = vmul.f32 %v715, %v828
  %v834 = vmul.f32 %v719, %v828
  %v835 = vmul.f32 %v723, %v828
  %v836 = vmul.f32 %v727, %v828
  %v837 = vmul.f32 %v731, %v828
  %v838 = vmul.f32 %v735, %v828
  %v839 = vmul.f32 %v739, %v828
  %v840 = vmul.f32 %v743, %v828
  %v841 = vmul.f32 %v747, %v828
  %v842 = vmul.f32 %v751, %v828
  %v843 = vmul.f32 %v755, %v828
  %v844 = vmul.f32 %v759, %v828
  %v845 = vmul.f32 %v763, %v828
  %v846 = vmul.f32 %v767, %v828
  %v847 = vmul.f32 %v771, %v828
  %v848 = vmul.f32 %v775, %v828
  %v849 = vmul.f32 %v779, %v828
  %v850 = vmul.f32 %v783, %v828
  %v851 = vmul.f32 %v787, %v828
  %v852 = vmul.f32 %v791, %v828
  %v853 = vmul.f32 %v795, %v828
  %v854 = vmul.f32 %v799, %v828
  %v855 = vmul.f32 %v803, %v828
  %v856 = vmul.f32 %v807, %v828
  %v857 = vmul.f32 %v811, %v828
  %v858 = vmul.f32 %v815, %v828
  %v859 = vmul.f32 %v819, %v828
  %v860 = vmul.f32 %v823, %v828
  %v861 = vadd.f32 %v665, %v829
  %v862 = vadd.f32 %v666, %v830
  %v863 = vadd.f32 %v667, %v831
  %v864 = vadd.f32 %v668, %v832
  %v865 = vadd.f32 %v669, %v833
  %v866 = vadd.f32 %v670, %v834
  %v867 = vadd.f32 %v671, %v835
  %v868 = vadd.f32 %v672, %v836
  %v869 = vadd.f32 %v673, %v837
  %v870 = vadd.f32 %v674, %v838
  %v871 = vadd.f32 %v675, %v839
  %v872 = vadd.f32 %v676, %v840
  %v873 = vadd.f32 %v677, %v841
  %v874 = vadd.f32 %v678, %v842
  %v875 = vadd.f32 %v679, %v843
  %v876 = vadd.f32 %v680, %v844
  %v877 = vadd.f32 %v681, %v845
  %v878 = vadd.f32 %v682, %v846
  %v879 = vadd.f32 %v683, %v847
  %v880 = vadd.f32 %v684, %v848
  %v881 = vadd.f32 %v685, %v849
  %v882 = vadd.f32 %v686, %v850
  %v883 = vadd.f32 %v687, %v851
  %v884 = vadd.f32 %v688, %v852
  %v885 = vadd.f32 %v689, %v853
  %v886 = vadd.f32 %v690, %v854
  %v887 = vadd.f32 %v691, %v855
  %v888 = vadd.f32 %v692, %v856
  %v889 = vadd.f32 %v693, %v857
  %v890 = vadd.f32 %v694, %v858
  %v891 = vadd.f32 %v695, %v859
  %v892 = vadd.f32 %v696, %v860
  %893 = vst [vmem:[#allocation2] sm:$0xff] %v861
  %894 = vst [vmem:[#allocation2 + $0x8] sm:$0xff] %v862
  %895 = vst [vmem:[#allocation2 + $0x10] sm:$0xff] %v863
  %896 = vst [vmem:[#allocation2 + $0x18] sm:$0xff] %v864
  %897 = vst [vmem:[#allocation2 + $0x20] sm:$0xff] %v865
  %898 = vst [vmem:[#allocation2 + $0x28] sm:$0xff] %v866
  %899 = vst [vmem:[#allocation2 + $0x30] sm:$0xff] %v867
  %900 = vst [vmem:[#allocation2 + $0x38] sm:$0xff] %v868
  %901 = vst [vmem:[#allocation2 + $0x40] sm:$0xff] %v869
  %902 = vst [vmem:[#allocation2 + $0x48] sm:$0xff] %v870
  %903 = vst [vmem:[#allocation2 + $0x50] sm:$0xff] %v871
  %904 = vst [vmem:[#allocation2 + $0x58] sm:$0xff] %v872
  %905 = vst [vmem:[#allocation2 + $0x60] sm:$0xff] %v873
  %906 = vst [vmem:[#allocation2 + $0x68] sm:$0xff] %v874
  %907 = vst [vmem:[#allocation2 + $0x70] sm:$0xff] %v875
  %908 = vst [vmem:[#allocation2 + $0x78] sm:$0xff] %v876
  %909 = vst [vmem:[#allocation2 + $0x80] sm:$0xff] %v877
  %910 = vst [vmem:[#allocation2 + $0x88] sm:$0xff] %v878
  %911 = vst [vmem:[#allocation2 + $0x90] sm:$0xff] %v879
  %912 = vst [vmem:[#allocation2 + $0x98] sm:$0xff] %v880
  %913 = vst [vmem:[#allocation2 + $0xa0] sm:$0xff] %v881
  %914 = vst [vmem:[#allocation2 + $0xa8] sm:$0xff] %v882
  %915 = vst [vmem:[#allocation2 + $0xb0] sm:$0xff] %v883
  %916 = vst [vmem:[#allocation2 + $0xb8] sm:$0xff] %v884
  %917 = vst [vmem:[#allocation2 + $0xc0] sm:$0xff] %v885
  %918 = vst [vmem:[#allocation2 + $0xc8] sm:$0xff] %v886
  %919 = vst [vmem:[#allocation2 + $0xd0] sm:$0xff] %v887
  %920 = vst [vmem:[#allocation2 + $0xd8] sm:$0xff] %v888
  %921 = vst [vmem:[#allocation2 + $0xe0] sm:$0xff] %v889
  %922 = vst [vmem:[#allocation2 + $0xe8] sm:$0xff] %v890
  %923 = vst [vmem:[#allocation2 + $0xf0] sm:$0xff] %v891
  %924 = vst [vmem:[#allocation2 + $0xf8] sm:$0xff] %v892
  %v925 = vld [vmem:[%s2] sm:$0xf]
  %v926 = vld [vmem:[%s2 + $0x4] sm:$0xf]
  %v927 = vld [vmem:[%s2 + $0x8] sm:$0xf]
  %v928 = vld [vmem:[%s2 + $0xc] sm:$0xf]
  %v929 = vld [vmem:[%s4] sm:$0x1]
  %v930 = vld [vmem:[%s5] sm:$0x1]
  %v931 = vld [vmem:[#allocation2] sm:$0xff]
  %v932 = vld [vmem:[#allocation2 + $0x8] sm:$0xff]
  %v933 = vld [vmem:[#allocation2 + $0x10] sm:$0xff]
  %v934 = vld [vmem:[#allocation2 + $0x18] sm:$0xff]
  %v935 = vmul.f32 %v931, %v35
  %v936 = vmul.f32 %v932, %v35
  %v937 = vmul.f32 %v933, %v35
  %v938 = vmul.f32 %v934, %v35
  %v939 = vtanh.pop %v935
  %v940 = vtanh.pop %v936
  %v941 = vtanh.pop %v937
  %v942 = vtanh.pop %v938
  %v943 = vmul.f32 %v939, %v35
  %v944 = vmul.f32 %v940, %v35
  %v945 = vmul.f32 %v941, %v35
  %v946 = vmul.f32 %v942, %v35
  %v947 = vadd.f32 %v943, %v36
  %v948 = vadd.f32 %v944, %v36
  %v949 = vadd.f32 %v945, %v36
  %v950 = vadd.f32 %v946, %v36
  %955 = vrot.lane.b32.xlu0 %v947, 64
  %v956 = vpop.permute.xlu0 %955
  %957 = vrot.lane.b32.xlu0 %v948, 64
  %v958 = vpop.permute.xlu0 %957
  %959 = vrot.lane.b32.xlu0 %v949, 64
  %v960 = vpop.permute.xlu0 %959
  %961 = vrot.lane.b32.xlu0 %v950, 64
  %v962 = vpop.permute.xlu0 %961
  %v967 = vmul.f32 %v947, %v956
  %v968 = vmul.f32 %v948, %v958
  %v969 = vmul.f32 %v949, %v960
  %v970 = vmul.f32 %v950, %v962
  %v971 = vtanh.pop %v967
  %v972 = vtanh.pop %v968
  %v973 = vtanh.pop %v969
  %v974 = vtanh.pop %v970
  %979 = vrot.lane.b32.xlu0 %v971, 96
  %v980 = vpop.permute.xlu0 %979
  %981 = vrot.lane.b32.xlu0 %v972, 96
  %v982 = vpop.permute.xlu0 %981
  %983 = vrot.lane.b32.xlu0 %v973, 96
  %v984 = vpop.permute.xlu0 %983
  %985 = vrot.lane.b32.xlu0 %v974, 96
  %v986 = vpop.permute.xlu0 %985
  %v991 = vmul.f32 %v947, %v980
  %v992 = vmul.f32 %v948, %v982
  %v993 = vmul.f32 %v949, %v984
  %v994 = vmul.f32 %v950, %v986
  %999 = vrot.lane.b32.xlu0 %v991, 32
  %v1000 = vpop.permute.xlu0 %999
  %1001 = vrot.lane.b32.xlu0 %v992, 32
  %v1002 = vpop.permute.xlu0 %1001
  %1003 = vrot.lane.b32.xlu0 %v993, 32
  %v1004 = vpop.permute.xlu0 %1003
  %1005 = vrot.lane.b32.xlu0 %v994, 32
  %v1006 = vpop.permute.xlu0 %1005
  %vm1011 = vcmask 261120
  %v1012 = vsel %vm1011, %v1000, 0.0
  %1013 = vadd.xlane.f32.xlu0 %v1012
  %v1014 = vpop.xlane.xlu0 %1013
  %v1015 = vsel %vm1011, %v1002, 0.0
  %1016 = vadd.xlane.f32.xlu0 %v1015
  %v1017 = vpop.xlane.xlu0 %1016
  %v1018 = vsel %vm1011, %v1004, 0.0
  %1019 = vadd.xlane.f32.xlu0 %v1018
  %v1020 = vpop.xlane.xlu0 %1019
  %v1021 = vsel %vm1011, %v1006, 0.0
  %1022 = vadd.xlane.f32.xlu0 %v1021
  %v1023 = vpop.xlane.xlu0 %1022
  %v1024 = vadd.f32 %v1014, %v1017
  %v1025 = vadd.f32 %v1024, %v1020
  %v1026 = vadd.f32 %v1025, %v1023
  %v1027 = vrot.slane %v1026, 4
  %v1028 = vadd.f32 %v1026, %v1027
  %v1029 = vrot.slane %v1028, 2
  %v1030 = vadd.f32 %v1028, %v1029
  %v1031 = vrot.slane %v1030, 1
  %v1032 = vadd.f32 %v1030, %v1031
  %v1033 = vmul.f32 %v991, %v991
  %v1034 = vmul.f32 %v992, %v992
  %v1035 = vmul.f32 %v993, %v993
  %v1036 = vmul.f32 %v994, %v994
  %1041 = vrot.lane.b32.xlu0 %v1033, 32
  %v1042 = vpop.permute.xlu0 %1041
  %1043 = vrot.lane.b32.xlu0 %v1034, 32
  %v1044 = vpop.permute.xlu0 %1043
  %1045 = vrot.lane.b32.xlu0 %v1035, 32
  %v1046 = vpop.permute.xlu0 %1045
  %1047 = vrot.lane.b32.xlu0 %v1036, 32
  %v1048 = vpop.permute.xlu0 %1047
  %v1053 = vsel %vm1011, %v1042, 0.0
  %1054 = vadd.xlane.f32.xlu0 %v1053
  %v1055 = vpop.xlane.xlu0 %1054
  %v1056 = vsel %vm1011, %v1044, 0.0
  %1057 = vadd.xlane.f32.xlu0 %v1056
  %v1058 = vpop.xlane.xlu0 %1057
  %v1059 = vsel %vm1011, %v1046, 0.0
  %1060 = vadd.xlane.f32.xlu0 %v1059
  %v1061 = vpop.xlane.xlu0 %1060
  %v1062 = vsel %vm1011, %v1048, 0.0
  %1063 = vadd.xlane.f32.xlu0 %v1062
  %v1064 = vpop.xlane.xlu0 %1063
  %v1065 = vadd.f32 %v1055, %v1058
  %v1066 = vadd.f32 %v1065, %v1061
  %v1067 = vadd.f32 %v1066, %v1064
  %v1068 = vrot.slane %v1067, 4
  %v1069 = vadd.f32 %v1067, %v1068
  %v1070 = vrot.slane %v1069, 2
  %v1071 = vadd.f32 %v1069, %v1070
  %v1072 = vrot.slane %v1071, 1
  %v1073 = vadd.f32 %v1071, %v1072
  %v1074 = vmul.f32 %v1032, 0.0009765625
  %v1075 = vmul.f32 %v1073, 0.0009765625
  %v1076 = vmul.f32 %v1074, %v1074
  %v1077 = vsub.f32 %v1075, %v1076
  %v1078 = vadd.f32 %v1077, 1e-05
  %v1079 = vrsqrt.pop %v1078
  %v1080 = vsub.f32 %v994, %v1074
  %v1081 = vmul.f32 %v1080, %v1079
  %v1083 = vlaneseq
  %v1084 = vshrl.u32 %v1083, 7
  %v1085 = vsub.s32 0, %v1084
  %v1086 = vrot.slane %v929, %v1085
  %1087 = vrot.lane.b32.xlu0 %v1086, 96
  %v1088 = vpop.permute.xlu0 %1087
  %v1090 = vmul.f32 %v1081, %v1088
  %v1092 = vlaneseq
  %v1093 = vshrl.u32 %v1092, 7
  %v1094 = vsub.s32 0, %v1093
  %v1095 = vrot.slane %v930, %v1094
  %1096 = vrot.lane.b32.xlu0 %v1095, 96
  %v1097 = vpop.permute.xlu0 %1096
  %v1099 = vadd.f32 %v1090, %v1097
  %1101 = vrot.lane.b32.xlu0 %v1099, 32
  %v1102 = vpop.permute.xlu0 %1101
  %vm1104 = vcmask 261127
  %1105 = vst.msk [vmem:[#allocation3 - $0x7] sm:$0x80] %vm1104, %v1102
  %v1106 = vpack.c.bf16 %v992, %v991
  %v1107 = vpack.c.bf16 %v994, %v993
  %s1108 = scalar_lea.vmem [#allocation2], 32
  %v1109 = vld [vmem:[%s1108] sm:$0xff]
  %v1110 = vld [vmem:[%s1108 + $0x8] sm:$0xff]
  %v1111 = vld [vmem:[%s1108 + $0x10] sm:$0xff]
  %v1112 = vld [vmem:[%s1108 + $0x18] sm:$0xff]
  %1115 = vrot.lane.b32.xlu0 %v1106, 32
  %v1116 = vpop.permute.xlu0 %1115
  %1117 = vrot.lane.b32.xlu0 %v1107, 32
  %v1118 = vpop.permute.xlu0 %1117
  %v1123 = vunpack.c.l.b16 %v925
  %v1124 = vunpack.c.l.b16 %v926
  %v1125 = vunpack.c.l.b16 %v927
  %v1126 = vunpack.c.l.b16 %v928
  %v1127 = vpack.c.b16 %v1124, %v1123
  %v1128 = vpack.c.b16 %v1126, %v1125
  %v1132 = vsel %vm1011, %v1116, 0
  %v1135 = vsel %vm1011, %v1118, 0
  %1137 = vmatprep.subr.bf16.mxu0 0
  %1138 = vmatpush1.bf16.msra.mxu0 %v1127
  %1139 = vmatprep.subr.bf16.mxu0 0
  %1140 = vmatpush1.bf16.msra.mxu0 %v1128
  %1141 = vmatprep.subr.bf16.mxu0 0
  %1142 = vmatpush1.bf16.msra.mxu0 0
  %1143 = vmatprep.subr.bf16.mxu0 0
  %1144 = vmatpush1.bf16.msra.mxu0 0
  %1145 = vmatprep.subr.bf16.mxu0 0
  %1146 = vmatpush1.bf16.msra.mxu0 0
  %1147 = vmatprep.subr.bf16.mxu0 0
  %1148 = vmatpush1.bf16.msra.mxu0 0
  %1149 = vmatprep.subr.bf16.mxu0 0
  %1150 = vmatpush1.bf16.msra.mxu0 0
  %1151 = vmatprep.subr.bf16.mxu0 0
  %1152 = vmatpush1.bf16.msra.mxu0 0
  %1153 = vmatprep.subr.bf16.mxu0 0
  %1154 = vmatpush1.bf16.msra.mxu0 0
  %1155 = vmatprep.subr.bf16.mxu0 0
  %1156 = vmatpush1.bf16.msra.mxu0 0
  %1157 = vmatprep.subr.bf16.mxu0 0
  %1158 = vmatpush1.bf16.msra.mxu0 0
  %1159 = vmatprep.subr.bf16.mxu0 0
  %1160 = vmatpush1.bf16.msra.mxu0 0
  %1161 = vmatprep.subr.bf16.mxu0 0
  %1162 = vmatpush1.bf16.msra.mxu0 0
  %1163 = vmatprep.subr.bf16.mxu0 0
  %1164 = vmatpush1.bf16.msra.mxu0 0
  %1165 = vmatprep.subr.bf16.mxu0 0
  %1166 = vmatpush1.bf16.msra.mxu0 0
  %1167 = vmatprep.subr.bf16.mxu0 0
  %1168 = vmatpush1.bf16.msra.mxu0 0
  %1169 = vmatprep.mubr.bf16.mxu0 0
  %1170 = vmatmul.mubr.bf16.gmra.mrb[0].mxu0 %v1132
  %v1171 = vpop.f32.mrb[0].mxu0
  %v1172 = vadd.f32 %v1109, %v1171
  %v1173 = vpop.f32.mrb[0].mxu0
  %v1174 = vpop.f32.mrb[0].mxu0
  %v1175 = vadd.f32 %v1110, %v1174
  %v1176 = vpop.f32.mrb[0].mxu0
  %1177 = vmatprep.mubr.bf16.mxu0 0
  %1178 = vmatmul.mubr.bf16.gmra.mrb[0].mxu0 %v1135
  %v1179 = vpop.f32.mrb[0].mxu0
  %v1180 = vadd.f32 %v1111, %v1179
  %v1181 = vpop.f32.mrb[0].mxu0
  %v1182 = vpop.f32.mrb[0].mxu0
  %v1183 = vadd.f32 %v1112, %v1182
  %v1184 = vpop.f32.mrb[0].mxu0
  %1185 = vdwg.mxu0
  %v1186 = vmul.f32 %v1172, %v35
  %v1187 = vmul.f32 %v1175, %v35
  %v1188 = vmul.f32 %v1180, %v35
  %v1189 = vmul.f32 %v1183, %v35
  %v1190 = vtanh.pop %v1186
  %v1191 = vtanh.pop %v1187
  %v1192 = vtanh.pop %v1188
  %v1193 = vtanh.pop %v1189
  %v1194 = vmul.f32 %v1190, %v35
  %v1195 = vmul.f32 %v1191, %v35
  %v1196 = vmul.f32 %v1192, %v35
  %v1197 = vmul.f32 %v1193, %v35
  %v1198 = vadd.f32 %v1194, %v36
  %v1199 = vadd.f32 %v1195, %v36
  %v1200 = vadd.f32 %v1196, %v36
  %v1201 = vadd.f32 %v1197, %v36
  %1206 = vrot.lane.b32.xlu0 %v967, 32
  %v1207 = vpop.permute.xlu0 %1206
  %1208 = vrot.lane.b32.xlu0 %v968, 32
  %v1209 = vpop.permute.xlu0 %1208
  %1210 = vrot.lane.b32.xlu0 %v969, 32
  %v1211 = vpop.permute.xlu0 %1210
  %1212 = vrot.lane.b32.xlu0 %v970, 32
  %v1213 = vpop.permute.xlu0 %1212
  %v1218 = vmul.f32 %v1198, %v1207
  %v1219 = vmul.f32 %v1199, %v1209
  %v1220 = vmul.f32 %v1200, %v1211
  %v1221 = vmul.f32 %v1201, %v1213
  %1226 = vrot.lane.b32.xlu0 %v1198, 64
  %v1227 = vpop.permute.xlu0 %1226
  %1228 = vrot.lane.b32.xlu0 %v1199, 64
  %v1229 = vpop.permute.xlu0 %1228
  %1230 = vrot.lane.b32.xlu0 %v1200, 64
  %v1231 = vpop.permute.xlu0 %1230
  %1232 = vrot.lane.b32.xlu0 %v1201, 64
  %v1233 = vpop.permute.xlu0 %1232
  %v1238 = vmul.f32 %v1198, %v1227
  %v1239 = vmul.f32 %v1199, %v1229
  %v1240 = vmul.f32 %v1200, %v1231
  %v1241 = vmul.f32 %v1201, %v1233
  %1246 = vrot.lane.b32.xlu0 %v1238, 32
  %v1247 = vpop.permute.xlu0 %1246
  %1248 = vrot.lane.b32.xlu0 %v1239, 32
  %v1249 = vpop.permute.xlu0 %1248
  %1250 = vrot.lane.b32.xlu0 %v1240, 32
  %v1251 = vpop.permute.xlu0 %1250
  %1252 = vrot.lane.b32.xlu0 %v1241, 32
  %v1253 = vpop.permute.xlu0 %1252
  %v1258 = vadd.f32 %v1218, %v1247
  %v1259 = vadd.f32 %v1219, %v1249
  %v1260 = vadd.f32 %v1220, %v1251
  %v1261 = vadd.f32 %v1221, %v1253
  %v1262 = vtanh.pop %v1258
  %v1263 = vtanh.pop %v1259
  %v1264 = vtanh.pop %v1260
  %v1265 = vtanh.pop %v1261
  %1270 = vrot.lane.b32.xlu0 %v1262, 64
  %v1271 = vpop.permute.xlu0 %1270
  %1272 = vrot.lane.b32.xlu0 %v1263, 64
  %v1273 = vpop.permute.xlu0 %1272
  %1274 = vrot.lane.b32.xlu0 %v1264, 64
  %v1275 = vpop.permute.xlu0 %1274
  %1276 = vrot.lane.b32.xlu0 %v1265, 64
  %v1277 = vpop.permute.xlu0 %1276
  %v1282 = vmul.f32 %v1198, %v1271
  %v1283 = vmul.f32 %v1199, %v1273
  %v1284 = vmul.f32 %v1200, %v1275
  %v1285 = vmul.f32 %v1201, %v1277
  %1290 = vrot.lane.b32.xlu0 %v1282, 32
  %v1291 = vpop.permute.xlu0 %1290
  %1292 = vrot.lane.b32.xlu0 %v1283, 32
  %v1293 = vpop.permute.xlu0 %1292
  %1294 = vrot.lane.b32.xlu0 %v1284, 32
  %v1295 = vpop.permute.xlu0 %1294
  %1296 = vrot.lane.b32.xlu0 %v1285, 32
  %v1297 = vpop.permute.xlu0 %1296
  %v1302 = vsel %vm1011, %v1291, 0.0
  %1303 = vadd.xlane.f32.xlu0 %v1302
  %v1304 = vpop.xlane.xlu0 %1303
  %v1305 = vsel %vm1011, %v1293, 0.0
  %1306 = vadd.xlane.f32.xlu0 %v1305
  %v1307 = vpop.xlane.xlu0 %1306
  %v1308 = vsel %vm1011, %v1295, 0.0
  %1309 = vadd.xlane.f32.xlu0 %v1308
  %v1310 = vpop.xlane.xlu0 %1309
  %v1311 = vsel %vm1011, %v1297, 0.0
  %1312 = vadd.xlane.f32.xlu0 %v1311
  %v1313 = vpop.xlane.xlu0 %1312
  %v1314 = vadd.f32 %v1304, %v1307
  %v1315 = vadd.f32 %v1314, %v1310
  %v1316 = vadd.f32 %v1315, %v1313
  %v1317 = vrot.slane %v1316, 4
  %v1318 = vadd.f32 %v1316, %v1317
  %v1319 = vrot.slane %v1318, 2
  %v1320 = vadd.f32 %v1318, %v1319
  %v1321 = vrot.slane %v1320, 1
  %v1322 = vadd.f32 %v1320, %v1321
  %v1323 = vmul.f32 %v1282, %v1282
  %v1324 = vmul.f32 %v1283, %v1283
  %v1325 = vmul.f32 %v1284, %v1284
  %v1326 = vmul.f32 %v1285, %v1285
  %1331 = vrot.lane.b32.xlu0 %v1323, 32
  %v1332 = vpop.permute.xlu0 %1331
  %1333 = vrot.lane.b32.xlu0 %v1324, 32
  %v1334 = vpop.permute.xlu0 %1333
  %1335 = vrot.lane.b32.xlu0 %v1325, 32
  %v1336 = vpop.permute.xlu0 %1335
  %1337 = vrot.lane.b32.xlu0 %v1326, 32
  %v1338 = vpop.permute.xlu0 %1337
  %v1343 = vsel %vm1011, %v1332, 0.0
  %1344 = vadd.xlane.f32.xlu0 %v1343
  %v1345 = vpop.xlane.xlu0 %1344
  %v1346 = vsel %vm1011, %v1334, 0.0
  %1347 = vadd.xlane.f32.xlu0 %v1346
  %v1348 = vpop.xlane.xlu0 %1347
  %v1349 = vsel %vm1011, %v1336, 0.0
  %1350 = vadd.xlane.f32.xlu0 %v1349
  %v1351 = vpop.xlane.xlu0 %1350
  %v1352 = vsel %vm1011, %v1338, 0.0
  %1353 = vadd.xlane.f32.xlu0 %v1352
  %v1354 = vpop.xlane.xlu0 %1353
  %v1355 = vadd.f32 %v1345, %v1348
  %v1356 = vadd.f32 %v1355, %v1351
  %v1357 = vadd.f32 %v1356, %v1354
  %v1358 = vrot.slane %v1357, 4
  %v1359 = vadd.f32 %v1357, %v1358
  %v1360 = vrot.slane %v1359, 2
  %v1361 = vadd.f32 %v1359, %v1360
  %v1362 = vrot.slane %v1361, 1
  %v1363 = vadd.f32 %v1361, %v1362
  %v1364 = vmul.f32 %v1322, 0.0009765625
  %v1365 = vmul.f32 %v1363, 0.0009765625
  %v1366 = vmul.f32 %v1364, %v1364
  %v1367 = vsub.f32 %v1365, %v1366
  %v1368 = vadd.f32 %v1367, 1e-05
  %v1369 = vrsqrt.pop %v1368
  %v1370 = vsub.f32 %v1285, %v1364
  %v1371 = vmul.f32 %v1370, %v1369
  %v1372 = vmul.f32 %v1371, %v1088
  %v1373 = vadd.f32 %v1372, %v1097
  %1375 = vrot.lane.b32.xlu0 %v1373, 32
  %v1376 = vpop.permute.xlu0 %1375
  %s1378 = scalar_lea.vmem [#allocation3], 1
  %1379 = vst.msk [vmem:[%s1378 - $0x7] sm:$0x80] %vm1104, %v1376
  %v1380 = vpack.c.bf16 %v1283, %v1282
  %v1381 = vpack.c.bf16 %v1285, %v1284
  %s1382 = scalar_lea.vmem [#allocation2], 64
  %v1383 = vld [vmem:[%s1382] sm:$0xff]
  %v1384 = vld [vmem:[%s1382 + $0x8] sm:$0xff]
  %v1385 = vld [vmem:[%s1382 + $0x10] sm:$0xff]
  %v1386 = vld [vmem:[%s1382 + $0x18] sm:$0xff]
  %1389 = vrot.lane.b32.xlu0 %v1380, 32
  %v1390 = vpop.permute.xlu0 %1389
  %1391 = vrot.lane.b32.xlu0 %v1381, 32
  %v1392 = vpop.permute.xlu0 %1391
  %v1394 = vsel %vm1011, %v1390, 0
  %v1397 = vsel %vm1011, %v1392, 0
  %1399 = vmatprep.subr.bf16.mxu0 0
  %1400 = vmatpush1.bf16.msra.mxu0 %v1127
  %1401 = vmatprep.subr.bf16.mxu0 0
  %1402 = vmatpush1.bf16.msra.mxu0 %v1128
  %1403 = vmatprep.subr.bf16.mxu0 0
  %1404 = vmatpush1.bf16.msra.mxu0 0
  %1405 = vmatprep.subr.bf16.mxu0 0
  %1406 = vmatpush1.bf16.msra.mxu0 0
  %1407 = vmatprep.subr.bf16.mxu0 0
  %1408 = vmatpush1.bf16.msra.mxu0 0
  %1409 = vmatprep.subr.bf16.mxu0 0
  %1410 = vmatpush1.bf16.msra.mxu0 0
  %1411 = vmatprep.subr.bf16.mxu0 0
  %1412 = vmatpush1.bf16.msra.mxu0 0
  %1413 = vmatprep.subr.bf16.mxu0 0
  %1414 = vmatpush1.bf16.msra.mxu0 0
  %1415 = vmatprep.subr.bf16.mxu0 0
  %1416 = vmatpush1.bf16.msra.mxu0 0
  %1417 = vmatprep.subr.bf16.mxu0 0
  %1418 = vmatpush1.bf16.msra.mxu0 0
  %1419 = vmatprep.subr.bf16.mxu0 0
  %1420 = vmatpush1.bf16.msra.mxu0 0
  %1421 = vmatprep.subr.bf16.mxu0 0
  %1422 = vmatpush1.bf16.msra.mxu0 0
  %1423 = vmatprep.subr.bf16.mxu0 0
  %1424 = vmatpush1.bf16.msra.mxu0 0
  %1425 = vmatprep.subr.bf16.mxu0 0
  %1426 = vmatpush1.bf16.msra.mxu0 0
  %1427 = vmatprep.subr.bf16.mxu0 0
  %1428 = vmatpush1.bf16.msra.mxu0 0
  %1429 = vmatprep.subr.bf16.mxu0 0
  %1430 = vmatpush1.bf16.msra.mxu0 0
  %1431 = vmatprep.mubr.bf16.mxu0 0
  %1432 = vmatmul.mubr.bf16.gmra.mrb[0].mxu0 %v1394
  %v1433 = vpop.f32.mrb[0].mxu0
  %v1434 = vadd.f32 %v1383, %v1433
  %v1435 = vpop.f32.mrb[0].mxu0
  %v1436 = vpop.f32.mrb[0].mxu0
  %v1437 = vadd.f32 %v1384, %v1436
  %v1438 = vpop.f32.mrb[0].mxu0
  %1439 = vmatprep.mubr.bf16.mxu0 0
  %1440 = vmatmul.mubr.bf16.gmra.mrb[0].mxu0 %v1397
  %v1441 = vpop.f32.mrb[0].mxu0
  %v1442 = vadd.f32 %v1385, %v1441
  %v1443 = vpop.f32.mrb[0].mxu0
  %v1444 = vpop.f32.mrb[0].mxu0
  %v1445 = vadd.f32 %v1386, %v1444
  %v1446 = vpop.f32.mrb[0].mxu0
  %1447 = vdwg.mxu0
  %v1448 = vmul.f32 %v1434, %v35
  %v1449 = vmul.f32 %v1437, %v35
  %v1450 = vmul.f32 %v1442, %v35
  %v1451 = vmul.f32 %v1445, %v35
  %v1452 = vtanh.pop %v1448
  %v1453 = vtanh.pop %v1449
  %v1454 = vtanh.pop %v1450
  %v1455 = vtanh.pop %v1451
  %v1456 = vmul.f32 %v1452, %v35
  %v1457 = vmul.f32 %v1453, %v35
  %v1458 = vmul.f32 %v1454, %v35
  %v1459 = vmul.f32 %v1455, %v35
  %v1460 = vadd.f32 %v1456, %v36
  %v1461 = vadd.f32 %v1457, %v36
  %v1462 = vadd.f32 %v1458, %v36
  %v1463 = vadd.f32 %v1459, %v36
  %v1464 = vmul.f32 %v1460, %v1258
  %v1465 = vmul.f32 %v1461, %v1259
  %v1466 = vmul.f32 %v1462, %v1260
  %v1467 = vmul.f32 %v1463, %v1261
  %1472 = vrot.lane.b32.xlu0 %v1460, 64
  %v1473 = vpop.permute.xlu0 %1472
  %1474 = vrot.lane.b32.xlu0 %v1461, 64
  %v1475 = vpop.permute.xlu0 %1474
  %1476 = vrot.lane.b32.xlu0 %v1462, 64
  %v1477 = vpop.permute.xlu0 %1476
  %1478 = vrot.lane.b32.xlu0 %v1463, 64
  %v1479 = vpop.permute.xlu0 %1478
  %v1484 = vmul.f32 %v1460, %v1473
  %v1485 = vmul.f32 %v1461, %v1475
  %v1486 = vmul.f32 %v1462, %v1477
  %v1487 = vmul.f32 %v1463, %v1479
  %1492 = vrot.lane.b32.xlu0 %v1484, 32
  %v1493 = vpop.permute.xlu0 %1492
  %1494 = vrot.lane.b32.xlu0 %v1485, 32
  %v1495 = vpop.permute.xlu0 %1494
  %1496 = vrot.lane.b32.xlu0 %v1486, 32
  %v1497 = vpop.permute.xlu0 %1496
  %1498 = vrot.lane.b32.xlu0 %v1487, 32
  %v1499 = vpop.permute.xlu0 %1498
  %v1504 = vadd.f32 %v1464, %v1493
  %v1505 = vadd.f32 %v1465, %v1495
  %v1506 = vadd.f32 %v1466, %v1497
  %v1507 = vadd.f32 %v1467, %v1499
  %v1508 = vtanh.pop %v1504
  %v1509 = vtanh.pop %v1505
  %v1510 = vtanh.pop %v1506
  %v1511 = vtanh.pop %v1507
  %1516 = vrot.lane.b32.xlu0 %v1508, 64
  %v1517 = vpop.permute.xlu0 %1516
  %1518 = vrot.lane.b32.xlu0 %v1509, 64
  %v1519 = vpop.permute.xlu0 %1518
  %1520 = vrot.lane.b32.xlu0 %v1510, 64
  %v1521 = vpop.permute.xlu0 %1520
  %1522 = vrot.lane.b32.xlu0 %v1511, 64
  %v1523 = vpop.permute.xlu0 %1522
  %v1528 = vmul.f32 %v1460, %v1517
  %v1529 = vmul.f32 %v1461, %v1519
  %v1530 = vmul.f32 %v1462, %v1521
  %v1531 = vmul.f32 %v1463, %v1523
  %1536 = vrot.lane.b32.xlu0 %v1528, 32
  %v1537 = vpop.permute.xlu0 %1536
  %1538 = vrot.lane.b32.xlu0 %v1529, 32
  %v1539 = vpop.permute.xlu0 %1538
  %1540 = vrot.lane.b32.xlu0 %v1530, 32
  %v1541 = vpop.permute.xlu0 %1540
  %1542 = vrot.lane.b32.xlu0 %v1531, 32
  %v1543 = vpop.permute.xlu0 %1542
  %v1548 = vsel %vm1011, %v1537, 0.0
  %1549 = vadd.xlane.f32.xlu0 %v1548
  %v1550 = vpop.xlane.xlu0 %1549
  %v1551 = vsel %vm1011, %v1539, 0.0
  %1552 = vadd.xlane.f32.xlu0 %v1551
  %v1553 = vpop.xlane.xlu0 %1552
  %v1554 = vsel %vm1011, %v1541, 0.0
  %1555 = vadd.xlane.f32.xlu0 %v1554
  %v1556 = vpop.xlane.xlu0 %1555
  %v1557 = vsel %vm1011, %v1543, 0.0
  %1558 = vadd.xlane.f32.xlu0 %v1557
  %v1559 = vpop.xlane.xlu0 %1558
  %v1560 = vadd.f32 %v1550, %v1553
  %v1561 = vadd.f32 %v1560, %v1556
  %v1562 = vadd.f32 %v1561, %v1559
  %v1563 = vrot.slane %v1562, 4
  %v1564 = vadd.f32 %v1562, %v1563
  %v1565 = vrot.slane %v1564, 2
  %v1566 = vadd.f32 %v1564, %v1565
  %v1567 = vrot.slane %v1566, 1
  %v1568 = vadd.f32 %v1566, %v1567
  %v1569 = vmul.f32 %v1528, %v1528
  %v1570 = vmul.f32 %v1529, %v1529
  %v1571 = vmul.f32 %v1530, %v1530
  %v1572 = vmul.f32 %v1531, %v1531
  %1577 = vrot.lane.b32.xlu0 %v1569, 32
  %v1578 = vpop.permute.xlu0 %1577
  %1579 = vrot.lane.b32.xlu0 %v1570, 32
  %v1580 = vpop.permute.xlu0 %1579
  %1581 = vrot.lane.b32.xlu0 %v1571, 32
  %v1582 = vpop.permute.xlu0 %1581
  %1583 = vrot.lane.b32.xlu0 %v1572, 32
  %v1584 = vpop.permute.xlu0 %1583
  %v1589 = vsel %vm1011, %v1578, 0.0
  %1590 = vadd.xlane.f32.xlu0 %v1589
  %v1591 = vpop.xlane.xlu0 %1590
  %v1592 = vsel %vm1011, %v1580, 0.0
  %1593 = vadd.xlane.f32.xlu0 %v1592
  %v1594 = vpop.xlane.xlu0 %1593
  %v1595 = vsel %vm1011, %v1582, 0.0
  %1596 = vadd.xlane.f32.xlu0 %v1595
  %v1597 = vpop.xlane.xlu0 %1596
  %v1598 = vsel %vm1011, %v1584, 0.0
  %1599 = vadd.xlane.f32.xlu0 %v1598
  %v1600 = vpop.xlane.xlu0 %1599
  %v1601 = vadd.f32 %v1591, %v1594
  %v1602 = vadd.f32 %v1601, %v1597
  %v1603 = vadd.f32 %v1602, %v1600
  %v1604 = vrot.slane %v1603, 4
  %v1605 = vadd.f32 %v1603, %v1604
  %v1606 = vrot.slane %v1605, 2
  %v1607 = vadd.f32 %v1605, %v1606
  %v1608 = vrot.slane %v1607, 1
  %v1609 = vadd.f32 %v1607, %v1608
  %v1610 = vmul.f32 %v1568, 0.0009765625
  %v1611 = vmul.f32 %v1609, 0.0009765625
  %v1612 = vmul.f32 %v1610, %v1610
  %v1613 = vsub.f32 %v1611, %v1612
  %v1614 = vadd.f32 %v1613, 1e-05
  %v1615 = vrsqrt.pop %v1614
  %v1616 = vsub.f32 %v1531, %v1610
  %v1617 = vmul.f32 %v1616, %v1615
  %v1618 = vmul.f32 %v1617, %v1088
  %v1619 = vadd.f32 %v1618, %v1097
  %1621 = vrot.lane.b32.xlu0 %v1619, 32
  %v1622 = vpop.permute.xlu0 %1621
  %s1624 = scalar_lea.vmem [#allocation3], 2
  %1625 = vst.msk [vmem:[%s1624 - $0x7] sm:$0x80] %vm1104, %v1622
  %v1626 = vpack.c.bf16 %v1529, %v1528
  %v1627 = vpack.c.bf16 %v1531, %v1530
  %s1628 = scalar_lea.vmem [#allocation2], 96
  %v1629 = vld [vmem:[%s1628] sm:$0xff]
  %v1630 = vld [vmem:[%s1628 + $0x8] sm:$0xff]
  %v1631 = vld [vmem:[%s1628 + $0x10] sm:$0xff]
  %v1632 = vld [vmem:[%s1628 + $0x18] sm:$0xff]
  %1635 = vrot.lane.b32.xlu0 %v1626, 32
  %v1636 = vpop.permute.xlu0 %1635
  %1637 = vrot.lane.b32.xlu0 %v1627, 32
  %v1638 = vpop.permute.xlu0 %1637
  %v1640 = vsel %vm1011, %v1636, 0
  %v1643 = vsel %vm1011, %v1638, 0
  %1645 = vmatprep.subr.bf16.mxu0 0
  %1646 = vmatpush1.bf16.msra.mxu0 %v1127
  %1647 = vmatprep.subr.bf16.mxu0 0
  %1648 = vmatpush1.bf16.msra.mxu0 %v1128
  %1649 = vmatprep.subr.bf16.mxu0 0
  %1650 = vmatpush1.bf16.msra.mxu0 0
  %1651 = vmatprep.subr.bf16.mxu0 0
  %1652 = vmatpush1.bf16.msra.mxu0 0
  %1653 = vmatprep.subr.bf16.mxu0 0
  %1654 = vmatpush1.bf16.msra.mxu0 0
  %1655 = vmatprep.subr.bf16.mxu0 0
  %1656 = vmatpush1.bf16.msra.mxu0 0
  %1657 = vmatprep.subr.bf16.mxu0 0
  %1658 = vmatpush1.bf16.msra.mxu0 0
  %1659 = vmatprep.subr.bf16.mxu0 0
  %1660 = vmatpush1.bf16.msra.mxu0 0
  %1661 = vmatprep.subr.bf16.mxu0 0
  %1662 = vmatpush1.bf16.msra.mxu0 0
  %1663 = vmatprep.subr.bf16.mxu0 0
  %1664 = vmatpush1.bf16.msra.mxu0 0
  %1665 = vmatprep.subr.bf16.mxu0 0
  %1666 = vmatpush1.bf16.msra.mxu0 0
  %1667 = vmatprep.subr.bf16.mxu0 0
  %1668 = vmatpush1.bf16.msra.mxu0 0
  %1669 = vmatprep.subr.bf16.mxu0 0
  %1670 = vmatpush1.bf16.msra.mxu0 0
  %1671 = vmatprep.subr.bf16.mxu0 0
  %1672 = vmatpush1.bf16.msra.mxu0 0
  %1673 = vmatprep.subr.bf16.mxu0 0
  %1674 = vmatpush1.bf16.msra.mxu0 0
  %1675 = vmatprep.subr.bf16.mxu0 0
  %1676 = vmatpush1.bf16.msra.mxu0 0
  %1677 = vmatprep.mubr.bf16.mxu0 0
  %1678 = vmatmul.mubr.bf16.gmra.mrb[0].mxu0 %v1640
  %v1679 = vpop.f32.mrb[0].mxu0
  %v1680 = vadd.f32 %v1629, %v1679
  %v1681 = vpop.f32.mrb[0].mxu0
  %v1682 = vpop.f32.mrb[0].mxu0
  %v1683 = vadd.f32 %v1630, %v1682
  %v1684 = vpop.f32.mrb[0].mxu0
  %1685 = vmatprep.mubr.bf16.mxu0 0
  %1686 = vmatmul.mubr.bf16.gmra.mrb[0].mxu0 %v1643
  %v1687 = vpop.f32.mrb[0].mxu0
  %v1688 = vadd.f32 %v1631, %v1687
  %v1689 = vpop.f32.mrb[0].mxu0
  %v1690 = vpop.f32.mrb[0].mxu0
  %v1691 = vadd.f32 %v1632, %v1690
  %v1692 = vpop.f32.mrb[0].mxu0
  %1693 = vdwg.mxu0
  %v1694 = vmul.f32 %v1680, %v35
  %v1695 = vmul.f32 %v1683, %v35
  %v1696 = vmul.f32 %v1688, %v35
  %v1697 = vmul.f32 %v1691, %v35
  %v1698 = vtanh.pop %v1694
  %v1699 = vtanh.pop %v1695
  %v1700 = vtanh.pop %v1696
  %v1701 = vtanh.pop %v1697
  %v1702 = vmul.f32 %v1698, %v35
  %v1703 = vmul.f32 %v1699, %v35
  %v1704 = vmul.f32 %v1700, %v35
  %v1705 = vmul.f32 %v1701, %v35
  %v1706 = vadd.f32 %v1702, %v36
  %v1707 = vadd.f32 %v1703, %v36
  %v1708 = vadd.f32 %v1704, %v36
  %v1709 = vadd.f32 %v1705, %v36
  %v1710 = vmul.f32 %v1706, %v1504
  %v1711 = vmul.f32 %v1707, %v1505
  %v1712 = vmul.f32 %v1708, %v1506
  %v1713 = vmul.f32 %v1709, %v1507
  %1718 = vrot.lane.b32.xlu0 %v1706, 64
  %v1719 = vpop.permute.xlu0 %1718
  %1720 = vrot.lane.b32.xlu0 %v1707, 64
  %v1721 = vpop.permute.xlu0 %1720
  %1722 = vrot.lane.b32.xlu0 %v1708, 64
  %v1723 = vpop.permute.xlu0 %1722
  %1724 = vrot.lane.b32.xlu0 %v1709, 64
  %v1725 = vpop.permute.xlu0 %1724
  %v1730 = vmul.f32 %v1706, %v1719
  %v1731 = vmul.f32 %v1707, %v1721
  %v1732 = vmul.f32 %v1708, %v1723
  %v1733 = vmul.f32 %v1709, %v1725
  %1738 = vrot.lane.b32.xlu0 %v1730, 32
  %v1739 = vpop.permute.xlu0 %1738
  %1740 = vrot.lane.b32.xlu0 %v1731, 32
  %v1741 = vpop.permute.xlu0 %1740
  %1742 = vrot.lane.b32.xlu0 %v1732, 32
  %v1743 = vpop.permute.xlu0 %1742
  %1744 = vrot.lane.b32.xlu0 %v1733, 32
  %v1745 = vpop.permute.xlu0 %1744
  %v1750 = vadd.f32 %v1710, %v1739
  %v1751 = vadd.f32 %v1711, %v1741
  %v1752 = vadd.f32 %v1712, %v1743
  %v1753 = vadd.f32 %v1713, %v1745
  %v1754 = vtanh.pop %v1750
  %v1755 = vtanh.pop %v1751
  %v1756 = vtanh.pop %v1752
  %v1757 = vtanh.pop %v1753
  %1762 = vrot.lane.b32.xlu0 %v1754, 64
  %v1763 = vpop.permute.xlu0 %1762
  %1764 = vrot.lane.b32.xlu0 %v1755, 64
  %v1765 = vpop.permute.xlu0 %1764
  %1766 = vrot.lane.b32.xlu0 %v1756, 64
  %v1767 = vpop.permute.xlu0 %1766
  %1768 = vrot.lane.b32.xlu0 %v1757, 64
  %v1769 = vpop.permute.xlu0 %1768
  %v1774 = vmul.f32 %v1706, %v1763
  %v1775 = vmul.f32 %v1707, %v1765
  %v1776 = vmul.f32 %v1708, %v1767
  %v1777 = vmul.f32 %v1709, %v1769
  %1782 = vrot.lane.b32.xlu0 %v1774, 32
  %v1783 = vpop.permute.xlu0 %1782
  %1784 = vrot.lane.b32.xlu0 %v1775, 32
  %v1785 = vpop.permute.xlu0 %1784
  %1786 = vrot.lane.b32.xlu0 %v1776, 32
  %v1787 = vpop.permute.xlu0 %1786
  %1788 = vrot.lane.b32.xlu0 %v1777, 32
  %v1789 = vpop.permute.xlu0 %1788
  %v1794 = vsel %vm1011, %v1783, 0.0
  %1795 = vadd.xlane.f32.xlu0 %v1794
  %v1796 = vpop.xlane.xlu0 %1795
  %v1797 = vsel %vm1011, %v1785, 0.0
  %1798 = vadd.xlane.f32.xlu0 %v1797
  %v1799 = vpop.xlane.xlu0 %1798
  %v1800 = vsel %vm1011, %v1787, 0.0
  %1801 = vadd.xlane.f32.xlu0 %v1800
  %v1802 = vpop.xlane.xlu0 %1801
  %v1803 = vsel %vm1011, %v1789, 0.0
  %1804 = vadd.xlane.f32.xlu0 %v1803
  %v1805 = vpop.xlane.xlu0 %1804
  %v1806 = vadd.f32 %v1796, %v1799
  %v1807 = vadd.f32 %v1806, %v1802
  %v1808 = vadd.f32 %v1807, %v1805
  %v1809 = vrot.slane %v1808, 4
  %v1810 = vadd.f32 %v1808, %v1809
  %v1811 = vrot.slane %v1810, 2
  %v1812 = vadd.f32 %v1810, %v1811
  %v1813 = vrot.slane %v1812, 1
  %v1814 = vadd.f32 %v1812, %v1813
  %v1815 = vmul.f32 %v1774, %v1774
  %v1816 = vmul.f32 %v1775, %v1775
  %v1817 = vmul.f32 %v1776, %v1776
  %v1818 = vmul.f32 %v1777, %v1777
  %1823 = vrot.lane.b32.xlu0 %v1815, 32
  %v1824 = vpop.permute.xlu0 %1823
  %1825 = vrot.lane.b32.xlu0 %v1816, 32
  %v1826 = vpop.permute.xlu0 %1825
  %1827 = vrot.lane.b32.xlu0 %v1817, 32
  %v1828 = vpop.permute.xlu0 %1827
  %1829 = vrot.lane.b32.xlu0 %v1818, 32
  %v1830 = vpop.permute.xlu0 %1829
  %v1835 = vsel %vm1011, %v1824, 0.0
  %1836 = vadd.xlane.f32.xlu0 %v1835
  %v1837 = vpop.xlane.xlu0 %1836
  %v1838 = vsel %vm1011, %v1826, 0.0
  %1839 = vadd.xlane.f32.xlu0 %v1838
  %v1840 = vpop.xlane.xlu0 %1839
  %v1841 = vsel %vm1011, %v1828, 0.0
  %1842 = vadd.xlane.f32.xlu0 %v1841
  %v1843 = vpop.xlane.xlu0 %1842
  %v1844 = vsel %vm1011, %v1830, 0.0
  %1845 = vadd.xlane.f32.xlu0 %v1844
  %v1846 = vpop.xlane.xlu0 %1845
  %v1847 = vadd.f32 %v1837, %v1840
  %v1848 = vadd.f32 %v1847, %v1843
  %v1849 = vadd.f32 %v1848, %v1846
  %v1850 = vrot.slane %v1849, 4
  %v1851 = vadd.f32 %v1849, %v1850
  %v1852 = vrot.slane %v1851, 2
  %v1853 = vadd.f32 %v1851, %v1852
  %v1854 = vrot.slane %v1853, 1
  %v1855 = vadd.f32 %v1853, %v1854
  %v1856 = vmul.f32 %v1814, 0.0009765625
  %v1857 = vmul.f32 %v1855, 0.0009765625
  %v1858 = vmul.f32 %v1856, %v1856
  %v1859 = vsub.f32 %v1857, %v1858
  %v1860 = vadd.f32 %v1859, 1e-05
  %v1861 = vrsqrt.pop %v1860
  %v1862 = vsub.f32 %v1777, %v1856
  %v1863 = vmul.f32 %v1862, %v1861
  %v1864 = vmul.f32 %v1863, %v1088
  %v1865 = vadd.f32 %v1864, %v1097
  %1867 = vrot.lane.b32.xlu0 %v1865, 32
  %v1868 = vpop.permute.xlu0 %1867
  %s1870 = scalar_lea.vmem [#allocation3], 3
  %1871 = vst.msk [vmem:[%s1870 - $0x7] sm:$0x80] %vm1104, %v1868
  %v1872 = vpack.c.bf16 %v1775, %v1774
  %v1873 = vpack.c.bf16 %v1777, %v1776
  %s1874 = scalar_lea.vmem [#allocation2], 128
  %v1875 = vld [vmem:[%s1874] sm:$0xff]
  %v1876 = vld [vmem:[%s1874 + $0x8] sm:$0xff]
  %v1877 = vld [vmem:[%s1874 + $0x10] sm:$0xff]
  %v1878 = vld [vmem:[%s1874 + $0x18] sm:$0xff]
  %1881 = vrot.lane.b32.xlu0 %v1872, 32
  %v1882 = vpop.permute.xlu0 %1881
  %1883 = vrot.lane.b32.xlu0 %v1873, 32
  %v1884 = vpop.permute.xlu0 %1883
  %v1886 = vsel %vm1011, %v1882, 0
  %v1889 = vsel %vm1011, %v1884, 0
  %1891 = vmatprep.subr.bf16.mxu0 0
  %1892 = vmatpush1.bf16.msra.mxu0 %v1127
  %1893 = vmatprep.subr.bf16.mxu0 0
  %1894 = vmatpush1.bf16.msra.mxu0 %v1128
  %1895 = vmatprep.subr.bf16.mxu0 0
  %1896 = vmatpush1.bf16.msra.mxu0 0
  %1897 = vmatprep.subr.bf16.mxu0 0
  %1898 = vmatpush1.bf16.msra.mxu0 0
  %1899 = vmatprep.subr.bf16.mxu0 0
  %1900 = vmatpush1.bf16.msra.mxu0 0
  %1901 = vmatprep.subr.bf16.mxu0 0
  %1902 = vmatpush1.bf16.msra.mxu0 0
  %1903 = vmatprep.subr.bf16.mxu0 0
  %1904 = vmatpush1.bf16.msra.mxu0 0
  %1905 = vmatprep.subr.bf16.mxu0 0
  %1906 = vmatpush1.bf16.msra.mxu0 0
  %1907 = vmatprep.subr.bf16.mxu0 0
  %1908 = vmatpush1.bf16.msra.mxu0 0
  %1909 = vmatprep.subr.bf16.mxu0 0
  %1910 = vmatpush1.bf16.msra.mxu0 0
  %1911 = vmatprep.subr.bf16.mxu0 0
  %1912 = vmatpush1.bf16.msra.mxu0 0
  %1913 = vmatprep.subr.bf16.mxu0 0
  %1914 = vmatpush1.bf16.msra.mxu0 0
  %1915 = vmatprep.subr.bf16.mxu0 0
  %1916 = vmatpush1.bf16.msra.mxu0 0
  %1917 = vmatprep.subr.bf16.mxu0 0
  %1918 = vmatpush1.bf16.msra.mxu0 0
  %1919 = vmatprep.subr.bf16.mxu0 0
  %1920 = vmatpush1.bf16.msra.mxu0 0
  %1921 = vmatprep.subr.bf16.mxu0 0
  %1922 = vmatpush1.bf16.msra.mxu0 0
  %1923 = vmatprep.mubr.bf16.mxu0 0
  %1924 = vmatmul.mubr.bf16.gmra.mrb[0].mxu0 %v1886
  %v1925 = vpop.f32.mrb[0].mxu0
  %v1926 = vadd.f32 %v1875, %v1925
  %v1927 = vpop.f32.mrb[0].mxu0
  %v1928 = vpop.f32.mrb[0].mxu0
  %v1929 = vadd.f32 %v1876, %v1928
  %v1930 = vpop.f32.mrb[0].mxu0
  %1931 = vmatprep.mubr.bf16.mxu0 0
  %1932 = vmatmul.mubr.bf16.gmra.mrb[0].mxu0 %v1889
  %v1933 = vpop.f32.mrb[0].mxu0
  %v1934 = vadd.f32 %v1877, %v1933
  %v1935 = vpop.f32.mrb[0].mxu0
  %v1936 = vpop.f32.mrb[0].mxu0
  %v1937 = vadd.f32 %v1878, %v1936
  %v1938 = vpop.f32.mrb[0].mxu0
  %1939 = vdwg.mxu0
  %v1940 = vmul.f32 %v1926, %v35
  %v1941 = vmul.f32 %v1929, %v35
  %v1942 = vmul.f32 %v1934, %v35
  %v1943 = vmul.f32 %v1937, %v35
  %v1944 = vtanh.pop %v1940
  %v1945 = vtanh.pop %v1941
  %v1946 = vtanh.pop %v1942
  %v1947 = vtanh.pop %v1943
  %v1948 = vmul.f32 %v1944, %v35
  %v1949 = vmul.f32 %v1945, %v35
  %v1950 = vmul.f32 %v1946, %v35
  %v1951 = vmul.f32 %v1947, %v35
  %v1952 = vadd.f32 %v1948, %v36
  %v1953 = vadd.f32 %v1949, %v36
  %v1954 = vadd.f32 %v1950, %v36
  %v1955 = vadd.f32 %v1951, %v36
  %v1956 = vmul.f32 %v1952, %v1750
  %v1957 = vmul.f32 %v1953, %v1751
  %v1958 = vmul.f32 %v1954, %v1752
  %v1959 = vmul.f32 %v1955, %v1753
  %1964 = vrot.lane.b32.xlu0 %v1952, 64
  %v1965 = vpop.permute.xlu0 %1964
  %1966 = vrot.lane.b32.xlu0 %v1953, 64
  %v1967 = vpop.permute.xlu0 %1966
  %1968 = vrot.lane.b32.xlu0 %v1954, 64
  %v1969 = vpop.permute.xlu0 %1968
  %1970 = vrot.lane.b32.xlu0 %v1955, 64
  %v1971 = vpop.permute.xlu0 %1970
  %v1976 = vmul.f32 %v1952, %v1965
  %v1977 = vmul.f32 %v1953, %v1967
  %v1978 = vmul.f32 %v1954, %v1969
  %v1979 = vmul.f32 %v1955, %v1971
  %1984 = vrot.lane.b32.xlu0 %v1976, 32
  %v1985 = vpop.permute.xlu0 %1984
  %1986 = vrot.lane.b32.xlu0 %v1977, 32
  %v1987 = vpop.permute.xlu0 %1986
  %1988 = vrot.lane.b32.xlu0 %v1978, 32
  %v1989 = vpop.permute.xlu0 %1988
  %1990 = vrot.lane.b32.xlu0 %v1979, 32
  %v1991 = vpop.permute.xlu0 %1990
  %v1996 = vadd.f32 %v1956, %v1985
  %v1997 = vadd.f32 %v1957, %v1987
  %v1998 = vadd.f32 %v1958, %v1989
  %v1999 = vadd.f32 %v1959, %v1991
  %v2000 = vtanh.pop %v1996
  %v2001 = vtanh.pop %v1997
  %v2002 = vtanh.pop %v1998
  %v2003 = vtanh.pop %v1999
  %2008 = vrot.lane.b32.xlu0 %v2000, 64
  %v2009 = vpop.permute.xlu0 %2008
  %2010 = vrot.lane.b32.xlu0 %v2001, 64
  %v2011 = vpop.permute.xlu0 %2010
  %2012 = vrot.lane.b32.xlu0 %v2002, 64
  %v2013 = vpop.permute.xlu0 %2012
  %2014 = vrot.lane.b32.xlu0 %v2003, 64
  %v2015 = vpop.permute.xlu0 %2014
  %v2020 = vmul.f32 %v1952, %v2009
  %v2021 = vmul.f32 %v1953, %v2011
  %v2022 = vmul.f32 %v1954, %v2013
  %v2023 = vmul.f32 %v1955, %v2015
  %2028 = vrot.lane.b32.xlu0 %v2020, 32
  %v2029 = vpop.permute.xlu0 %2028
  %2030 = vrot.lane.b32.xlu0 %v2021, 32
  %v2031 = vpop.permute.xlu0 %2030
  %2032 = vrot.lane.b32.xlu0 %v2022, 32
  %v2033 = vpop.permute.xlu0 %2032
  %2034 = vrot.lane.b32.xlu0 %v2023, 32
  %v2035 = vpop.permute.xlu0 %2034
  %v2040 = vsel %vm1011, %v2029, 0.0
  %2041 = vadd.xlane.f32.xlu0 %v2040
  %v2042 = vpop.xlane.xlu0 %2041
  %v2043 = vsel %vm1011, %v2031, 0.0
  %2044 = vadd.xlane.f32.xlu0 %v2043
  %v2045 = vpop.xlane.xlu0 %2044
  %v2046 = vsel %vm1011, %v2033, 0.0
  %2047 = vadd.xlane.f32.xlu0 %v2046
  %v2048 = vpop.xlane.xlu0 %2047
  %v2049 = vsel %vm1011, %v2035, 0.0
  %2050 = vadd.xlane.f32.xlu0 %v2049
  %v2051 = vpop.xlane.xlu0 %2050
  %v2052 = vadd.f32 %v2042, %v2045
  %v2053 = vadd.f32 %v2052, %v2048
  %v2054 = vadd.f32 %v2053, %v2051
  %v2055 = vrot.slane %v2054, 4
  %v2056 = vadd.f32 %v2054, %v2055
  %v2057 = vrot.slane %v2056, 2
  %v2058 = vadd.f32 %v2056, %v2057
  %v2059 = vrot.slane %v2058, 1
  %v2060 = vadd.f32 %v2058, %v2059
  %v2061 = vmul.f32 %v2020, %v2020
  %v2062 = vmul.f32 %v2021, %v2021
  %v2063 = vmul.f32 %v2022, %v2022
  %v2064 = vmul.f32 %v2023, %v2023
  %2069 = vrot.lane.b32.xlu0 %v2061, 32
  %v2070 = vpop.permute.xlu0 %2069
  %2071 = vrot.lane.b32.xlu0 %v2062, 32
  %v2072 = vpop.permute.xlu0 %2071
  %2073 = vrot.lane.b32.xlu0 %v2063, 32
  %v2074 = vpop.permute.xlu0 %2073
  %2075 = vrot.lane.b32.xlu0 %v2064, 32
  %v2076 = vpop.permute.xlu0 %2075
  %v2081 = vsel %vm1011, %v2070, 0.0
  %2082 = vadd.xlane.f32.xlu0 %v2081
  %v2083 = vpop.xlane.xlu0 %2082
  %v2084 = vsel %vm1011, %v2072, 0.0
  %2085 = vadd.xlane.f32.xlu0 %v2084
  %v2086 = vpop.xlane.xlu0 %2085
  %v2087 = vsel %vm1011, %v2074, 0.0
  %2088 = vadd.xlane.f32.xlu0 %v2087
  %v2089 = vpop.xlane.xlu0 %2088
  %v2090 = vsel %vm1011, %v2076, 0.0
  %2091 = vadd.xlane.f32.xlu0 %v2090
  %v2092 = vpop.xlane.xlu0 %2091
  %v2093 = vadd.f32 %v2083, %v2086
  %v2094 = vadd.f32 %v2093, %v2089
  %v2095 = vadd.f32 %v2094, %v2092
  %v2096 = vrot.slane %v2095, 4
  %v2097 = vadd.f32 %v2095, %v2096
  %v2098 = vrot.slane %v2097, 2
  %v2099 = vadd.f32 %v2097, %v2098
  %v2100 = vrot.slane %v2099, 1
  %v2101 = vadd.f32 %v2099, %v2100
  %v2102 = vmul.f32 %v2060, 0.0009765625
  %v2103 = vmul.f32 %v2101, 0.0009765625
  %v2104 = vmul.f32 %v2102, %v2102
  %v2105 = vsub.f32 %v2103, %v2104
  %v2106 = vadd.f32 %v2105, 1e-05
  %v2107 = vrsqrt.pop %v2106
  %v2108 = vsub.f32 %v2023, %v2102
  %v2109 = vmul.f32 %v2108, %v2107
  %v2110 = vmul.f32 %v2109, %v1088
  %v2111 = vadd.f32 %v2110, %v1097
  %2113 = vrot.lane.b32.xlu0 %v2111, 32
  %v2114 = vpop.permute.xlu0 %2113
  %s2116 = scalar_lea.vmem [#allocation3], 4
  %2117 = vst.msk [vmem:[%s2116 - $0x7] sm:$0x80] %vm1104, %v2114
  %v2118 = vpack.c.bf16 %v2021, %v2020
  %v2119 = vpack.c.bf16 %v2023, %v2022
  %s2120 = scalar_lea.vmem [#allocation2], 160
  %v2121 = vld [vmem:[%s2120] sm:$0xff]
  %v2122 = vld [vmem:[%s2120 + $0x8] sm:$0xff]
  %v2123 = vld [vmem:[%s2120 + $0x10] sm:$0xff]
  %v2124 = vld [vmem:[%s2120 + $0x18] sm:$0xff]
  %2127 = vrot.lane.b32.xlu0 %v2118, 32
  %v2128 = vpop.permute.xlu0 %2127
  %2129 = vrot.lane.b32.xlu0 %v2119, 32
  %v2130 = vpop.permute.xlu0 %2129
  %v2132 = vsel %vm1011, %v2128, 0
  %v2135 = vsel %vm1011, %v2130, 0
  %2137 = vmatprep.subr.bf16.mxu0 0
  %2138 = vmatpush1.bf16.msra.mxu0 %v1127
  %2139 = vmatprep.subr.bf16.mxu0 0
  %2140 = vmatpush1.bf16.msra.mxu0 %v1128
  %2141 = vmatprep.subr.bf16.mxu0 0
  %2142 = vmatpush1.bf16.msra.mxu0 0
  %2143 = vmatprep.subr.bf16.mxu0 0
  %2144 = vmatpush1.bf16.msra.mxu0 0
  %2145 = vmatprep.subr.bf16.mxu0 0
  %2146 = vmatpush1.bf16.msra.mxu0 0
  %2147 = vmatprep.subr.bf16.mxu0 0
  %2148 = vmatpush1.bf16.msra.mxu0 0
  %2149 = vmatprep.subr.bf16.mxu0 0
  %2150 = vmatpush1.bf16.msra.mxu0 0
  %2151 = vmatprep.subr.bf16.mxu0 0
  %2152 = vmatpush1.bf16.msra.mxu0 0
  %2153 = vmatprep.subr.bf16.mxu0 0
  %2154 = vmatpush1.bf16.msra.mxu0 0
  %2155 = vmatprep.subr.bf16.mxu0 0
  %2156 = vmatpush1.bf16.msra.mxu0 0
  %2157 = vmatprep.subr.bf16.mxu0 0
  %2158 = vmatpush1.bf16.msra.mxu0 0
  %2159 = vmatprep.subr.bf16.mxu0 0
  %2160 = vmatpush1.bf16.msra.mxu0 0
  %2161 = vmatprep.subr.bf16.mxu0 0
  %2162 = vmatpush1.bf16.msra.mxu0 0
  %2163 = vmatprep.subr.bf16.mxu0 0
  %2164 = vmatpush1.bf16.msra.mxu0 0
  %2165 = vmatprep.subr.bf16.mxu0 0
  %2166 = vmatpush1.bf16.msra.mxu0 0
  %2167 = vmatprep.subr.bf16.mxu0 0
  %2168 = vmatpush1.bf16.msra.mxu0 0
  %2169 = vmatprep.mubr.bf16.mxu0 0
  %2170 = vmatmul.mubr.bf16.gmra.mrb[0].mxu0 %v2132
  %v2171 = vpop.f32.mrb[0].mxu0
  %v2172 = vadd.f32 %v2121, %v2171
  %v2173 = vpop.f32.mrb[0].mxu0
  %v2174 = vpop.f32.mrb[0].mxu0
  %v2175 = vadd.f32 %v2122, %v2174
  %v2176 = vpop.f32.mrb[0].mxu0
  %2177 = vmatprep.mubr.bf16.mxu0 0
  %2178 = vmatmul.mubr.bf16.gmra.mrb[0].mxu0 %v2135
  %v2179 = vpop.f32.mrb[0].mxu0
  %v2180 = vadd.f32 %v2123, %v2179
  %v2181 = vpop.f32.mrb[0].mxu0
  %v2182 = vpop.f32.mrb[0].mxu0
  %v2183 = vadd.f32 %v2124, %v2182
  %v2184 = vpop.f32.mrb[0].mxu0
  %2185 = vdwg.mxu0
  %v2186 = vmul.f32 %v2172, %v35
  %v2187 = vmul.f32 %v2175, %v35
  %v2188 = vmul.f32 %v2180, %v35
  %v2189 = vmul.f32 %v2183, %v35
  %v2190 = vtanh.pop %v2186
  %v2191 = vtanh.pop %v2187
  %v2192 = vtanh.pop %v2188
  %v2193 = vtanh.pop %v2189
  %v2194 = vmul.f32 %v2190, %v35
  %v2195 = vmul.f32 %v2191, %v35
  %v2196 = vmul.f32 %v2192, %v35
  %v2197 = vmul.f32 %v2193, %v35
  %v2198 = vadd.f32 %v2194, %v36
  %v2199 = vadd.f32 %v2195, %v36
  %v2200 = vadd.f32 %v2196, %v36
  %v2201 = vadd.f32 %v2197, %v36
  %v2202 = vmul.f32 %v2198, %v1996
  %v2203 = vmul.f32 %v2199, %v1997
  %v2204 = vmul.f32 %v2200, %v1998
  %v2205 = vmul.f32 %v2201, %v1999
  %2210 = vrot.lane.b32.xlu0 %v2198, 64
  %v2211 = vpop.permute.xlu0 %2210
  %2212 = vrot.lane.b32.xlu0 %v2199, 64
  %v2213 = vpop.permute.xlu0 %2212
  %2214 = vrot.lane.b32.xlu0 %v2200, 64
  %v2215 = vpop.permute.xlu0 %2214
  %2216 = vrot.lane.b32.xlu0 %v2201, 64
  %v2217 = vpop.permute.xlu0 %2216
  %v2222 = vmul.f32 %v2198, %v2211
  %v2223 = vmul.f32 %v2199, %v2213
  %v2224 = vmul.f32 %v2200, %v2215
  %v2225 = vmul.f32 %v2201, %v2217
  %2230 = vrot.lane.b32.xlu0 %v2222, 32
  %v2231 = vpop.permute.xlu0 %2230
  %2232 = vrot.lane.b32.xlu0 %v2223, 32
  %v2233 = vpop.permute.xlu0 %2232
  %2234 = vrot.lane.b32.xlu0 %v2224, 32
  %v2235 = vpop.permute.xlu0 %2234
  %2236 = vrot.lane.b32.xlu0 %v2225, 32
  %v2237 = vpop.permute.xlu0 %2236
  %v2242 = vadd.f32 %v2202, %v2231
  %v2243 = vadd.f32 %v2203, %v2233
  %v2244 = vadd.f32 %v2204, %v2235
  %v2245 = vadd.f32 %v2205, %v2237
  %v2246 = vtanh.pop %v2242
  %v2247 = vtanh.pop %v2243
  %v2248 = vtanh.pop %v2244
  %v2249 = vtanh.pop %v2245
  %2254 = vrot.lane.b32.xlu0 %v2246, 64
  %v2255 = vpop.permute.xlu0 %2254
  %2256 = vrot.lane.b32.xlu0 %v2247, 64
  %v2257 = vpop.permute.xlu0 %2256
  %2258 = vrot.lane.b32.xlu0 %v2248, 64
  %v2259 = vpop.permute.xlu0 %2258
  %2260 = vrot.lane.b32.xlu0 %v2249, 64
  %v2261 = vpop.permute.xlu0 %2260
  %v2266 = vmul.f32 %v2198, %v2255
  %v2267 = vmul.f32 %v2199, %v2257
  %v2268 = vmul.f32 %v2200, %v2259
  %v2269 = vmul.f32 %v2201, %v2261
  %2274 = vrot.lane.b32.xlu0 %v2266, 32
  %v2275 = vpop.permute.xlu0 %2274
  %2276 = vrot.lane.b32.xlu0 %v2267, 32
  %v2277 = vpop.permute.xlu0 %2276
  %2278 = vrot.lane.b32.xlu0 %v2268, 32
  %v2279 = vpop.permute.xlu0 %2278
  %2280 = vrot.lane.b32.xlu0 %v2269, 32
  %v2281 = vpop.permute.xlu0 %2280
  %v2286 = vsel %vm1011, %v2275, 0.0
  %2287 = vadd.xlane.f32.xlu0 %v2286
  %v2288 = vpop.xlane.xlu0 %2287
  %v2289 = vsel %vm1011, %v2277, 0.0
  %2290 = vadd.xlane.f32.xlu0 %v2289
  %v2291 = vpop.xlane.xlu0 %2290
  %v2292 = vsel %vm1011, %v2279, 0.0
  %2293 = vadd.xlane.f32.xlu0 %v2292
  %v2294 = vpop.xlane.xlu0 %2293
  %v2295 = vsel %vm1011, %v2281, 0.0
  %2296 = vadd.xlane.f32.xlu0 %v2295
  %v2297 = vpop.xlane.xlu0 %2296
  %v2298 = vadd.f32 %v2288, %v2291
  %v2299 = vadd.f32 %v2298, %v2294
  %v2300 = vadd.f32 %v2299, %v2297
  %v2301 = vrot.slane %v2300, 4
  %v2302 = vadd.f32 %v2300, %v2301
  %v2303 = vrot.slane %v2302, 2
  %v2304 = vadd.f32 %v2302, %v2303
  %v2305 = vrot.slane %v2304, 1
  %v2306 = vadd.f32 %v2304, %v2305
  %v2307 = vmul.f32 %v2266, %v2266
  %v2308 = vmul.f32 %v2267, %v2267
  %v2309 = vmul.f32 %v2268, %v2268
  %v2310 = vmul.f32 %v2269, %v2269
  %2315 = vrot.lane.b32.xlu0 %v2307, 32
  %v2316 = vpop.permute.xlu0 %2315
  %2317 = vrot.lane.b32.xlu0 %v2308, 32
  %v2318 = vpop.permute.xlu0 %2317
  %2319 = vrot.lane.b32.xlu0 %v2309, 32
  %v2320 = vpop.permute.xlu0 %2319
  %2321 = vrot.lane.b32.xlu0 %v2310, 32
  %v2322 = vpop.permute.xlu0 %2321
  %v2327 = vsel %vm1011, %v2316, 0.0
  %2328 = vadd.xlane.f32.xlu0 %v2327
  %v2329 = vpop.xlane.xlu0 %2328
  %v2330 = vsel %vm1011, %v2318, 0.0
  %2331 = vadd.xlane.f32.xlu0 %v2330
  %v2332 = vpop.xlane.xlu0 %2331
  %v2333 = vsel %vm1011, %v2320, 0.0
  %2334 = vadd.xlane.f32.xlu0 %v2333
  %v2335 = vpop.xlane.xlu0 %2334
  %v2336 = vsel %vm1011, %v2322, 0.0
  %2337 = vadd.xlane.f32.xlu0 %v2336
  %v2338 = vpop.xlane.xlu0 %2337
  %v2339 = vadd.f32 %v2329, %v2332
  %v2340 = vadd.f32 %v2339, %v2335
  %v2341 = vadd.f32 %v2340, %v2338
  %v2342 = vrot.slane %v2341, 4
  %v2343 = vadd.f32 %v2341, %v2342
  %v2344 = vrot.slane %v2343, 2
  %v2345 = vadd.f32 %v2343, %v2344
  %v2346 = vrot.slane %v2345, 1
  %v2347 = vadd.f32 %v2345, %v2346
  %v2348 = vmul.f32 %v2306, 0.0009765625
  %v2349 = vmul.f32 %v2347, 0.0009765625
  %v2350 = vmul.f32 %v2348, %v2348
  %v2351 = vsub.f32 %v2349, %v2350
  %v2352 = vadd.f32 %v2351, 1e-05
  %v2353 = vrsqrt.pop %v2352
  %v2354 = vsub.f32 %v2269, %v2348
  %v2355 = vmul.f32 %v2354, %v2353
  %v2356 = vmul.f32 %v2355, %v1088
  %v2357 = vadd.f32 %v2356, %v1097
  %2359 = vrot.lane.b32.xlu0 %v2357, 32
  %v2360 = vpop.permute.xlu0 %2359
  %s2362 = scalar_lea.vmem [#allocation3], 5
  %2363 = vst.msk [vmem:[%s2362 - $0x7] sm:$0x80] %vm1104, %v2360
  %v2364 = vpack.c.bf16 %v2267, %v2266
  %v2365 = vpack.c.bf16 %v2269, %v2268
  %s2366 = scalar_lea.vmem [#allocation2], 192
  %v2367 = vld [vmem:[%s2366] sm:$0xff]
  %v2368 = vld [vmem:[%s2366 + $0x8] sm:$0xff]
  %v2369 = vld [vmem:[%s2366 + $0x10] sm:$0xff]
  %v2370 = vld [vmem:[%s2366 + $0x18] sm:$0xff]
  %2373 = vrot.lane.b32.xlu0 %v2364, 32
  %v2374 = vpop.permute.xlu0 %2373
  %2375 = vrot.lane.b32.xlu0 %v2365, 32
  %v2376 = vpop.permute.xlu0 %2375
  %v2378 = vsel %vm1011, %v2374, 0
  %v2381 = vsel %vm1011, %v2376, 0
  %2383 = vmatprep.subr.bf16.mxu0 0
  %2384 = vmatpush1.bf16.msra.mxu0 %v1127
  %2385 = vmatprep.subr.bf16.mxu0 0
  %2386 = vmatpush1.bf16.msra.mxu0 %v1128
  %2387 = vmatprep.subr.bf16.mxu0 0
  %2388 = vmatpush1.bf16.msra.mxu0 0
  %2389 = vmatprep.subr.bf16.mxu0 0
  %2390 = vmatpush1.bf16.msra.mxu0 0
  %2391 = vmatprep.subr.bf16.mxu0 0
  %2392 = vmatpush1.bf16.msra.mxu0 0
  %2393 = vmatprep.subr.bf16.mxu0 0
  %2394 = vmatpush1.bf16.msra.mxu0 0
  %2395 = vmatprep.subr.bf16.mxu0 0
  %2396 = vmatpush1.bf16.msra.mxu0 0
  %2397 = vmatprep.subr.bf16.mxu0 0
  %2398 = vmatpush1.bf16.msra.mxu0 0
  %2399 = vmatprep.subr.bf16.mxu0 0
  %2400 = vmatpush1.bf16.msra.mxu0 0
  %2401 = vmatprep.subr.bf16.mxu0 0
  %2402 = vmatpush1.bf16.msra.mxu0 0
  %2403 = vmatprep.subr.bf16.mxu0 0
  %2404 = vmatpush1.bf16.msra.mxu0 0
  %2405 = vmatprep.subr.bf16.mxu0 0
  %2406 = vmatpush1.bf16.msra.mxu0 0
  %2407 = vmatprep.subr.bf16.mxu0 0
  %2408 = vmatpush1.bf16.msra.mxu0 0
  %2409 = vmatprep.subr.bf16.mxu0 0
  %2410 = vmatpush1.bf16.msra.mxu0 0
  %2411 = vmatprep.subr.bf16.mxu0 0
  %2412 = vmatpush1.bf16.msra.mxu0 0
  %2413 = vmatprep.subr.bf16.mxu0 0
  %2414 = vmatpush1.bf16.msra.mxu0 0
  %2415 = vmatprep.mubr.bf16.mxu0 0
  %2416 = vmatmul.mubr.bf16.gmra.mrb[0].mxu0 %v2378
  %v2417 = vpop.f32.mrb[0].mxu0
  %v2418 = vadd.f32 %v2367, %v2417
  %v2419 = vpop.f32.mrb[0].mxu0
  %v2420 = vpop.f32.mrb[0].mxu0
  %v2421 = vadd.f32 %v2368, %v2420
  %v2422 = vpop.f32.mrb[0].mxu0
  %2423 = vmatprep.mubr.bf16.mxu0 0
  %2424 = vmatmul.mubr.bf16.gmra.mrb[0].mxu0 %v2381
  %v2425 = vpop.f32.mrb[0].mxu0
  %v2426 = vadd.f32 %v2369, %v2425
  %v2427 = vpop.f32.mrb[0].mxu0
  %v2428 = vpop.f32.mrb[0].mxu0
  %v2429 = vadd.f32 %v2370, %v2428
  %v2430 = vpop.f32.mrb[0].mxu0
  %2431 = vdwg.mxu0
  %v2432 = vmul.f32 %v2418, %v35
  %v2433 = vmul.f32 %v2421, %v35
  %v2434 = vmul.f32 %v2426, %v35
  %v2435 = vmul.f32 %v2429, %v35
  %v2436 = vtanh.pop %v2432
  %v2437 = vtanh.pop %v2433
  %v2438 = vtanh.pop %v2434
  %v2439 = vtanh.pop %v2435
  %v2440 = vmul.f32 %v2436, %v35
  %v2441 = vmul.f32 %v2437, %v35
  %v2442 = vmul.f32 %v2438, %v35
  %v2443 = vmul.f32 %v2439, %v35
  %v2444 = vadd.f32 %v2440, %v36
  %v2445 = vadd.f32 %v2441, %v36
  %v2446 = vadd.f32 %v2442, %v36
  %v2447 = vadd.f32 %v2443, %v36
  %v2448 = vmul.f32 %v2444, %v2242
  %v2449 = vmul.f32 %v2445, %v2243
  %v2450 = vmul.f32 %v2446, %v2244
  %v2451 = vmul.f32 %v2447, %v2245
  %2456 = vrot.lane.b32.xlu0 %v2444, 64
  %v2457 = vpop.permute.xlu0 %2456
  %2458 = vrot.lane.b32.xlu0 %v2445, 64
  %v2459 = vpop.permute.xlu0 %2458
  %2460 = vrot.lane.b32.xlu0 %v2446, 64
  %v2461 = vpop.permute.xlu0 %2460
  %2462 = vrot.lane.b32.xlu0 %v2447, 64
  %v2463 = vpop.permute.xlu0 %2462
  %v2468 = vmul.f32 %v2444, %v2457
  %v2469 = vmul.f32 %v2445, %v2459
  %v2470 = vmul.f32 %v2446, %v2461
  %v2471 = vmul.f32 %v2447, %v2463
  %2476 = vrot.lane.b32.xlu0 %v2468, 32
  %v2477 = vpop.permute.xlu0 %2476
  %2478 = vrot.lane.b32.xlu0 %v2469, 32
  %v2479 = vpop.permute.xlu0 %2478
  %2480 = vrot.lane.b32.xlu0 %v2470, 32
  %v2481 = vpop.permute.xlu0 %2480
  %2482 = vrot.lane.b32.xlu0 %v2471, 32
  %v2483 = vpop.permute.xlu0 %2482
  %v2488 = vadd.f32 %v2448, %v2477
  %v2489 = vadd.f32 %v2449, %v2479
  %v2490 = vadd.f32 %v2450, %v2481
  %v2491 = vadd.f32 %v2451, %v2483
  %v2492 = vtanh.pop %v2488
  %v2493 = vtanh.pop %v2489
  %v2494 = vtanh.pop %v2490
  %v2495 = vtanh.pop %v2491
  %2500 = vrot.lane.b32.xlu0 %v2492, 64
  %v2501 = vpop.permute.xlu0 %2500
  %2502 = vrot.lane.b32.xlu0 %v2493, 64
  %v2503 = vpop.permute.xlu0 %2502
  %2504 = vrot.lane.b32.xlu0 %v2494, 64
  %v2505 = vpop.permute.xlu0 %2504
  %2506 = vrot.lane.b32.xlu0 %v2495, 64
  %v2507 = vpop.permute.xlu0 %2506
  %v2512 = vmul.f32 %v2444, %v2501
  %v2513 = vmul.f32 %v2445, %v2503
  %v2514 = vmul.f32 %v2446, %v2505
  %v2515 = vmul.f32 %v2447, %v2507
  %2520 = vrot.lane.b32.xlu0 %v2512, 32
  %v2521 = vpop.permute.xlu0 %2520
  %2522 = vrot.lane.b32.xlu0 %v2513, 32
  %v2523 = vpop.permute.xlu0 %2522
  %2524 = vrot.lane.b32.xlu0 %v2514, 32
  %v2525 = vpop.permute.xlu0 %2524
  %2526 = vrot.lane.b32.xlu0 %v2515, 32
  %v2527 = vpop.permute.xlu0 %2526
  %v2532 = vsel %vm1011, %v2521, 0.0
  %2533 = vadd.xlane.f32.xlu0 %v2532
  %v2534 = vpop.xlane.xlu0 %2533
  %v2535 = vsel %vm1011, %v2523, 0.0
  %2536 = vadd.xlane.f32.xlu0 %v2535
  %v2537 = vpop.xlane.xlu0 %2536
  %v2538 = vsel %vm1011, %v2525, 0.0
  %2539 = vadd.xlane.f32.xlu0 %v2538
  %v2540 = vpop.xlane.xlu0 %2539
  %v2541 = vsel %vm1011, %v2527, 0.0
  %2542 = vadd.xlane.f32.xlu0 %v2541
  %v2543 = vpop.xlane.xlu0 %2542
  %v2544 = vadd.f32 %v2534, %v2537
  %v2545 = vadd.f32 %v2544, %v2540
  %v2546 = vadd.f32 %v2545, %v2543
  %v2547 = vrot.slane %v2546, 4
  %v2548 = vadd.f32 %v2546, %v2547
  %v2549 = vrot.slane %v2548, 2
  %v2550 = vadd.f32 %v2548, %v2549
  %v2551 = vrot.slane %v2550, 1
  %v2552 = vadd.f32 %v2550, %v2551
  %v2553 = vmul.f32 %v2512, %v2512
  %v2554 = vmul.f32 %v2513, %v2513
  %v2555 = vmul.f32 %v2514, %v2514
  %v2556 = vmul.f32 %v2515, %v2515
  %2561 = vrot.lane.b32.xlu0 %v2553, 32
  %v2562 = vpop.permute.xlu0 %2561
  %2563 = vrot.lane.b32.xlu0 %v2554, 32
  %v2564 = vpop.permute.xlu0 %2563
  %2565 = vrot.lane.b32.xlu0 %v2555, 32
  %v2566 = vpop.permute.xlu0 %2565
  %2567 = vrot.lane.b32.xlu0 %v2556, 32
  %v2568 = vpop.permute.xlu0 %2567
  %v2573 = vsel %vm1011, %v2562, 0.0
  %2574 = vadd.xlane.f32.xlu0 %v2573
  %v2575 = vpop.xlane.xlu0 %2574
  %v2576 = vsel %vm1011, %v2564, 0.0
  %2577 = vadd.xlane.f32.xlu0 %v2576
  %v2578 = vpop.xlane.xlu0 %2577
  %v2579 = vsel %vm1011, %v2566, 0.0
  %2580 = vadd.xlane.f32.xlu0 %v2579
  %v2581 = vpop.xlane.xlu0 %2580
  %v2582 = vsel %vm1011, %v2568, 0.0
  %2583 = vadd.xlane.f32.xlu0 %v2582
  %v2584 = vpop.xlane.xlu0 %2583
  %v2585 = vadd.f32 %v2575, %v2578
  %v2586 = vadd.f32 %v2585, %v2581
  %v2587 = vadd.f32 %v2586, %v2584
  %v2588 = vrot.slane %v2587, 4
  %v2589 = vadd.f32 %v2587, %v2588
  %v2590 = vrot.slane %v2589, 2
  %v2591 = vadd.f32 %v2589, %v2590
  %v2592 = vrot.slane %v2591, 1
  %v2593 = vadd.f32 %v2591, %v2592
  %v2594 = vmul.f32 %v2552, 0.0009765625
  %v2595 = vmul.f32 %v2593, 0.0009765625
  %v2596 = vmul.f32 %v2594, %v2594
  %v2597 = vsub.f32 %v2595, %v2596
  %v2598 = vadd.f32 %v2597, 1e-05
  %v2599 = vrsqrt.pop %v2598
  %v2600 = vsub.f32 %v2515, %v2594
  %v2601 = vmul.f32 %v2600, %v2599
  %v2602 = vmul.f32 %v2601, %v1088
  %v2603 = vadd.f32 %v2602, %v1097
  %2605 = vrot.lane.b32.xlu0 %v2603, 32
  %v2606 = vpop.permute.xlu0 %2605
  %s2608 = scalar_lea.vmem [#allocation3], 6
  %2609 = vst.msk [vmem:[%s2608 - $0x7] sm:$0x80] %vm1104, %v2606
  %v2610 = vpack.c.bf16 %v2513, %v2512
  %v2611 = vpack.c.bf16 %v2515, %v2514
  %s2612 = scalar_lea.vmem [#allocation2], 224
  %v2613 = vld [vmem:[%s2612] sm:$0xff]
  %v2614 = vld [vmem:[%s2612 + $0x8] sm:$0xff]
  %v2615 = vld [vmem:[%s2612 + $0x10] sm:$0xff]
  %v2616 = vld [vmem:[%s2612 + $0x18] sm:$0xff]
  %2619 = vrot.lane.b32.xlu0 %v2610, 32
  %v2620 = vpop.permute.xlu0 %2619
  %2621 = vrot.lane.b32.xlu0 %v2611, 32
  %v2622 = vpop.permute.xlu0 %2621
  %v2624 = vsel %vm1011, %v2620, 0
  %v2627 = vsel %vm1011, %v2622, 0
  %2629 = vmatprep.subr.bf16.mxu0 0
  %2630 = vmatpush1.bf16.msra.mxu0 %v1127
  %2631 = vmatprep.subr.bf16.mxu0 0
  %2632 = vmatpush1.bf16.msra.mxu0 %v1128
  %2633 = vmatprep.subr.bf16.mxu0 0
  %2634 = vmatpush1.bf16.msra.mxu0 0
  %2635 = vmatprep.subr.bf16.mxu0 0
  %2636 = vmatpush1.bf16.msra.mxu0 0
  %2637 = vmatprep.subr.bf16.mxu0 0
  %2638 = vmatpush1.bf16.msra.mxu0 0
  %2639 = vmatprep.subr.bf16.mxu0 0
  %2640 = vmatpush1.bf16.msra.mxu0 0
  %2641 = vmatprep.subr.bf16.mxu0 0
  %2642 = vmatpush1.bf16.msra.mxu0 0
  %2643 = vmatprep.subr.bf16.mxu0 0
  %2644 = vmatpush1.bf16.msra.mxu0 0
  %2645 = vmatprep.subr.bf16.mxu0 0
  %2646 = vmatpush1.bf16.msra.mxu0 0
  %2647 = vmatprep.subr.bf16.mxu0 0
  %2648 = vmatpush1.bf16.msra.mxu0 0
  %2649 = vmatprep.subr.bf16.mxu0 0
  %2650 = vmatpush1.bf16.msra.mxu0 0
  %2651 = vmatprep.subr.bf16.mxu0 0
  %2652 = vmatpush1.bf16.msra.mxu0 0
  %2653 = vmatprep.subr.bf16.mxu0 0
  %2654 = vmatpush1.bf16.msra.mxu0 0
  %2655 = vmatprep.subr.bf16.mxu0 0
  %2656 = vmatpush1.bf16.msra.mxu0 0
  %2657 = vmatprep.subr.bf16.mxu0 0
  %2658 = vmatpush1.bf16.msra.mxu0 0
  %2659 = vmatprep.subr.bf16.mxu0 0
  %2660 = vmatpush1.bf16.msra.mxu0 0
  %2661 = vmatprep.mubr.bf16.mxu0 0
  %2662 = vmatmul.mubr.bf16.gmra.mrb[0].mxu0 %v2624
  %v2663 = vpop.f32.mrb[0].mxu0
  %v2664 = vadd.f32 %v2613, %v2663
  %v2665 = vpop.f32.mrb[0].mxu0
  %v2666 = vpop.f32.mrb[0].mxu0
  %v2667 = vadd.f32 %v2614, %v2666
  %v2668 = vpop.f32.mrb[0].mxu0
  %2669 = vmatprep.mubr.bf16.mxu0 0
  %2670 = vmatmul.mubr.bf16.gmra.mrb[0].mxu0 %v2627
  %v2671 = vpop.f32.mrb[0].mxu0
  %v2672 = vadd.f32 %v2615, %v2671
  %v2673 = vpop.f32.mrb[0].mxu0
  %v2674 = vpop.f32.mrb[0].mxu0
  %v2675 = vadd.f32 %v2616, %v2674
  %v2676 = vpop.f32.mrb[0].mxu0
  %2677 = vdwg.mxu0
  %v2678 = vmul.f32 %v2664, %v35
  %v2679 = vmul.f32 %v2667, %v35
  %v2680 = vmul.f32 %v2672, %v35
  %v2681 = vmul.f32 %v2675, %v35
  %v2682 = vtanh.pop %v2678
  %v2683 = vtanh.pop %v2679
  %v2684 = vtanh.pop %v2680
  %v2685 = vtanh.pop %v2681
  %v2686 = vmul.f32 %v2682, %v35
  %v2687 = vmul.f32 %v2683, %v35
  %v2688 = vmul.f32 %v2684, %v35
  %v2689 = vmul.f32 %v2685, %v35
  %v2690 = vadd.f32 %v2686, %v36
  %v2691 = vadd.f32 %v2687, %v36
  %v2692 = vadd.f32 %v2688, %v36
  %v2693 = vadd.f32 %v2689, %v36
  %v2694 = vmul.f32 %v2690, %v2488
  %v2695 = vmul.f32 %v2691, %v2489
  %v2696 = vmul.f32 %v2692, %v2490
  %v2697 = vmul.f32 %v2693, %v2491
  %2702 = vrot.lane.b32.xlu0 %v2690, 64
  %v2703 = vpop.permute.xlu0 %2702
  %2704 = vrot.lane.b32.xlu0 %v2691, 64
  %v2705 = vpop.permute.xlu0 %2704
  %2706 = vrot.lane.b32.xlu0 %v2692, 64
  %v2707 = vpop.permute.xlu0 %2706
  %2708 = vrot.lane.b32.xlu0 %v2693, 64
  %v2709 = vpop.permute.xlu0 %2708
  %v2714 = vmul.f32 %v2690, %v2703
  %v2715 = vmul.f32 %v2691, %v2705
  %v2716 = vmul.f32 %v2692, %v2707
  %v2717 = vmul.f32 %v2693, %v2709
  %2722 = vrot.lane.b32.xlu0 %v2714, 32
  %v2723 = vpop.permute.xlu0 %2722
  %2724 = vrot.lane.b32.xlu0 %v2715, 32
  %v2725 = vpop.permute.xlu0 %2724
  %2726 = vrot.lane.b32.xlu0 %v2716, 32
  %v2727 = vpop.permute.xlu0 %2726
  %2728 = vrot.lane.b32.xlu0 %v2717, 32
  %v2729 = vpop.permute.xlu0 %2728
  %v2734 = vadd.f32 %v2694, %v2723
  %v2735 = vadd.f32 %v2695, %v2725
  %v2736 = vadd.f32 %v2696, %v2727
  %v2737 = vadd.f32 %v2697, %v2729
  %v2738 = vtanh.pop %v2734
  %v2739 = vtanh.pop %v2735
  %v2740 = vtanh.pop %v2736
  %v2741 = vtanh.pop %v2737
  %2746 = vrot.lane.b32.xlu0 %v2738, 64
  %v2747 = vpop.permute.xlu0 %2746
  %2748 = vrot.lane.b32.xlu0 %v2739, 64
  %v2749 = vpop.permute.xlu0 %2748
  %2750 = vrot.lane.b32.xlu0 %v2740, 64
  %v2751 = vpop.permute.xlu0 %2750
  %2752 = vrot.lane.b32.xlu0 %v2741, 64
  %v2753 = vpop.permute.xlu0 %2752
  %v2758 = vmul.f32 %v2690, %v2747
  %v2759 = vmul.f32 %v2691, %v2749
  %v2760 = vmul.f32 %v2692, %v2751
  %v2761 = vmul.f32 %v2693, %v2753
  %2766 = vrot.lane.b32.xlu0 %v2758, 32
  %v2767 = vpop.permute.xlu0 %2766
  %2768 = vrot.lane.b32.xlu0 %v2759, 32
  %v2769 = vpop.permute.xlu0 %2768
  %2770 = vrot.lane.b32.xlu0 %v2760, 32
  %v2771 = vpop.permute.xlu0 %2770
  %2772 = vrot.lane.b32.xlu0 %v2761, 32
  %v2773 = vpop.permute.xlu0 %2772
  %v2778 = vsel %vm1011, %v2767, 0.0
  %2779 = vadd.xlane.f32.xlu0 %v2778
  %v2780 = vpop.xlane.xlu0 %2779
  %v2781 = vsel %vm1011, %v2769, 0.0
  %2782 = vadd.xlane.f32.xlu0 %v2781
  %v2783 = vpop.xlane.xlu0 %2782
  %v2784 = vsel %vm1011, %v2771, 0.0
  %2785 = vadd.xlane.f32.xlu0 %v2784
  %v2786 = vpop.xlane.xlu0 %2785
  %v2787 = vsel %vm1011, %v2773, 0.0
  %2788 = vadd.xlane.f32.xlu0 %v2787
  %v2789 = vpop.xlane.xlu0 %2788
  %v2790 = vadd.f32 %v2780, %v2783
  %v2791 = vadd.f32 %v2790, %v2786
  %v2792 = vadd.f32 %v2791, %v2789
  %v2793 = vrot.slane %v2792, 4
  %v2794 = vadd.f32 %v2792, %v2793
  %v2795 = vrot.slane %v2794, 2
  %v2796 = vadd.f32 %v2794, %v2795
  %v2797 = vrot.slane %v2796, 1
  %v2798 = vadd.f32 %v2796, %v2797
  %v2799 = vmul.f32 %v2758, %v2758
  %v2800 = vmul.f32 %v2759, %v2759
  %v2801 = vmul.f32 %v2760, %v2760
  %v2802 = vmul.f32 %v2761, %v2761
  %2807 = vrot.lane.b32.xlu0 %v2799, 32
  %v2808 = vpop.permute.xlu0 %2807
  %2809 = vrot.lane.b32.xlu0 %v2800, 32
  %v2810 = vpop.permute.xlu0 %2809
  %2811 = vrot.lane.b32.xlu0 %v2801, 32
  %v2812 = vpop.permute.xlu0 %2811
  %2813 = vrot.lane.b32.xlu0 %v2802, 32
  %v2814 = vpop.permute.xlu0 %2813
  %v2819 = vsel %vm1011, %v2808, 0.0
  %2820 = vadd.xlane.f32.xlu0 %v2819
  %v2821 = vpop.xlane.xlu0 %2820
  %v2822 = vsel %vm1011, %v2810, 0.0
  %2823 = vadd.xlane.f32.xlu0 %v2822
  %v2824 = vpop.xlane.xlu0 %2823
  %v2825 = vsel %vm1011, %v2812, 0.0
  %2826 = vadd.xlane.f32.xlu0 %v2825
  %v2827 = vpop.xlane.xlu0 %2826
  %v2828 = vsel %vm1011, %v2814, 0.0
  %2829 = vadd.xlane.f32.xlu0 %v2828
  %v2830 = vpop.xlane.xlu0 %2829
  %v2831 = vadd.f32 %v2821, %v2824
  %v2832 = vadd.f32 %v2831, %v2827
  %v2833 = vadd.f32 %v2832, %v2830
  %v2834 = vrot.slane %v2833, 4
  %v2835 = vadd.f32 %v2833, %v2834
  %v2836 = vrot.slane %v2835, 2
  %v2837 = vadd.f32 %v2835, %v2836
  %v2838 = vrot.slane %v2837, 1
  %v2839 = vadd.f32 %v2837, %v2838
  %v2840 = vmul.f32 %v2798, 0.0009765625
  %v2841 = vmul.f32 %v2839, 0.0009765625
  %v2842 = vmul.f32 %v2840, %v2840
  %v2843 = vsub.f32 %v2841, %v2842
  %v2844 = vadd.f32 %v2843, 1e-05
  %v2845 = vrsqrt.pop %v2844
  %v2846 = vsub.f32 %v2761, %v2840
  %v2847 = vmul.f32 %v2846, %v2845
  %v2848 = vmul.f32 %v2847, %v1088
  %v2849 = vadd.f32 %v2848, %v1097
  %2851 = vrot.lane.b32.xlu0 %v2849, 32
  %v2852 = vpop.permute.xlu0 %2851
  %s2854 = scalar_lea.vmem [#allocation3], 7
  %2855 = vst.msk [vmem:[%s2854 - $0x7] sm:$0x80] %vm1104, %v2852
  %v2856 = vld [vmem:[#allocation3] sm:$0x1]
  %v2857 = vld [vmem:[#allocation3 + $0x1] sm:$0x1]
  %v2858 = vld [vmem:[#allocation3 + $0x2] sm:$0x1]
  %v2859 = vld [vmem:[#allocation3 + $0x3] sm:$0x1]
  %v2860 = vld [vmem:[#allocation3 + $0x4] sm:$0x1]
  %v2861 = vld [vmem:[#allocation3 + $0x5] sm:$0x1]
  %v2862 = vld [vmem:[#allocation3 + $0x6] sm:$0x1]
  %v2863 = vld [vmem:[#allocation3 + $0x7] sm:$0x1]
  %v2864 = vld [vmem:[%s6] sm:$0xff]
  %v2865 = vld [vmem:[%s6 + $0x8] sm:$0xff]
  %v2866 = vld [vmem:[%s6 + $0x10] sm:$0xff]
  %v2867 = vld [vmem:[%s6 + $0x18] sm:$0xff]
  %v2868 = vld [vmem:[%s7] sm:$0x1]
  %v2870 = vlaneseq
  %v2871 = vshrl.u32 %v2870, 7
  %v2872 = vsub.s32 0, %v2871
  %v2873 = vrot.slane %v2868, %v2872
  %v2883 = vcombine.low %v2856, %v2857
  %v2884 = vcombine.low %v2858, %v2859
  %v2885 = vcombine.low %v2860, %v2861
  %v2886 = vcombine.low %v2862, %v2863
  %v2888 = vunpack.c.l.s4 1966171168
  %v2889 = vunpack.c.0.s8 %v2888
  %v2890 = vlaneseq
  %v2891 = vshrl.u32 %v2890, 7
  %v2892 = vsub.s32 %v2889, %v2891
  %v2893 = vrot.slane %v2883, %v2892
  %v2895 = vunpack.c.l.s4 1966171168
  %v2896 = vunpack.c.0.s8 %v2895
  %v2897 = vlaneseq
  %v2898 = vshrl.u32 %v2897, 7
  %v2899 = vsub.s32 %v2896, %v2898
  %v2900 = vrot.slane %v2884, %v2899
  %v2902 = vunpack.c.l.s4 1966171168
  %v2903 = vunpack.c.0.s8 %v2902
  %v2904 = vlaneseq
  %v2905 = vshrl.u32 %v2904, 7
  %v2906 = vsub.s32 %v2903, %v2905
  %v2907 = vrot.slane %v2885, %v2906
  %v2909 = vunpack.c.l.s4 1966171168
  %v2910 = vunpack.c.0.s8 %v2909
  %v2911 = vlaneseq
  %v2912 = vshrl.u32 %v2911, 7
  %v2913 = vsub.s32 %v2910, %v2912
  %v2914 = vrot.slane %v2886, %v2913
  %v2915 = vcombine.low %v2893, %v2900
  %v2916 = vcombine.low %v2907, %v2914
  %v2918 = vunpack.c.l.s4 1966171168
  %v2919 = vunpack.c.0.s8 %v2918
  %v2920 = vlaneseq
  %v2921 = vshrl.u32 %v2920, 7
  %v2922 = vsub.s32 %v2919, %v2921
  %v2923 = vrot.slane %v2915, %v2922
  %v2925 = vunpack.c.l.s4 1966171168
  %v2926 = vunpack.c.0.s8 %v2925
  %v2927 = vlaneseq
  %v2928 = vshrl.u32 %v2927, 7
  %v2929 = vsub.s32 %v2926, %v2928
  %v2930 = vrot.slane %v2916, %v2929
  %v2931 = vcombine.low %v2923, %v2930
  %v2932 = vsel %vm1011, %v2931, 0
  %2934 = vmatprep.subr.mxu0 0.0
  %2935 = vmatpush1.msra.mxu0 %v2864
  %2936 = vmatprep.subr.mxu0 0.0
  %2937 = vmatpush1.msra.mxu0 %v2865
  %2938 = vmatprep.subr.mxu0 0.0
  %2939 = vmatpush1.msra.mxu0 %v2866
  %2940 = vmatprep.subr.mxu0 0.0
  %2941 = vmatpush1.msra.mxu0 %v2867
  %2942 = vmatprep.subr.mxu0 0.0
  %2943 = vmatpush1.msra.mxu0 0.0
  %2944 = vmatprep.subr.mxu0 0.0
  %2945 = vmatpush1.msra.mxu0 0.0
  %2946 = vmatprep.subr.mxu0 0.0
  %2947 = vmatpush1.msra.mxu0 0.0
  %2948 = vmatprep.subr.mxu0 0.0
  %2949 = vmatpush1.msra.mxu0 0.0
  %2950 = vmatprep.subr.mxu0 0.0
  %2951 = vmatpush1.msra.mxu0 0.0
  %2952 = vmatprep.subr.mxu0 0.0
  %2953 = vmatpush1.msra.mxu0 0.0
  %2954 = vmatprep.subr.mxu0 0.0
  %2955 = vmatpush1.msra.mxu0 0.0
  %2956 = vmatprep.subr.mxu0 0.0
  %2957 = vmatpush1.msra.mxu0 0.0
  %2958 = vmatprep.subr.mxu0 0.0
  %2959 = vmatpush1.msra.mxu0 0.0
  %2960 = vmatprep.subr.mxu0 0.0
  %2961 = vmatpush1.msra.mxu0 0.0
  %2962 = vmatprep.subr.mxu0 0.0
  %2963 = vmatpush1.msra.mxu0 0.0
  %2964 = vmatprep.subr.mxu0 0.0
  %2965 = vmatpush1.msra.mxu0 0.0
  %2966 = vmatprep.subr.mxu0 0.0
  %2967 = vmatpush1.msra.mxu0 0.0
  %2968 = vmatprep.subr.mxu0 0.0
  %2969 = vmatpush1.msra.mxu0 0.0
  %2970 = vmatprep.subr.mxu0 0.0
  %2971 = vmatpush1.msra.mxu0 0.0
  %2972 = vmatprep.subr.mxu0 0.0
  %2973 = vmatpush1.msra.mxu0 0.0
  %2974 = vmatprep.subr.mxu0 0.0
  %2975 = vmatpush1.msra.mxu0 0.0
  %2976 = vmatprep.subr.mxu0 0.0
  %2977 = vmatpush1.msra.mxu0 0.0
  %2978 = vmatprep.subr.mxu0 0.0
  %2979 = vmatpush1.msra.mxu0 0.0
  %2980 = vmatprep.subr.mxu0 0.0
  %2981 = vmatpush1.msra.mxu0 0.0
  %2982 = vmatprep.subr.mxu0 0.0
  %2983 = vmatpush1.msra.mxu0 0.0
  %2984 = vmatprep.subr.mxu0 0.0
  %2985 = vmatpush1.msra.mxu0 0.0
  %2986 = vmatprep.subr.mxu0 0.0
  %2987 = vmatpush1.msra.mxu0 0.0
  %2988 = vmatprep.subr.mxu0 0.0
  %2989 = vmatpush1.msra.mxu0 0.0
  %2990 = vmatprep.subr.mxu0 0.0
  %2991 = vmatpush1.msra.mxu0 0.0
  %2992 = vmatprep.subr.mxu0 0.0
  %2993 = vmatpush1.msra.mxu0 0.0
  %2994 = vmatprep.subr.mxu0 0.0
  %2995 = vmatpush1.msra.mxu0 0.0
  %2996 = vmatprep.subr.mxu0 0.0
  %2997 = vmatpush1.msra.mxu0 0.0
  %2998 = vmatprep.mubr.f32.mxu0 0.0
  %2999 = vmatmul.mubr.f32.gmra.mrb[0].mxu0 %v2932
  %v3000 = vpop.f32.mrb[0].mxu0
  %v3001 = vadd.f32 %v2873, %v3000
  %v3002 = vpop.f32.mrb[0].mxu0
  %3003 = vdwg.mxu0
  %vm3004 = vcmask 15360
  %v3005 = vsel %vm3004, %v3001, -inf
  %3006 = vmax.xlane.f32.xlu0 %v3005
  %v3007 = vpop.xlane.xlu0 %3006
  %v3008 = vsub.f32 %v3001, %v3007
  %v3009 = vmul.f32 %v3008, 1.442695
  %v3010 = vpow.pop %v3009
  %v3011 = vsel %vm3004, %v3010, 0.0
  %3012 = vadd.xlane.f32.xlu0 %v3011
  %v3013 = vpop.xlane.xlu0 %3012
  %v3014 = vrcp.pop %v3013
  %v3015 = vmul.f32 %v3010, %v3014
  %3016 = vst.msk [vmem:[%s8] sm:$0xff] %vm3004, %v3015
  // Predicated region
  $region34: #{tpu_custom_call.1} parent=0 // pred_check
    _
  $region35: #{tpu_custom_call.1} parent=0 // pred_check_branch
    %3018 = sbr.rel (0) target = $region37
  $region36: #{tpu_custom_call.1} parent=0 // pred_region
    _
  $region37: #{tpu_custom_call.1} parent=0 // pred_fallthru
    _
  // Predicated region
  $region38: #{tpu_custom_call.1} parent=0 // pred_check
    _
  $region39: #{tpu_custom_call.1} parent=0 // pred_check_branch
    %3020 = sbr.rel (0) target = $region41
  $region40: #{tpu_custom_call.1} parent=0 // pred_region
    _
  $region41: #{tpu_custom_call.1} parent=0 // pred_fallthru
    _

</llo_original>
